<compile_context>
chip_gen: v6e
topology: v6e:2x2x1
jax: 0.10.0
libtpu: 0.0.40
codegen_flags: <defaults>
</compile_context>

<pallas_src>
import functools

import jax
import jax.numpy as jnp
from jax.experimental import pallas as pl
from jax.experimental.pallas import tpu as pltpu


def _round_up(x, m):
    return (x + m - 1) // m * m


# ----------------------------------------------------------------------------
# Kernel 1: M-tiled fused matmul   out = [relu]( [relu](A) @ W + b )
# ----------------------------------------------------------------------------
def _make_mm_kernel(pre_relu: bool, post_relu: bool):
    def kernel(a_ref, w_ref, b_ref, o_ref):
        a = a_ref[...]
        if pre_relu:
            a = jnp.maximum(a, 0)
        acc = jnp.dot(a.astype(jnp.bfloat16), w_ref[...],
                      preferred_element_type=jnp.float32)
        acc = acc + b_ref[...]            # (1, Coutp) broadcasts over rows
        if post_relu:
            acc = jnp.maximum(acc, 0.0)
        o_ref[...] = acc.astype(o_ref.dtype)
    return kernel


def _mm_vmem_bytes(tm, k, coutp, a_bytes, out_bytes):
    return (2 * tm * k * a_bytes          # A tile, double buffered
            + 2 * k * coutp * 2           # weights (pinned, counted x2)
            + 2 * coutp * 4               # bias
            + 2 * tm * coutp * out_bytes  # output tile
            + tm * coutp * 4              # f32 accumulator temp
            + (1 << 20))                  # headroom


def matmul_bias_act(a, w_bf16, b_f32, *, pre_relu=False, post_relu=False,
                    out_dtype=jnp.bfloat16, tm=1024):
    """a: (M, K); w: (K, Coutp) bf16; b: (Coutp,) f32  ->  (M, Coutp)."""
    M, K = a.shape
    Coutp = w_bf16.shape[1]
    a_bytes = a.dtype.itemsize
    out_bytes = jnp.dtype(out_dtype).itemsize

    TM = min(tm, _round_up(M, 16))        # multiple of 16 (bf16 sublane packing)
    while TM > 16 and _mm_vmem_bytes(TM, K, Coutp, a_bytes, out_bytes) > (24 << 20):
        TM = _round_up(TM // 2, 16)
    Mp = _round_up(M, TM)
    if Mp != M:
        a = jnp.pad(a, ((0, Mp - M), (0, 0)))   # zero rows, sliced off below

    vlim = int(min(64 << 20,
                   max(16 << 20,
                       2 * _mm_vmem_bytes(TM, K, Coutp, a_bytes, out_bytes))))

    out = pl.pallas_call(
        _make_mm_kernel(pre_relu, post_relu),
        out_shape=jax.ShapeDtypeStruct((Mp, Coutp), out_dtype),
        grid=(Mp // TM,),
        in_specs=[
            pl.BlockSpec((TM, K), lambda i: (i, 0)),        # patches, tiled over M
            pl.BlockSpec((K, Coutp), lambda i: (0, 0)),     # weight, pinned
            pl.BlockSpec((1, Coutp), lambda i: (0, 0)),     # bias, pinned
        ],
        out_specs=pl.BlockSpec((TM, Coutp), lambda i: (i, 0)),
        compiler_params=pltpu.CompilerParams(
            dimension_semantics=("parallel",),
            vmem_limit_bytes=vlim),
    )(a, w_bf16, b_f32.reshape(1, Coutp))
    return out[:M] if Mp != M else out


# ----------------------------------------------------------------------------
# Kernel 2: strip-tiled fused 3x3 conv (stride 1, pad 1)
#           [+ ReLU + 1x1 conv + skip add] over a (N, strips) parallel grid.
#
# Activation layout (kept across the whole residual chain):
#   (N, H, Wpp, cp) bf16,  Wpp = round_up(W + 2, 8), cp = round_up(hidden,128)
#   column 0 and columns >= W+1 are zeros (the conv's zero padding),
#   channels >= hidden are zeros.
# ----------------------------------------------------------------------------
def _conv_vmem_bytes(th, wpp, cp, fuse):
    q = th * wpp
    b = 0
    b += 2 * th * wpp * cp * 2            # main strip in (double buffered, bf16)
    b += 2 * 2 * wpp * cp * 2             # two halo rows
    b += 2 * q * 4                        # column mask
    b += 2 * 9 * cp * cp * 2              # 3x3 weights (pinned, counted x2)
    b += 2 * cp * 4                       # bias
    if fuse:
        b += 2 * cp * cp * 2 + 2 * cp * 4  # 1x1 weights + bias
    b += 2 * th * wpp * cp * 2            # output strip
    b += ((th + 3) * wpp + 8) * cp * 2    # slab scratch
    b += q * 9 * cp * 2                   # in-VMEM im2col scratch
    b += 3 * q * cp * 4 + q * cp * 2      # f32/bf16 temporaries
    b += 1 << 20                          # headroom
    return b


def _pick_strip(H, Wpp, cp, fuse, budget=20 << 20):
    best = 1
    for th in range(1, H + 1):
        if H % th:
            continue
        if _conv_vmem_bytes(th, Wpp, cp, fuse) <= budget:
            best = th
    return best


def _make_conv_kernel(TH, Wpp, cp, pre_relu: bool, fuse_1x1: bool):
    Q = TH * Wpp
    SLAB = (TH + 3) * Wpp + 8   # 1 extra row block up front + 8 rows of tail slack

    def kernel(*refs):
        if fuse_1x1:
            (xm_ref, xt_ref, xb_ref, cm_ref, w3_ref, b3_ref,
             w1_ref, b1_ref, o_ref, slab, col) = refs
        else:
            (xm_ref, xt_ref, xb_ref, cm_ref, w3_ref, b3_ref,
             o_ref, slab, col) = refs

        s = pl.program_id(1)
        ns = pl.num_programs(1)
        zero_row = jnp.zeros((Wpp, cp), jnp.bfloat16)

        def act(v):
            return jnp.maximum(v, 0) if pre_relu else v

        # ---- assemble the flattened halo'd slab (relu(0)==0 keeps padding) ----
        slab[0:Wpp, :] = zero_row
        slab[Wpp:2 * Wpp, :] = act(xt_ref[0, 0])
        slab[2 * Wpp:2 * Wpp + Q, :] = act(xm_ref[0].reshape(Q, cp))
        slab[2 * Wpp + Q:3 * Wpp + Q, :] = act(xb_ref[0, 0])
        slab[3 * Wpp + Q:SLAB, :] = jnp.zeros((SLAB - (3 * Wpp + Q), cp),
                                              jnp.bfloat16)

        @pl.when(s == 0)                      # image top: halo row is zero padding
        def _():
            slab[Wpp:2 * Wpp, :] = zero_row

        @pl.when(s == ns - 1)                 # image bottom
        def _():
            slab[2 * Wpp + Q:3 * Wpp + Q, :] = zero_row

        # ---- in-VMEM im2col: 9 shifted copies -> ONE deep-K MXU matmul ----
        for di in range(3):
            for dj in range(3):
                t = di * 3 + dj
                off = (di + 1) * Wpp + dj - 1         # static row offset
                col[:, t * cp:(t + 1) * cp] = slab[off:off + Q, :]

        acc = jnp.dot(col[...], w3_ref[...], preferred_element_type=jnp.float32)
        acc = acc + b3_ref[...]

        if fuse_1x1:
            h = jnp.maximum(acc, 0.0).astype(jnp.bfloat16)
            y = jnp.dot(h, w1_ref[...], preferred_element_type=jnp.float32)
            y = y + b1_ref[...]
            # skip connection: re-read the un-activated input right before the add
            y = y + xm_ref[0].reshape(Q, cp).astype(jnp.float32)
        else:
            y = acc

        # re-zero the pad columns so the layout invariant holds for the next layer
        y = y * cm_ref[...]
        o_ref[0] = y.astype(o_ref.dtype).reshape(TH, Wpp, cp)

    return kernel


def conv3x3_strip(x, w3p, b3p, w1p=None, b1p=None, *, W_valid, pre_relu=False):
    """x: (N, H, Wpp, cp) bf16 padded layout. w3p: (9*cp, cp) bf16,
    b3p: (cp,) f32. If w1p/b1p given: residual block
    x + conv1x1(relu(conv3x3(relu(x)))); else plain conv3x3(x) + b3."""
    N, H, Wpp, cp = x.shape
    assert Wpp % 8 == 0 and cp % 128 == 0 and Wpp >= W_valid + 2
    fuse = w1p is not None

    TH = _pick_strip(H, Wpp, cp, fuse)
    S = H // TH
    Q = TH * Wpp

    # per-strip column-validity mask (same pattern every strip), pinned input
    colidx = jnp.arange(Q, dtype=jnp.int32) % Wpp
    cmask = ((colidx >= 1) & (colidx <= W_valid)).astype(jnp.float32).reshape(Q, 1)

    in_specs = [
        pl.BlockSpec((1, TH, Wpp, cp), lambda n, s: (n, s, 0, 0)),          # strip
        pl.BlockSpec((1, 1, Wpp, cp),                                        # top halo
                     lambda n, s: (n, jnp.maximum(s * TH - 1, 0), 0, 0)),
        pl.BlockSpec((1, 1, Wpp, cp),                                        # bottom halo
                     lambda n, s: (n, jnp.minimum((s + 1) * TH, H - 1), 0, 0)),
        pl.BlockSpec((Q, 1), lambda n, s: (0, 0)),                           # col mask
        pl.BlockSpec((9 * cp, cp), lambda n, s: (0, 0)),                     # 3x3 weights
        pl.BlockSpec((1, cp), lambda n, s: (0, 0)),                          # bias
    ]
    args = [x, x, x, cmask, w3p, b3p.reshape(1, cp)]
    if fuse:
        in_specs += [pl.BlockSpec((cp, cp), lambda n, s: (0, 0)),
                     pl.BlockSpec((1, cp), lambda n, s: (0, 0))]
        args += [w1p, b1p.reshape(1, cp)]

    est = _conv_vmem_bytes(TH, Wpp, cp, fuse)
    vlim = int(min(64 << 20, max(16 << 20, 2 * est)))

    return pl.pallas_call(
        _make_conv_kernel(TH, Wpp, cp, pre_relu, fuse),
        out_shape=jax.ShapeDtypeStruct((N, H, Wpp, cp), jnp.bfloat16),
        grid=(N, S),
        in_specs=in_specs,
        out_specs=pl.BlockSpec((1, TH, Wpp, cp), lambda n, s: (n, s, 0, 0)),
        scratch_shapes=[
            pltpu.VMEM(((TH + 3) * Wpp + 8, cp), jnp.bfloat16),   # halo'd slab
            pltpu.VMEM((Q, 9 * cp), jnp.bfloat16),                # im2col scratch
        ],
        compiler_params=pltpu.CompilerParams(
            dimension_semantics=("parallel", "parallel"),
            vmem_limit_bytes=vlim),
    )(*args)


# ----------------------------------------------------------------------------
# Plain-JAX glue: im2col (NHWC) and weight repacking / channel padding
# ----------------------------------------------------------------------------
def im2col(x, k, stride, pad):
    """x: (N,H,W,C) -> bf16 patches (N*Ho*Wo, k*k*C) in (ki, kj, cin) order."""
    if pad > 0:
        x = jnp.pad(x, ((0, 0), (pad, pad), (pad, pad), (0, 0)))
    N, Hp, Wpd, C = x.shape
    Ho = (Hp - k) // stride + 1
    Wo = (Wpd - k) // stride + 1
    cols = []
    for i in range(k):
        for j in range(k):
            cols.append(x[:, i:i + stride * Ho:stride, j:j + stride * Wo:stride, :])
    p = jnp.concatenate(cols, axis=-1)
    return p.reshape(N * Ho * Wo, k * k * C).astype(jnp.bfloat16), (N, Ho, Wo)


def _mm_weight(w_oihw, cin_p, cout_p):
    """PyTorch (Cout,Cin,kh,kw) -> (kh*kw*cin_p, cout_p) bf16 (im2col order)."""
    cout, cin, kh, kw = w_oihw.shape
    w = jnp.transpose(w_oihw, (2, 3, 1, 0))                         # (kh,kw,cin,cout)
    w = jnp.pad(w, ((0, 0), (0, 0), (0, cin_p - cin), (0, cout_p - cout)))
    return w.reshape(kh * kw * cin_p, cout_p).astype(jnp.bfloat16)


def _conv3x3_weight(w_oihw, cin_p, cout_p):
    """PyTorch (Cout,Cin,3,3) -> (9*cin_p, cout_p) bf16, row block t = di*3+dj."""
    cout, cin, _, _ = w_oihw.shape
    w = jnp.transpose(w_oihw, (2, 3, 1, 0))                         # (3,3,cin,cout)
    w = jnp.pad(w, ((0, 0), (0, 0), (0, cin_p - cin), (0, cout_p - cout)))
    return w.reshape(9 * cin_p, cout_p).astype(jnp.bfloat16)


def _pad_bias(b, cout_p):
    return jnp.pad(b, (0, cout_p - b.shape[0])).astype(jnp.float32)


# ----------------------------------------------------------------------------
# Parameter init (deterministic, Kaiming-style scaling; PyTorch OIHW layout)
# ----------------------------------------------------------------------------
def init_params(key, in_channels, hidden_channels, num_residual_blocks, embedding_dim):
    def conv_init(k, cout, cin, kh, kw):
        fan_in = cin * kh * kw
        w = jax.random.normal(k, (cout, cin, kh, kw), jnp.float32) * (2.0 / fan_in) ** 0.5
        b = jnp.zeros((cout,), jnp.float32)
        return w, b

    keys = jax.random.split(key, 4 + 2 * num_residual_blocks)
    h2 = hidden_channels // 2
    params = {}
    params["conv1"] = conv_init(keys[0], h2, in_channels, 4, 4)
    params["conv2"] = conv_init(keys[1], hidden_channels, h2, 4, 4)
    params["conv3"] = conv_init(keys[2], hidden_channels, hidden_channels, 3, 3)
    params["res"] = []
    for r in range(num_residual_blocks):
        w3 = conv_init(keys[3 + 2 * r], hidden_channels, hidden_channels, 3, 3)
        w1 = conv_init(keys[4 + 2 * r], hidden_channels, hidden_channels, 1, 1)
        params["res"].append((w3, w1))
    params["pre_vq"] = conv_init(keys[3 + 2 * num_residual_blocks],
                                 embedding_dim, hidden_channels, 1, 1)
    return params


# ----------------------------------------------------------------------------
# Forward pass (NCHW in -> NCHW out, like PyTorch)
# ----------------------------------------------------------------------------
@functools.partial(jax.jit, static_argnames=("num_residual_blocks",))
def vqvae_encoder_forward(x_nchw, params, num_residual_blocks=2):
    x = jnp.transpose(x_nchw, (0, 2, 3, 1)).astype(jnp.float32)     # NHWC
    in_ch = x.shape[-1]

    w1c, b1c = params["conv1"]
    w2c, b2c = params["conv2"]
    w3c, b3c = params["conv3"]
    wq, bq = params["pre_vq"]

    h2 = w1c.shape[0]
    hidden = w2c.shape[0]
    emb = wq.shape[0]
    h2p = _round_up(h2, 8)            # conv1 out: tiny layer, sublane-aligned only
    cp = _round_up(hidden, 128)       # lane-dense hidden channel space
    ep = _round_up(emb, 128)          # lane-dense embedding space (sliced at end)

    # conv1: k4 s2 p1 + ReLU (bf16 activations)
    p, (N, Ho, Wo) = im2col(x, 4, 2, 1)
    y = matmul_bias_act(p, _mm_weight(w1c, in_ch, h2p), _pad_bias(b1c, h2p),
                        post_relu=True, out_dtype=jnp.bfloat16)
    x = y.reshape(N, Ho, Wo, h2p)

    # conv2: k4 s2 p1 + ReLU, output in 128-padded channel space (bf16)
    p, (N, Ho, Wo) = im2col(x, 4, 2, 1)
    y = matmul_bias_act(p, _mm_weight(w2c, h2p, cp), _pad_bias(b2c, cp),
                        post_relu=True, out_dtype=jnp.bfloat16)

    H2, W2 = Ho, Wo
    Wpp = _round_up(W2 + 2, 8)
    # one-time re-layout into the padded lane-dense strip format that is kept
    # across conv3 and all residual blocks (no per-block pad/slice passes).
    x = jnp.pad(y.reshape(N, H2, W2, cp),
                ((0, 0), (0, 0), (1, Wpp - W2 - 1), (0, 0)))

    # conv3: k3 s1 p1 (fused strip kernel, no activation)
    x = conv3x3_strip(x, _conv3x3_weight(w3c, cp, cp), _pad_bias(b3c, cp),
                      W_valid=W2)

    # residual blocks: x = x + conv1x1(relu(conv3x3(relu(x))))  -- one kernel each
    for r in range(num_residual_blocks):
        (w3r, b3r), (w1r, b1r) = params["res"][r]
        x = conv3x3_strip(x, _conv3x3_weight(w3r, cp, cp), _pad_bias(b3r, cp),
                          w1p=_mm_weight(w1r, cp, cp), b1p=_pad_bias(b1r, cp),
                          W_valid=W2, pre_relu=True)

    # final ReLU + 1x1 conv to embedding_dim (f32 output)
    z = matmul_bias_act(x.reshape(N * H2 * Wpp, cp),
                        _mm_weight(wq, cp, ep), _pad_bias(bq, ep),
                        pre_relu=True, out_dtype=jnp.float32)
    z = z.reshape(N, H2, Wpp, ep)[:, :, 1:W2 + 1, :emb]
    return jnp.transpose(z, (0, 3, 1, 2))   # NCHW: (N, embedding_dim, H/4, W/4)


# ----------------------------------------------------------------------------
if __name__ == "__main__":
    IN_CH, HIDDEN, N_RES, EMB = 3, 32, 2, 16
    B, H, W = 2, 16, 16

    key = jax.random.PRNGKey(0)
    kx, kp = jax.random.split(key)
    x = jax.random.normal(kx, (B, IN_CH, H, W), jnp.float32)   # NCHW, like PyTorch
    params = init_params(kp, IN_CH, HIDDEN, N_RES, EMB)

    out = vqvae_encoder_forward(x, params, num_residual_blocks=N_RES)
    out = jax.block_until_ready(out)

    assert out.shape == (B, EMB, H // 4, W // 4), out.shape
    assert out.dtype == jnp.float32
    assert bool(jnp.isfinite(out).all())
    print("KERNEL_OK")
</pallas_src>

<mosaic_0001>
module attributes {stable_mosaic.version = 11 : i64} {
  func.func @kernel(%arg0: i32, %arg1: memref<128x48xbf16, #tpu.memory_space<vmem>>, %arg2: memref<48x16xbf16, #tpu.memory_space<vmem>>, %arg3: memref<1x16xf32, #tpu.memory_space<vmem>>, %arg4: memref<128x16xbf16, #tpu.memory_space<vmem>>) attributes {dimension_semantics = [#tpu.dimension_semantics<parallel>], iteration_bounds = array<i64: 1>, scalar_prefetch = 0 : i64, scratch_operands = 0 : i64, tpu.core_type = #tpu.core_type<tc>, window_params = [{transform_indices = @transform_0, window_bounds = array<i64: 128, 48>}, {pipeline_mode = #tpu.pipeline_mode<synchronous>, transform_indices = @transform_1, window_bounds = array<i64: 48, 16>}, {pipeline_mode = #tpu.pipeline_mode<synchronous>, transform_indices = @transform_2, window_bounds = array<i64: 1, 16>}, {transform_indices = @transform_3, window_bounds = array<i64: 128, 16>}]} {
    %c0 = arith.constant 0 : index
    %c0_0 = arith.constant 0 : index
    %0 = vector.load %arg1[%c0, %c0_0] : memref<128x48xbf16, #tpu.memory_space<vmem>>, vector<128x48xbf16>
    %c0_1 = arith.constant 0 : index
    %c0_2 = arith.constant 0 : index
    %1 = vector.load %arg2[%c0_1, %c0_2] : memref<48x16xbf16, #tpu.memory_space<vmem>>, vector<48x16xbf16>
    %cst = arith.constant dense<0.000000e+00> : vector<128x16xf32>
    %2 = tpu.matmul %0, %1, %cst {dimension_numbers = #tpu.dot_dimension_numbers<[1], [0], [0], [1], [0, 0, 1, 1], [], []>} : vector<128x48xbf16>, vector<48x16xbf16>, vector<128x16xf32> -> vector<128x16xf32>
    %c0_3 = arith.constant 0 : index
    %c0_4 = arith.constant 0 : index
    %3 = vector.load %arg3[%c0_3, %c0_4] : memref<1x16xf32, #tpu.memory_space<vmem>>, vector<1x16xf32>
    %4 = vector.broadcast %3 : vector<1x16xf32> to vector<128x16xf32>
    %5 = arith.addf %2, %4 : vector<128x16xf32>
    %cst_5 = arith.constant 0.000000e+00 : f32
    %6 = vector.broadcast %cst_5 : f32 to vector<128x16xf32>
    %7 = arith.maximumf %5, %6 : vector<128x16xf32>
    %8 = arith.truncf %7 : vector<128x16xf32> to vector<128x16xbf16>
    %c0_6 = arith.constant 0 : index
    %c0_7 = arith.constant 0 : index
    %9 = vector.load %arg4[%c0_6, %c0_7] : memref<128x16xbf16, #tpu.memory_space<vmem>>, vector<128x16xbf16>
    tpu.vector_store %arg4[%c0_6, %c0_7], %8 {strides = array<i32>} : memref<128x16xbf16, #tpu.memory_space<vmem>>, vector<128x16xbf16>,
    return
  }
  func.func @transform_0(%arg0: i32) -> (i32, i32) {
    %c0_i32 = arith.constant 0 : i32
    %c0_i32_0 = arith.constant 0 : i32
    return %arg0, %c0_i32 : i32, i32
  }
  func.func @transform_1(%arg0: i32) -> (i32, i32) {
    %c0_i32 = arith.constant 0 : i32
    %c0_i32_0 = arith.constant 0 : i32
    %c0_i32_1 = arith.constant 0 : i32
    return %c0_i32, %c0_i32_0 : i32, i32
  }
  func.func @transform_2(%arg0: i32) -> (i32, i32) {
    %c0_i32 = arith.constant 0 : i32
    %c0_i32_0 = arith.constant 0 : i32
    %c0_i32_1 = arith.constant 0 : i32
    return %c0_i32, %c0_i32_0 : i32, i32
  }
  func.func @transform_3(%arg0: i32) -> (i32, i32) {
    %c0_i32 = arith.constant 0 : i32
    %c0_i32_0 = arith.constant 0 : i32
    return %arg0, %c0_i32 : i32, i32
  }
}

module attributes {stable_mosaic.version = 11 : i64} {
  func.func @kernel(%arg0: i32, %arg1: memref<32x256xbf16, #tpu.memory_space<vmem>>, %arg2: memref<256x128xbf16, #tpu.memory_space<vmem>>, %arg3: memref<1x128xf32, #tpu.memory_space<vmem>>, %arg4: memref<32x128xbf16, #tpu.memory_space<vmem>>) attributes {dimension_semantics = [#tpu.dimension_semantics<parallel>], iteration_bounds = array<i64: 1>, scalar_prefetch = 0 : i64, scratch_operands = 0 : i64, tpu.core_type = #tpu.core_type<tc>, window_params = [{transform_indices = @transform_0, window_bounds = array<i64: 32, 256>}, {pipeline_mode = #tpu.pipeline_mode<synchronous>, transform_indices = @transform_1, window_bounds = array<i64: 256, 128>}, {pipeline_mode = #tpu.pipeline_mode<synchronous>, transform_indices = @transform_2, window_bounds = array<i64: 1, 128>}, {transform_indices = @transform_3, window_bounds = array<i64: 32, 128>}]} {
    %c0 = arith.constant 0 : index
    %c0_0 = arith.constant 0 : index
    %0 = vector.load %arg1[%c0, %c0_0] : memref<32x256xbf16, #tpu.memory_space<vmem>>, vector<32x256xbf16>
    %c0_1 = arith.constant 0 : index
    %c0_2 = arith.constant 0 : index
    %1 = vector.load %arg2[%c0_1, %c0_2] : memref<256x128xbf16, #tpu.memory_space<vmem>>, vector<256x128xbf16>
    %cst = arith.constant dense<0.000000e+00> : vector<32x128xf32>
    %2 = tpu.matmul %0, %1, %cst {dimension_numbers = #tpu.dot_dimension_numbers<[1], [0], [0], [1], [0, 0, 1, 1], [], []>} : vector<32x256xbf16>, vector<256x128xbf16>, vector<32x128xf32> -> vector<32x128xf32>
    %c0_3 = arith.constant 0 : index
    %c0_4 = arith.constant 0 : index
    %3 = vector.load %arg3[%c0_3, %c0_4] : memref<1x128xf32, #tpu.memory_space<vmem>>, vector<1x128xf32>
    %4 = vector.broadcast %3 : vector<1x128xf32> to vector<32x128xf32>
    %5 = arith.addf %2, %4 : vector<32x128xf32>
    %cst_5 = arith.constant 0.000000e+00 : f32
    %6 = vector.broadcast %cst_5 : f32 to vector<32x128xf32>
    %7 = arith.maximumf %5, %6 : vector<32x128xf32>
    %8 = arith.truncf %7 : vector<32x128xf32> to vector<32x128xbf16>
    %c0_6 = arith.constant 0 : index
    %c0_7 = arith.constant 0 : index
    %9 = vector.load %arg4[%c0_6, %c0_7] : memref<32x128xbf16, #tpu.memory_space<vmem>>, vector<32x128xbf16>
    tpu.vector_store %arg4[%c0_6, %c0_7], %8 {strides = array<i32>} : memref<32x128xbf16, #tpu.memory_space<vmem>>, vector<32x128xbf16>,
    return
  }
  func.func @transform_0(%arg0: i32) -> (i32, i32) {
    %c0_i32 = arith.constant 0 : i32
    %c0_i32_0 = arith.constant 0 : i32
    return %arg0, %c0_i32 : i32, i32
  }
  func.func @transform_1(%arg0: i32) -> (i32, i32) {
    %c0_i32 = arith.constant 0 : i32
    %c0_i32_0 = arith.constant 0 : i32
    %c0_i32_1 = arith.constant 0 : i32
    return %c0_i32, %c0_i32_0 : i32, i32
  }
  func.func @transform_2(%arg0: i32) -> (i32, i32) {
    %c0_i32 = arith.constant 0 : i32
    %c0_i32_0 = arith.constant 0 : i32
    %c0_i32_1 = arith.constant 0 : i32
    return %c0_i32, %c0_i32_0 : i32, i32
  }
  func.func @transform_3(%arg0: i32) -> (i32, i32) {
    %c0_i32 = arith.constant 0 : i32
    %c0_i32_0 = arith.constant 0 : i32
    return %arg0, %c0_i32 : i32, i32
  }
}

module attributes {stable_mosaic.version = 11 : i64} {
  func.func @kernel(%arg0: i32, %arg1: i32, %arg2: memref<1x4x8x128xbf16, #tpu.memory_space<vmem>>, %arg3: memref<1x1x8x128xbf16, #tpu.memory_space<vmem>>, %arg4: memref<1x1x8x128xbf16, #tpu.memory_space<vmem>>, %arg5: memref<32x1xf32, #tpu.memory_space<vmem>>, %arg6: memref<1152x128xbf16, #tpu.memory_space<vmem>>, %arg7: memref<1x128xf32, #tpu.memory_space<vmem>>, %arg8: memref<1x4x8x128xbf16, #tpu.memory_space<vmem>>, %arg9: memref<64x128xbf16, #tpu.memory_space<vmem>>, %arg10: memref<32x1152xbf16, #tpu.memory_space<vmem>>) attributes {dimension_semantics = [#tpu.dimension_semantics<parallel>, #tpu.dimension_semantics<parallel>], iteration_bounds = array<i64: 2, 1>, scalar_prefetch = 0 : i64, scratch_operands = 2 : i64, tpu.core_type = #tpu.core_type<tc>, window_params = [{transform_indices = @transform_0, window_bounds = array<i64: 1, 4, 8, 128>}, {transform_indices = @transform_1, window_bounds = array<i64: 1, 1, 8, 128>}, {transform_indices = @transform_2, window_bounds = array<i64: 1, 1, 8, 128>}, {pipeline_mode = #tpu.pipeline_mode<synchronous>, transform_indices = @transform_3, window_bounds = array<i64: 32, 1>}, {pipeline_mode = #tpu.pipeline_mode<synchronous>, transform_indices = @transform_4, window_bounds = array<i64: 1152, 128>}, {pipeline_mode = #tpu.pipeline_mode<synchronous>, transform_indices = @transform_5, window_bounds = array<i64: 1, 128>}, {transform_indices = @transform_6, window_bounds = array<i64: 1, 4, 8, 128>}]} {
    %cst = arith.constant 0.000000e+00 : bf16
    %0 = vector.broadcast %cst : bf16 to vector<8x128xbf16>
    %c0 = arith.constant 0 : index
    %c0_0 = arith.constant 0 : index
    %1 = vector.load %arg9[%c0, %c0_0] : memref<64x128xbf16, #tpu.memory_space<vmem>>, vector<8x128xbf16>
    tpu.vector_store %arg9[%c0, %c0_0], %0 {strides = array<i32>} : memref<64x128xbf16, #tpu.memory_space<vmem>>, vector<8x128xbf16>,
    %c0_1 = arith.constant 0 : index
    %c0_2 = arith.constant 0 : index
    %c0_3 = arith.constant 0 : index
    %c0_4 = arith.constant 0 : index
    %2 = vector.load %arg3[%c0_1, %c0_2, %c0_3, %c0_4] : memref<1x1x8x128xbf16, #tpu.memory_space<vmem>>, vector<1x1x8x128xbf16>
    %3 = vector.shape_cast %2 : vector<1x1x8x128xbf16> to vector<8x128xbf16>
    %c8 = arith.constant 8 : index
    %c0_5 = arith.constant 0 : index
    %4 = vector.load %arg9[%c8, %c0_5] : memref<64x128xbf16, #tpu.memory_space<vmem>>, vector<8x128xbf16>
    tpu.vector_store %arg9[%c8, %c0_5], %3 {strides = array<i32>} : memref<64x128xbf16, #tpu.memory_space<vmem>>, vector<8x128xbf16>,
    %c0_6 = arith.constant 0 : index
    %c0_7 = arith.constant 0 : index
    %c0_8 = arith.constant 0 : index
    %c0_9 = arith.constant 0 : index
    %5 = vector.load %arg2[%c0_6, %c0_7, %c0_8, %c0_9] : memref<1x4x8x128xbf16, #tpu.memory_space<vmem>>, vector<1x4x8x128xbf16>
    %6 = vector.shape_cast %5 : vector<1x4x8x128xbf16> to vector<4x8x128xbf16>
    %7 = vector.shape_cast %6 : vector<4x8x128xbf16> to vector<32x128xbf16>
    %c16 = arith.constant 16 : index
    %c0_10 = arith.constant 0 : index
    %8 = vector.load %arg9[%c16, %c0_10] : memref<64x128xbf16, #tpu.memory_space<vmem>>, vector<32x128xbf16>
    tpu.vector_store %arg9[%c16, %c0_10], %7 {strides = array<i32>} : memref<64x128xbf16, #tpu.memory_space<vmem>>, vector<32x128xbf16>,
    %c0_11 = arith.constant 0 : index
    %c0_12 = arith.constant 0 : index
    %c0_13 = arith.constant 0 : index
    %c0_14 = arith.constant 0 : index
    %9 = vector.load %arg4[%c0_11, %c0_12, %c0_13, %c0_14] : memref<1x1x8x128xbf16, #tpu.memory_space<vmem>>, vector<1x1x8x128xbf16>
    %10 = vector.shape_cast %9 : vector<1x1x8x128xbf16> to vector<8x128xbf16>
    %c48 = arith.constant 48 : index
    %c0_15 = arith.constant 0 : index
    %11 = vector.load %arg9[%c48, %c0_15] : memref<64x128xbf16, #tpu.memory_space<vmem>>, vector<8x128xbf16>
    tpu.vector_store %arg9[%c48, %c0_15], %10 {strides = array<i32>} : memref<64x128xbf16, #tpu.memory_space<vmem>>, vector<8x128xbf16>,
    %cst_16 = arith.constant 0.000000e+00 : bf16
    %12 = vector.broadcast %cst_16 : bf16 to vector<8x128xbf16>
    %c56 = arith.constant 56 : index
    %c0_17 = arith.constant 0 : index
    %13 = vector.load %arg9[%c56, %c0_17] : memref<64x128xbf16, #tpu.memory_space<vmem>>, vector<8x128xbf16>
    tpu.vector_store %arg9[%c56, %c0_17], %12 {strides = array<i32>} : memref<64x128xbf16, #tpu.memory_space<vmem>>, vector<8x128xbf16>,
    %c0_i32 = arith.constant 0 : i32
    %14 = arith.cmpi eq, %arg1, %c0_i32 : i32
    %15 = arith.extui %14 : i1 to i32
    %c0_i32_18 = arith.constant 0 : i32
    %16 = arith.cmpi ne, %15, %c0_i32_18 : i32
    scf.if %16 {
      %c8_55 = arith.constant 8 : index
      %c0_56 = arith.constant 0 : index
      %52 = vector.load %arg9[%c8_55, %c0_56] : memref<64x128xbf16, #tpu.memory_space<vmem>>, vector<8x128xbf16>
      tpu.vector_store %arg9[%c8_55, %c0_56], %0 {strides = array<i32>} : memref<64x128xbf16, #tpu.memory_space<vmem>>, vector<8x128xbf16>,
    } else {
    }
    %c0_i32_19 = arith.constant 0 : i32
    %17 = arith.cmpi eq, %arg1, %c0_i32_19 : i32
    %18 = arith.extui %17 : i1 to i32
    %c0_i32_20 = arith.constant 0 : i32
    %19 = arith.cmpi ne, %18, %c0_i32_20 : i32
    scf.if %19 {
      %c48_55 = arith.constant 48 : index
      %c0_56 = arith.constant 0 : index
      %52 = vector.load %arg9[%c48_55, %c0_56] : memref<64x128xbf16, #tpu.memory_space<vmem>>, vector<8x128xbf16>
      tpu.vector_store %arg9[%c48_55, %c0_56], %0 {strides = array<i32>} : memref<64x128xbf16, #tpu.memory_space<vmem>>, vector<8x128xbf16>,
    } else {
    }
    %c7 = arith.constant 7 : index
    %c0_21 = arith.constant 0 : index
    %20 = vector.load %arg9[%c7, %c0_21] : memref<64x128xbf16, #tpu.memory_space<vmem>>, vector<32x128xbf16>
    %c0_22 = arith.constant 0 : index
    %c0_23 = arith.constant 0 : index
    %21 = vector.load %arg10[%c0_22, %c0_23] : memref<32x1152xbf16, #tpu.memory_space<vmem>>, vector<32x128xbf16>
    tpu.vector_store %arg10[%c0_22, %c0_23], %20 {strides = array<i32>} : memref<32x1152xbf16, #tpu.memory_space<vmem>>, vector<32x128xbf16>,
    %c8_24 = arith.constant 8 : index
    %c0_25 = arith.constant 0 : index
    %22 = vector.load %arg9[%c8_24, %c0_25] : memref<64x128xbf16, #tpu.memory_space<vmem>>, vector<32x128xbf16>
    %c0_26 = arith.constant 0 : index
    %c128 = arith.constant 128 : index
    %23 = vector.load %arg10[%c0_26, %c128] : memref<32x1152xbf16, #tpu.memory_space<vmem>>, vector<32x128xbf16>
    tpu.vector_store %arg10[%c0_26, %c128], %22 {strides = array<i32>} : memref<32x1152xbf16, #tpu.memory_space<vmem>>, vector<32x128xbf16>,
    %c9 = arith.constant 9 : index
    %c0_27 = arith.constant 0 : index
    %24 = vector.load %arg9[%c9, %c0_27] : memref<64x128xbf16, #tpu.memory_space<vmem>>, vector<32x128xbf16>
    %c0_28 = arith.constant 0 : index
    %c256 = arith.constant 256 : index
    %25 = vector.load %arg10[%c0_28, %c256] : memref<32x1152xbf16, #tpu.memory_space<vmem>>, vector<32x128xbf16>
    tpu.vector_store %arg10[%c0_28, %c256], %24 {strides = array<i32>} : memref<32x1152xbf16, #tpu.memory_space<vmem>>, vector<32x128xbf16>,
    %c15 = arith.constant 15 : index
    %c0_29 = arith.constant 0 : index
    %26 = vector.load %arg9[%c15, %c0_29] : memref<64x128xbf16, #tpu.memory_space<vmem>>, vector<32x128xbf16>
    %c0_30 = arith.constant 0 : index
    %c384 = arith.constant 384 : index
    %27 = vector.load %arg10[%c0_30, %c384] : memref<32x1152xbf16, #tpu.memory_space<vmem>>, vector<32x128xbf16>
    tpu.vector_store %arg10[%c0_30, %c384], %26 {strides = array<i32>} : memref<32x1152xbf16, #tpu.memory_space<vmem>>, vector<32x128xbf16>,
    %c16_31 = arith.constant 16 : index
    %c0_32 = arith.constant 0 : index
    %28 = vector.load %arg9[%c16_31, %c0_32] : memref<64x128xbf16, #tpu.memory_space<vmem>>, vector<32x128xbf16>
    %c0_33 = arith.constant 0 : index
    %c512 = arith.constant 512 : index
    %29 = vector.load %arg10[%c0_33, %c512] : memref<32x1152xbf16, #tpu.memory_space<vmem>>, vector<32x128xbf16>
    tpu.vector_store %arg10[%c0_33, %c512], %28 {strides = array<i32>} : memref<32x1152xbf16, #tpu.memory_space<vmem>>, vector<32x128xbf16>,
    %c17 = arith.constant 17 : index
    %c0_34 = arith.constant 0 : index
    %30 = vector.load %arg9[%c17, %c0_34] : memref<64x128xbf16, #tpu.memory_space<vmem>>, vector<32x128xbf16>
    %c0_35 = arith.constant 0 : index
    %c640 = arith.constant 640 : index
    %31 = vector.load %arg10[%c0_35, %c640] : memref<32x1152xbf16, #tpu.memory_space<vmem>>, vector<32x128xbf16>
    tpu.vector_store %arg10[%c0_35, %c640], %30 {strides = array<i32>} : memref<32x1152xbf16, #tpu.memory_space<vmem>>, vector<32x128xbf16>,
    %c23 = arith.constant 23 : index
    %c0_36 = arith.constant 0 : index
    %32 = vector.load %arg9[%c23, %c0_36] : memref<64x128xbf16, #tpu.memory_space<vmem>>, vector<32x128xbf16>
    %c0_37 = arith.constant 0 : index
    %c768 = arith.constant 768 : index
    %33 = vector.load %arg10[%c0_37, %c768] : memref<32x1152xbf16, #tpu.memory_space<vmem>>, vector<32x128xbf16>
    tpu.vector_store %arg10[%c0_37, %c768], %32 {strides = array<i32>} : memref<32x1152xbf16, #tpu.memory_space<vmem>>, vector<32x128xbf16>,
    %c24 = arith.constant 24 : index
    %c0_38 = arith.constant 0 : index
    %34 = vector.load %arg9[%c24, %c0_38] : memref<64x128xbf16, #tpu.memory_space<vmem>>, vector<32x128xbf16>
    %c0_39 = arith.constant 0 : index
    %c896 = arith.constant 896 : index
    %35 = vector.load %arg10[%c0_39, %c896] : memref<32x1152xbf16, #tpu.memory_space<vmem>>, vector<32x128xbf16>
    tpu.vector_store %arg10[%c0_39, %c896], %34 {strides = array<i32>} : memref<32x1152xbf16, #tpu.memory_space<vmem>>, vector<32x128xbf16>,
    %c25 = arith.constant 25 : index
    %c0_40 = arith.constant 0 : index
    %36 = vector.load %arg9[%c25, %c0_40] : memref<64x128xbf16, #tpu.memory_space<vmem>>, vector<32x128xbf16>
    %c0_41 = arith.constant 0 : index
    %c1024 = arith.constant 1024 : index
    %37 = vector.load %arg10[%c0_41, %c1024] : memref<32x1152xbf16, #tpu.memory_space<vmem>>, vector<32x128xbf16>
    tpu.vector_store %arg10[%c0_41, %c1024], %36 {strides = array<i32>} : memref<32x1152xbf16, #tpu.memory_space<vmem>>, vector<32x128xbf16>,
    %c0_42 = arith.constant 0 : index
    %c0_43 = arith.constant 0 : index
    %38 = vector.load %arg10[%c0_42, %c0_43] : memref<32x1152xbf16, #tpu.memory_space<vmem>>, vector<32x1152xbf16>
    %c0_44 = arith.constant 0 : index
    %c0_45 = arith.constant 0 : index
    %39 = vector.load %arg6[%c0_44, %c0_45] : memref<1152x128xbf16, #tpu.memory_space<vmem>>, vector<1152x128xbf16>
    %cst_46 = arith.constant dense<0.000000e+00> : vector<32x128xf32>
    %40 = tpu.matmul %38, %39, %cst_46 {dimension_numbers = #tpu.dot_dimension_numbers<[1], [0], [0], [1], [0, 0, 1, 1], [], []>} : vector<32x1152xbf16>, vector<1152x128xbf16>, vector<32x128xf32> -> vector<32x128xf32>
    %c0_47 = arith.constant 0 : index
    %c0_48 = arith.constant 0 : index
    %41 = vector.load %arg7[%c0_47, %c0_48] : memref<1x128xf32, #tpu.memory_space<vmem>>, vector<1x128xf32>
    %42 = vector.broadcast %41 : vector<1x128xf32> to vector<32x128xf32>
    %43 = arith.addf %40, %42 : vector<32x128xf32>
    %c0_49 = arith.constant 0 : index
    %c0_50 = arith.constant 0 : index
    %44 = vector.load %arg5[%c0_49, %c0_50] : memref<32x1xf32, #tpu.memory_space<vmem>>, vector<32x1xf32>
    %45 = vector.broadcast %44 : vector<32x1xf32> to vector<32x128xf32>
    %46 = arith.mulf %43, %45 : vector<32x128xf32>
    %47 = arith.truncf %46 : vector<32x128xf32> to vector<32x128xbf16>
    %48 = vector.shape_cast %47 : vector<32x128xbf16> to vector<4x8x128xbf16>
    %c0_51 = arith.constant 0 : index
    %c0_52 = arith.constant 0 : index
    %c0_53 = arith.constant 0 : index
    %c0_54 = arith.constant 0 : index
    %49 = vector.load %arg8[%c0_51, %c0_52, %c0_53, %c0_54] : memref<1x4x8x128xbf16, #tpu.memory_space<vmem>>, vector<1x4x8x128xbf16>
    %50 = vector.shape_cast %49 : vector<1x4x8x128xbf16> to vector<4x8x128xbf16>
    %51 = vector.shape_cast %48 : vector<4x8x128xbf16> to vector<1x4x8x128xbf16>
    tpu.vector_store %arg8[%c0_51, %c0_52, %c0_53, %c0_54], %51 {strides = array<i32>} : memref<1x4x8x128xbf16, #tpu.memory_space<vmem>>, vector<1x4x8x128xbf16>,
    return
  }
  func.func @transform_0(%arg0: i32, %arg1: i32) -> (i32, i32, i32, i32) {
    %c0_i32 = arith.constant 0 : i32
    %c0_i32_0 = arith.constant 0 : i32
    %c0_i32_1 = arith.constant 0 : i32
    return %arg0, %arg1, %c0_i32, %c0_i32_0 : i32, i32, i32, i32
  }
  func.func @transform_1(%arg0: i32, %arg1: i32) -> (i32, i32, i32, i32) {
    %c4_i32 = arith.constant 4 : i32
    %0 = arith.muli %arg1, %c4_i32 : i32
    %c1_i32 = arith.constant 1 : i32
    %1 = arith.subi %0, %c1_i32 : i32
    %c0_i32 = arith.constant 0 : i32
    %2 = arith.maxsi %1, %c0_i32 : i32
    %c0_i32_0 = arith.constant 0 : i32
    %c0_i32_1 = arith.constant 0 : i32
    %c0_i32_2 = arith.constant 0 : i32
    return %arg0, %2, %c0_i32_0, %c0_i32_1 : i32, i32, i32, i32
  }
  func.func @transform_2(%arg0: i32, %arg1: i32) -> (i32, i32, i32, i32) {
    %c1_i32 = arith.constant 1 : i32
    %0 = arith.addi %arg1, %c1_i32 : i32
    %c4_i32 = arith.constant 4 : i32
    %1 = arith.muli %0, %c4_i32 : i32
    %c3_i32 = arith.constant 3 : i32
    %2 = arith.minsi %1, %c3_i32 : i32
    %c0_i32 = arith.constant 0 : i32
    %c0_i32_0 = arith.constant 0 : i32
    %c0_i32_1 = arith.constant 0 : i32
    return %arg0, %2, %c0_i32, %c0_i32_0 : i32, i32, i32, i32
  }
  func.func @transform_3(%arg0: i32, %arg1: i32) -> (i32, i32) {
    %c0_i32 = arith.constant 0 : i32
    %c0_i32_0 = arith.constant 0 : i32
    %c0_i32_1 = arith.constant 0 : i32
    return %c0_i32, %c0_i32_0 : i32, i32
  }
  func.func @transform_4(%arg0: i32, %arg1: i32) -> (i32, i32) {
    %c0_i32 = arith.constant 0 : i32
    %c0_i32_0 = arith.constant 0 : i32
    %c0_i32_1 = arith.constant 0 : i32
    return %c0_i32, %c0_i32_0 : i32, i32
  }
  func.func @transform_5(%arg0: i32, %arg1: i32) -> (i32, i32) {
    %c0_i32 = arith.constant 0 : i32
    %c0_i32_0 = arith.constant 0 : i32
    %c0_i32_1 = arith.constant 0 : i32
    return %c0_i32, %c0_i32_0 : i32, i32
  }
  func.func @transform_6(%arg0: i32, %arg1: i32) -> (i32, i32, i32, i32) {
    %c0_i32 = arith.constant 0 : i32
    %c0_i32_0 = arith.constant 0 : i32
    %c0_i32_1 = arith.constant 0 : i32
    return %arg0, %arg1, %c0_i32, %c0_i32_0 : i32, i32, i32, i32
  }
}

module attributes {stable_mosaic.version = 11 : i64} {
  func.func @kernel(%arg0: i32, %arg1: memref<64x128xbf16, #tpu.memory_space<vmem>>, %arg2: memref<128x128xbf16, #tpu.memory_space<vmem>>, %arg3: memref<1x128xf32, #tpu.memory_space<vmem>>, %arg4: memref<64x128xf32, #tpu.memory_space<vmem>>) attributes {dimension_semantics = [#tpu.dimension_semantics<parallel>], iteration_bounds = array<i64: 1>, scalar_prefetch = 0 : i64, scratch_operands = 0 : i64, tpu.core_type = #tpu.core_type<tc>, window_params = [{transform_indices = @transform_0, window_bounds = array<i64: 64, 128>}, {pipeline_mode = #tpu.pipeline_mode<synchronous>, transform_indices = @transform_1, window_bounds = array<i64: 128, 128>}, {pipeline_mode = #tpu.pipeline_mode<synchronous>, transform_indices = @transform_2, window_bounds = array<i64: 1, 128>}, {transform_indices = @transform_3, window_bounds = array<i64: 64, 128>}]} {
    %c0 = arith.constant 0 : index
    %c0_0 = arith.constant 0 : index
    %0 = vector.load %arg1[%c0, %c0_0] : memref<64x128xbf16, #tpu.memory_space<vmem>>, vector<64x128xbf16>
    %cst = arith.constant 0.000000e+00 : bf16
    %1 = vector.broadcast %cst : bf16 to vector<64x128xbf16>
    %2 = arith.maximumf %0, %1 : vector<64x128xbf16>
    %c0_1 = arith.constant 0 : index
    %c0_2 = arith.constant 0 : index
    %3 = vector.load %arg2[%c0_1, %c0_2] : memref<128x128xbf16, #tpu.memory_space<vmem>>, vector<128x128xbf16>
    %cst_3 = arith.constant dense<0.000000e+00> : vector<64x128xf32>
    %4 = tpu.matmul %2, %3, %cst_3 {dimension_numbers = #tpu.dot_dimension_numbers<[1], [0], [0], [1], [0, 0, 1, 1], [], []>} : vector<64x128xbf16>, vector<128x128xbf16>, vector<64x128xf32> -> vector<64x128xf32>
    %c0_4 = arith.constant 0 : index
    %c0_5 = arith.constant 0 : index
    %5 = vector.load %arg3[%c0_4, %c0_5] : memref<1x128xf32, #tpu.memory_space<vmem>>, vector<1x128xf32>
    %6 = vector.broadcast %5 : vector<1x128xf32> to vector<64x128xf32>
    %7 = arith.addf %4, %6 : vector<64x128xf32>
    %c0_6 = arith.constant 0 : index
    %c0_7 = arith.constant 0 : index
    %8 = vector.load %arg4[%c0_6, %c0_7] : memref<64x128xf32, #tpu.memory_space<vmem>>, vector<64x128xf32>
    tpu.vector_store %arg4[%c0_6, %c0_7], %7 {strides = array<i32>} : memref<64x128xf32, #tpu.memory_space<vmem>>, vector<64x128xf32>,
    return
  }
  func.func @transform_0(%arg0: i32) -> (i32, i32) {
    %c0_i32 = arith.constant 0 : i32
    %c0_i32_0 = arith.constant 0 : i32
    return %arg0, %c0_i32 : i32, i32
  }
  func.func @transform_1(%arg0: i32) -> (i32, i32) {
    %c0_i32 = arith.constant 0 : i32
    %c0_i32_0 = arith.constant 0 : i32
    %c0_i32_1 = arith.constant 0 : i32
    return %c0_i32, %c0_i32_0 : i32, i32
  }
  func.func @transform_2(%arg0: i32) -> (i32, i32) {
    %c0_i32 = arith.constant 0 : i32
    %c0_i32_0 = arith.constant 0 : i32
    %c0_i32_1 = arith.constant 0 : i32
    return %c0_i32, %c0_i32_0 : i32, i32
  }
  func.func @transform_3(%arg0: i32) -> (i32, i32) {
    %c0_i32 = arith.constant 0 : i32
    %c0_i32_0 = arith.constant 0 : i32
    return %arg0, %c0_i32 : i32, i32
  }
}

module attributes {stable_mosaic.version = 11 : i64} {
  func.func @kernel(%arg0: i32, %arg1: i32, %arg2: memref<1x4x8x128xbf16, #tpu.memory_space<vmem>>, %arg3: memref<1x1x8x128xbf16, #tpu.memory_space<vmem>>, %arg4: memref<1x1x8x128xbf16, #tpu.memory_space<vmem>>, %arg5: memref<32x1xf32, #tpu.memory_space<vmem>>, %arg6: memref<1152x128xbf16, #tpu.memory_space<vmem>>, %arg7: memref<1x128xf32, #tpu.memory_space<vmem>>, %arg8: memref<128x128xbf16, #tpu.memory_space<vmem>>, %arg9: memref<1x128xf32, #tpu.memory_space<vmem>>, %arg10: memref<1x4x8x128xbf16, #tpu.memory_space<vmem>>, %arg11: memref<64x128xbf16, #tpu.memory_space<vmem>>, %arg12: memref<32x1152xbf16, #tpu.memory_space<vmem>>) attributes {dimension_semantics = [#tpu.dimension_semantics<parallel>, #tpu.dimension_semantics<parallel>], iteration_bounds = array<i64: 2, 1>, scalar_prefetch = 0 : i64, scratch_operands = 2 : i64, tpu.core_type = #tpu.core_type<tc>, window_params = [{transform_indices = @transform_0, window_bounds = array<i64: 1, 4, 8, 128>}, {transform_indices = @transform_1, window_bounds = array<i64: 1, 1, 8, 128>}, {transform_indices = @transform_2, window_bounds = array<i64: 1, 1, 8, 128>}, {pipeline_mode = #tpu.pipeline_mode<synchronous>, transform_indices = @transform_3, window_bounds = array<i64: 32, 1>}, {pipeline_mode = #tpu.pipeline_mode<synchronous>, transform_indices = @transform_4, window_bounds = array<i64: 1152, 128>}, {pipeline_mode = #tpu.pipeline_mode<synchronous>, transform_indices = @transform_5, window_bounds = array<i64: 1, 128>}, {pipeline_mode = #tpu.pipeline_mode<synchronous>, transform_indices = @transform_6, window_bounds = array<i64: 128, 128>}, {pipeline_mode = #tpu.pipeline_mode<synchronous>, transform_indices = @transform_7, window_bounds = array<i64: 1, 128>}, {transform_indices = @transform_8, window_bounds = array<i64: 1, 4, 8, 128>}]} {
    %cst = arith.constant 0.000000e+00 : bf16
    %0 = vector.broadcast %cst : bf16 to vector<8x128xbf16>
    %c0 = arith.constant 0 : index
    %c0_0 = arith.constant 0 : index
    %1 = vector.load %arg11[%c0, %c0_0] : memref<64x128xbf16, #tpu.memory_space<vmem>>, vector<8x128xbf16>
    tpu.vector_store %arg11[%c0, %c0_0], %0 {strides = array<i32>} : memref<64x128xbf16, #tpu.memory_space<vmem>>, vector<8x128xbf16>,
    %c0_1 = arith.constant 0 : index
    %c0_2 = arith.constant 0 : index
    %c0_3 = arith.constant 0 : index
    %c0_4 = arith.constant 0 : index
    %2 = vector.load %arg3[%c0_1, %c0_2, %c0_3, %c0_4] : memref<1x1x8x128xbf16, #tpu.memory_space<vmem>>, vector<1x1x8x128xbf16>
    %3 = vector.shape_cast %2 : vector<1x1x8x128xbf16> to vector<8x128xbf16>
    %cst_5 = arith.constant 0.000000e+00 : bf16
    %4 = vector.broadcast %cst_5 : bf16 to vector<8x128xbf16>
    %5 = arith.maximumf %3, %4 : vector<8x128xbf16>
    %c8 = arith.constant 8 : index
    %c0_6 = arith.constant 0 : index
    %6 = vector.load %arg11[%c8, %c0_6] : memref<64x128xbf16, #tpu.memory_space<vmem>>, vector<8x128xbf16>
    tpu.vector_store %arg11[%c8, %c0_6], %5 {strides = array<i32>} : memref<64x128xbf16, #tpu.memory_space<vmem>>, vector<8x128xbf16>,
    %c0_7 = arith.constant 0 : index
    %c0_8 = arith.constant 0 : index
    %c0_9 = arith.constant 0 : index
    %c0_10 = arith.constant 0 : index
    %7 = vector.load %arg2[%c0_7, %c0_8, %c0_9, %c0_10] : memref<1x4x8x128xbf16, #tpu.memory_space<vmem>>, vector<1x4x8x128xbf16>
    %8 = vector.shape_cast %7 : vector<1x4x8x128xbf16> to vector<4x8x128xbf16>
    %9 = vector.shape_cast %8 : vector<4x8x128xbf16> to vector<32x128xbf16>
    %cst_11 = arith.constant 0.000000e+00 : bf16
    %10 = vector.broadcast %cst_11 : bf16 to vector<32x128xbf16>
    %11 = arith.maximumf %9, %10 : vector<32x128xbf16>
    %c16 = arith.constant 16 : index
    %c0_12 = arith.constant 0 : index
    %12 = vector.load %arg11[%c16, %c0_12] : memref<64x128xbf16, #tpu.memory_space<vmem>>, vector<32x128xbf16>
    tpu.vector_store %arg11[%c16, %c0_12], %11 {strides = array<i32>} : memref<64x128xbf16, #tpu.memory_space<vmem>>, vector<32x128xbf16>,
    %c0_13 = arith.constant 0 : index
    %c0_14 = arith.constant 0 : index
    %c0_15 = arith.constant 0 : index
    %c0_16 = arith.constant 0 : index
    %13 = vector.load %arg4[%c0_13, %c0_14, %c0_15, %c0_16] : memref<1x1x8x128xbf16, #tpu.memory_space<vmem>>, vector<1x1x8x128xbf16>
    %14 = vector.shape_cast %13 : vector<1x1x8x128xbf16> to vector<8x128xbf16>
    %cst_17 = arith.constant 0.000000e+00 : bf16
    %15 = vector.broadcast %cst_17 : bf16 to vector<8x128xbf16>
    %16 = arith.maximumf %14, %15 : vector<8x128xbf16>
    %c48 = arith.constant 48 : index
    %c0_18 = arith.constant 0 : index
    %17 = vector.load %arg11[%c48, %c0_18] : memref<64x128xbf16, #tpu.memory_space<vmem>>, vector<8x128xbf16>
    tpu.vector_store %arg11[%c48, %c0_18], %16 {strides = array<i32>} : memref<64x128xbf16, #tpu.memory_space<vmem>>, vector<8x128xbf16>,
    %cst_19 = arith.constant 0.000000e+00 : bf16
    %18 = vector.broadcast %cst_19 : bf16 to vector<8x128xbf16>
    %c56 = arith.constant 56 : index
    %c0_20 = arith.constant 0 : index
    %19 = vector.load %arg11[%c56, %c0_20] : memref<64x128xbf16, #tpu.memory_space<vmem>>, vector<8x128xbf16>
    tpu.vector_store %arg11[%c56, %c0_20], %18 {strides = array<i32>} : memref<64x128xbf16, #tpu.memory_space<vmem>>, vector<8x128xbf16>,
    %c0_i32 = arith.constant 0 : i32
    %20 = arith.cmpi eq, %arg1, %c0_i32 : i32
    %21 = arith.extui %20 : i1 to i32
    %c0_i32_21 = arith.constant 0 : i32
    %22 = arith.cmpi ne, %21, %c0_i32_21 : i32
    scf.if %22 {
      %c8_68 = arith.constant 8 : index
      %c0_69 = arith.constant 0 : index
      %71 = vector.load %arg11[%c8_68, %c0_69] : memref<64x128xbf16, #tpu.memory_space<vmem>>, vector<8x128xbf16>
      tpu.vector_store %arg11[%c8_68, %c0_69], %0 {strides = array<i32>} : memref<64x128xbf16, #tpu.memory_space<vmem>>, vector<8x128xbf16>,
    } else {
    }
    %c0_i32_22 = arith.constant 0 : i32
    %23 = arith.cmpi eq, %arg1, %c0_i32_22 : i32
    %24 = arith.extui %23 : i1 to i32
    %c0_i32_23 = arith.constant 0 : i32
    %25 = arith.cmpi ne, %24, %c0_i32_23 : i32
    scf.if %25 {
      %c48_68 = arith.constant 48 : index
      %c0_69 = arith.constant 0 : index
      %71 = vector.load %arg11[%c48_68, %c0_69] : memref<64x128xbf16, #tpu.memory_space<vmem>>, vector<8x128xbf16>
      tpu.vector_store %arg11[%c48_68, %c0_69], %0 {strides = array<i32>} : memref<64x128xbf16, #tpu.memory_space<vmem>>, vector<8x128xbf16>,
    } else {
    }
    %c7 = arith.constant 7 : index
    %c0_24 = arith.constant 0 : index
    %26 = vector.load %arg11[%c7, %c0_24] : memref<64x128xbf16, #tpu.memory_space<vmem>>, vector<32x128xbf16>
    %c0_25 = arith.constant 0 : index
    %c0_26 = arith.constant 0 : index
    %27 = vector.load %arg12[%c0_25, %c0_26] : memref<32x1152xbf16, #tpu.memory_space<vmem>>, vector<32x128xbf16>
    tpu.vector_store %arg12[%c0_25, %c0_26], %26 {strides = array<i32>} : memref<32x1152xbf16, #tpu.memory_space<vmem>>, vector<32x128xbf16>,
    %c8_27 = arith.constant 8 : index
    %c0_28 = arith.constant 0 : index
    %28 = vector.load %arg11[%c8_27, %c0_28] : memref<64x128xbf16, #tpu.memory_space<vmem>>, vector<32x128xbf16>
    %c0_29 = arith.constant 0 : index
    %c128 = arith.constant 128 : index
    %29 = vector.load %arg12[%c0_29, %c128] : memref<32x1152xbf16, #tpu.memory_space<vmem>>, vector<32x128xbf16>
    tpu.vector_store %arg12[%c0_29, %c128], %28 {strides = array<i32>} : memref<32x1152xbf16, #tpu.memory_space<vmem>>, vector<32x128xbf16>,
    %c9 = arith.constant 9 : index
    %c0_30 = arith.constant 0 : index
    %30 = vector.load %arg11[%c9, %c0_30] : memref<64x128xbf16, #tpu.memory_space<vmem>>, vector<32x128xbf16>
    %c0_31 = arith.constant 0 : index
    %c256 = arith.constant 256 : index
    %31 = vector.load %arg12[%c0_31, %c256] : memref<32x1152xbf16, #tpu.memory_space<vmem>>, vector<32x128xbf16>
    tpu.vector_store %arg12[%c0_31, %c256], %30 {strides = array<i32>} : memref<32x1152xbf16, #tpu.memory_space<vmem>>, vector<32x128xbf16>,
    %c15 = arith.constant 15 : index
    %c0_32 = arith.constant 0 : index
    %32 = vector.load %arg11[%c15, %c0_32] : memref<64x128xbf16, #tpu.memory_space<vmem>>, vector<32x128xbf16>
    %c0_33 = arith.constant 0 : index
    %c384 = arith.constant 384 : index
    %33 = vector.load %arg12[%c0_33, %c384] : memref<32x1152xbf16, #tpu.memory_space<vmem>>, vector<32x128xbf16>
    tpu.vector_store %arg12[%c0_33, %c384], %32 {strides = array<i32>} : memref<32x1152xbf16, #tpu.memory_space<vmem>>, vector<32x128xbf16>,
    %c16_34 = arith.constant 16 : index
    %c0_35 = arith.constant 0 : index
    %34 = vector.load %arg11[%c16_34, %c0_35] : memref<64x128xbf16, #tpu.memory_space<vmem>>, vector<32x128xbf16>
    %c0_36 = arith.constant 0 : index
    %c512 = arith.constant 512 : index
    %35 = vector.load %arg12[%c0_36, %c512] : memref<32x1152xbf16, #tpu.memory_space<vmem>>, vector<32x128xbf16>
    tpu.vector_store %arg12[%c0_36, %c512], %34 {strides = array<i32>} : memref<32x1152xbf16, #tpu.memory_space<vmem>>, vector<32x128xbf16>,
    %c17 = arith.constant 17 : index
    %c0_37 = arith.constant 0 : index
    %36 = vector.load %arg11[%c17, %c0_37] : memref<64x128xbf16, #tpu.memory_space<vmem>>, vector<32x128xbf16>
    %c0_38 = arith.constant 0 : index
    %c640 = arith.constant 640 : index
    %37 = vector.load %arg12[%c0_38, %c640] : memref<32x1152xbf16, #tpu.memory_space<vmem>>, vector<32x128xbf16>
    tpu.vector_store %arg12[%c0_38, %c640], %36 {strides = array<i32>} : memref<32x1152xbf16, #tpu.memory_space<vmem>>, vector<32x128xbf16>,
    %c23 = arith.constant 23 : index
    %c0_39 = arith.constant 0 : index
    %38 = vector.load %arg11[%c23, %c0_39] : memref<64x128xbf16, #tpu.memory_space<vmem>>, vector<32x128xbf16>
    %c0_40 = arith.constant 0 : index
    %c768 = arith.constant 768 : index
    %39 = vector.load %arg12[%c0_40, %c768] : memref<32x1152xbf16, #tpu.memory_space<vmem>>, vector<32x128xbf16>
    tpu.vector_store %arg12[%c0_40, %c768], %38 {strides = array<i32>} : memref<32x1152xbf16, #tpu.memory_space<vmem>>, vector<32x128xbf16>,
    %c24 = arith.constant 24 : index
    %c0_41 = arith.constant 0 : index
    %40 = vector.load %arg11[%c24, %c0_41] : memref<64x128xbf16, #tpu.memory_space<vmem>>, vector<32x128xbf16>
    %c0_42 = arith.constant 0 : index
    %c896 = arith.constant 896 : index
    %41 = vector.load %arg12[%c0_42, %c896] : memref<32x1152xbf16, #tpu.memory_space<vmem>>, vector<32x128xbf16>
    tpu.vector_store %arg12[%c0_42, %c896], %40 {strides = array<i32>} : memref<32x1152xbf16, #tpu.memory_space<vmem>>, vector<32x128xbf16>,
    %c25 = arith.constant 25 : index
    %c0_43 = arith.constant 0 : index
    %42 = vector.load %arg11[%c25, %c0_43] : memref<64x128xbf16, #tpu.memory_space<vmem>>, vector<32x128xbf16>
    %c0_44 = arith.constant 0 : index
    %c1024 = arith.constant 1024 : index
    %43 = vector.load %arg12[%c0_44, %c1024] : memref<32x1152xbf16, #tpu.memory_space<vmem>>, vector<32x128xbf16>
    tpu.vector_store %arg12[%c0_44, %c1024], %42 {strides = array<i32>} : memref<32x1152xbf16, #tpu.memory_space<vmem>>, vector<32x128xbf16>,
    %c0_45 = arith.constant 0 : index
    %c0_46 = arith.constant 0 : index
    %44 = vector.load %arg12[%c0_45, %c0_46] : memref<32x1152xbf16, #tpu.memory_space<vmem>>, vector<32x1152xbf16>
    %c0_47 = arith.constant 0 : index
    %c0_48 = arith.constant 0 : index
    %45 = vector.load %arg6[%c0_47, %c0_48] : memref<1152x128xbf16, #tpu.memory_space<vmem>>, vector<1152x128xbf16>
    %cst_49 = arith.constant dense<0.000000e+00> : vector<32x128xf32>
    %46 = tpu.matmul %44, %45, %cst_49 {dimension_numbers = #tpu.dot_dimension_numbers<[1], [0], [0], [1], [0, 0, 1, 1], [], []>} : vector<32x1152xbf16>, vector<1152x128xbf16>, vector<32x128xf32> -> vector<32x128xf32>
    %c0_50 = arith.constant 0 : index
    %c0_51 = arith.constant 0 : index
    %47 = vector.load %arg7[%c0_50, %c0_51] : memref<1x128xf32, #tpu.memory_space<vmem>>, vector<1x128xf32>
    %48 = vector.broadcast %47 : vector<1x128xf32> to vector<32x128xf32>
    %49 = arith.addf %46, %48 : vector<32x128xf32>
    %cst_52 = arith.constant 0.000000e+00 : f32
    %50 = vector.broadcast %cst_52 : f32 to vector<32x128xf32>
    %51 = arith.maximumf %49, %50 : vector<32x128xf32>
    %52 = arith.truncf %51 : vector<32x128xf32> to vector<32x128xbf16>
    %c0_53 = arith.constant 0 : index
    %c0_54 = arith.constant 0 : index
    %53 = vector.load %arg8[%c0_53, %c0_54] : memref<128x128xbf16, #tpu.memory_space<vmem>>, vector<128x128xbf16>
    %cst_55 = arith.constant dense<0.000000e+00> : vector<32x128xf32>
    %54 = tpu.matmul %52, %53, %cst_55 {dimension_numbers = #tpu.dot_dimension_numbers<[1], [0], [0], [1], [0, 0, 1, 1], [], []>} : vector<32x128xbf16>, vector<128x128xbf16>, vector<32x128xf32> -> vector<32x128xf32>
    %c0_56 = arith.constant 0 : index
    %c0_57 = arith.constant 0 : index
    %55 = vector.load %arg9[%c0_56, %c0_57] : memref<1x128xf32, #tpu.memory_space<vmem>>, vector<1x128xf32>
    %56 = vector.broadcast %55 : vector<1x128xf32> to vector<32x128xf32>
    %57 = arith.addf %54, %56 : vector<32x128xf32>
    %c0_58 = arith.constant 0 : index
    %c0_59 = arith.constant 0 : index
    %c0_60 = arith.constant 0 : index
    %c0_61 = arith.constant 0 : index
    %58 = vector.load %arg2[%c0_58, %c0_59, %c0_60, %c0_61] : memref<1x4x8x128xbf16, #tpu.memory_space<vmem>>, vector<1x4x8x128xbf16>
    %59 = vector.shape_cast %58 : vector<1x4x8x128xbf16> to vector<4x8x128xbf16>
    %60 = vector.shape_cast %59 : vector<4x8x128xbf16> to vector<32x128xbf16>
    %61 = arith.extf %60 : vector<32x128xbf16> to vector<32x128xf32>
    %62 = arith.addf %57, %61 : vector<32x128xf32>
    %c0_62 = arith.constant 0 : index
    %c0_63 = arith.constant 0 : index
    %63 = vector.load %arg5[%c0_62, %c0_63] : memref<32x1xf32, #tpu.memory_space<vmem>>, vector<32x1xf32>
    %64 = vector.broadcast %63 : vector<32x1xf32> to vector<32x128xf32>
    %65 = arith.mulf %62, %64 : vector<32x128xf32>
    %66 = arith.truncf %65 : vector<32x128xf32> to vector<32x128xbf16>
    %67 = vector.shape_cast %66 : vector<32x128xbf16> to vector<4x8x128xbf16>
    %c0_64 = arith.constant 0 : index
    %c0_65 = arith.constant 0 : index
    %c0_66 = arith.constant 0 : index
    %c0_67 = arith.constant 0 : index
    %68 = vector.load %arg10[%c0_64, %c0_65, %c0_66, %c0_67] : memref<1x4x8x128xbf16, #tpu.memory_space<vmem>>, vector<1x4x8x128xbf16>
    %69 = vector.shape_cast %68 : vector<1x4x8x128xbf16> to vector<4x8x128xbf16>
    %70 = vector.shape_cast %67 : vector<4x8x128xbf16> to vector<1x4x8x128xbf16>
    tpu.vector_store %arg10[%c0_64, %c0_65, %c0_66, %c0_67], %70 {strides = array<i32>} : memref<1x4x8x128xbf16, #tpu.memory_space<vmem>>, vector<1x4x8x128xbf16>,
    return
  }
  func.func @transform_0(%arg0: i32, %arg1: i32) -> (i32, i32, i32, i32) {
    %c0_i32 = arith.constant 0 : i32
    %c0_i32_0 = arith.constant 0 : i32
    %c0_i32_1 = arith.constant 0 : i32
    return %arg0, %arg1, %c0_i32, %c0_i32_0 : i32, i32, i32, i32
  }
  func.func @transform_1(%arg0: i32, %arg1: i32) -> (i32, i32, i32, i32) {
    %c4_i32 = arith.constant 4 : i32
    %0 = arith.muli %arg1, %c4_i32 : i32
    %c1_i32 = arith.constant 1 : i32
    %1 = arith.subi %0, %c1_i32 : i32
    %c0_i32 = arith.constant 0 : i32
    %2 = arith.maxsi %1, %c0_i32 : i32
    %c0_i32_0 = arith.constant 0 : i32
    %c0_i32_1 = arith.constant 0 : i32
    %c0_i32_2 = arith.constant 0 : i32
    return %arg0, %2, %c0_i32_0, %c0_i32_1 : i32, i32, i32, i32
  }
  func.func @transform_2(%arg0: i32, %arg1: i32) -> (i32, i32, i32, i32) {
    %c1_i32 = arith.constant 1 : i32
    %0 = arith.addi %arg1, %c1_i32 : i32
    %c4_i32 = arith.constant 4 : i32
    %1 = arith.muli %0, %c4_i32 : i32
    %c3_i32 = arith.constant 3 : i32
    %2 = arith.minsi %1, %c3_i32 : i32
    %c0_i32 = arith.constant 0 : i32
    %c0_i32_0 = arith.constant 0 : i32
    %c0_i32_1 = arith.constant 0 : i32
    return %arg0, %2, %c0_i32, %c0_i32_0 : i32, i32, i32, i32
  }
  func.func @transform_3(%arg0: i32, %arg1: i32) -> (i32, i32) {
    %c0_i32 = arith.constant 0 : i32
    %c0_i32_0 = arith.constant 0 : i32
    %c0_i32_1 = arith.constant 0 : i32
    return %c0_i32, %c0_i32_0 : i32, i32
  }
  func.func @transform_4(%arg0: i32, %arg1: i32) -> (i32, i32) {
    %c0_i32 = arith.constant 0 : i32
    %c0_i32_0 = arith.constant 0 : i32
    %c0_i32_1 = arith.constant 0 : i32
    return %c0_i32, %c0_i32_0 : i32, i32
  }
  func.func @transform_5(%arg0: i32, %arg1: i32) -> (i32, i32) {
    %c0_i32 = arith.constant 0 : i32
    %c0_i32_0 = arith.constant 0 : i32
    %c0_i32_1 = arith.constant 0 : i32
    return %c0_i32, %c0_i32_0 : i32, i32
  }
  func.func @transform_6(%arg0: i32, %arg1: i32) -> (i32, i32) {
    %c0_i32 = arith.constant 0 : i32
    %c0_i32_0 = arith.constant 0 : i32
    %c0_i32_1 = arith.constant 0 : i32
    return %c0_i32, %c0_i32_0 : i32, i32
  }
  func.func @transform_7(%arg0: i32, %arg1: i32) -> (i32, i32) {
    %c0_i32 = arith.constant 0 : i32
    %c0_i32_0 = arith.constant 0 : i32
    %c0_i32_1 = arith.constant 0 : i32
    return %c0_i32, %c0_i32_0 : i32, i32
  }
  func.func @transform_8(%arg0: i32, %arg1: i32) -> (i32, i32, i32, i32) {
    %c0_i32 = arith.constant 0 : i32
    %c0_i32_0 = arith.constant 0 : i32
    %c0_i32_1 = arith.constant 0 : i32
    return %arg0, %arg1, %c0_i32, %c0_i32_0 : i32, i32, i32, i32
  }
}

</mosaic_0001>

<llo_original>
// kernel: vqvae_encoder_forward.6
$region0: #{vqvae_encoder_forward.6}
  #allocation0 [shape = 'u32[]', space=smem, size = 0x4, offset = 0x4, fixed_abs, tag = 'smem constant byte address 0x4 - core index']
  #allocation1 [shape = 'u32[144,128]{1,0:T(1,128)}', space=vmem, size = 0x12000, scoped, tag = 'internal scratch']
  %s0 = inlined_call_operand.vmem [shape: bf16[128,48], index: 0, kind: input, shape index: {}]
  %s1 = inlined_call_operand.vmem [shape: bf16[48,16], index: 1, kind: input, shape index: {}]
  %s2 = inlined_call_operand.vmem [shape: f32[1,16], index: 2, kind: input, shape index: {}]
  %s3 = inlined_call_operand.vmem [shape: bf16[128,16], index: 3, kind: output, shape index: {}]
  %s4 = sld [smem:[#allocation0]]
  $region22: #{vqvae_encoder_forward.6} parent=0
    _
  %s6 = ssub.s32 1, %s4
  %s7 = scalar_select 0, %s6, %s4
  // Predicated region
  $region2: #{vqvae_encoder_forward.6} parent=0 // pred_check
    _
  $region3: #{vqvae_encoder_forward.6} parent=0 // pred_check_branch
    %9 = sbr.rel (0) target = $region5
  $region4: #{vqvae_encoder_forward.6} parent=0 // pred_region
    _
  $region5: #{vqvae_encoder_forward.6} parent=0 // pred_fallthru
    _
  // Predicated region
  $region6: #{vqvae_encoder_forward.6} parent=0 // pred_check
    _
  $region7: #{vqvae_encoder_forward.6} parent=0 // pred_check_branch
    %11 = sbr.rel (0) target = $region9
  $region8: #{vqvae_encoder_forward.6} parent=0 // pred_region
    _
  $region9: #{vqvae_encoder_forward.6} parent=0 // pred_fallthru
    _
  // Predicated region
  $region10: #{vqvae_encoder_forward.6} parent=0 // pred_check
    _
  $region11: #{vqvae_encoder_forward.6} parent=0 // pred_check_branch
    %13 = sbr.rel (0) target = $region13
  $region12: #{vqvae_encoder_forward.6} parent=0 // pred_region
    _
  $region13: #{vqvae_encoder_forward.6} parent=0 // pred_fallthru
    _
  %v15 = vld [vmem:[%s0] sm:$0xf]
  %v16 = vld [vmem:[%s0 + $0x4] sm:$0xf]
  %v17 = vld [vmem:[%s0 + $0x8] sm:$0xf]
  %v18 = vld [vmem:[%s0 + $0xc] sm:$0xf]
  %v19 = vld [vmem:[%s0 + $0x10] sm:$0xf]
  %v20 = vld [vmem:[%s0 + $0x14] sm:$0xf]
  %v21 = vld [vmem:[%s0 + $0x18] sm:$0xf]
  %v22 = vld [vmem:[%s0 + $0x1c] sm:$0xf]
  %v23 = vld [vmem:[%s0 + $0x20] sm:$0xf]
  %v24 = vld [vmem:[%s0 + $0x24] sm:$0xf]
  %v25 = vld [vmem:[%s0 + $0x28] sm:$0xf]
  %v26 = vld [vmem:[%s0 + $0x2c] sm:$0xf]
  %v27 = vld [vmem:[%s0 + $0x30] sm:$0xf]
  %v28 = vld [vmem:[%s0 + $0x34] sm:$0xf]
  %v29 = vld [vmem:[%s0 + $0x38] sm:$0xf]
  %v30 = vld [vmem:[%s0 + $0x3c] sm:$0xf]
  %v31 = vld [vmem:[%s1] sm:$0xf]
  %v32 = vld [vmem:[%s1 + $0x4] sm:$0xf]
  %v33 = vld [vmem:[%s1 + $0x8] sm:$0xf]
  %v34 = vld [vmem:[%s1 + $0xc] sm:$0xf]
  %v35 = vld [vmem:[%s1 + $0x10] sm:$0xf]
  %v36 = vld [vmem:[%s1 + $0x14] sm:$0xf]
  %v37 = vld [vmem:[%s2] sm:$0x1]
  %v39 = vlaneseq
  %v40 = vshrl.u32 %v39, 7
  %v41 = vsub.s32 0, %v40
  %v42 = vrot.slane %v37, %v41
  %v60 = vunpack.c.l.b16 %v15
  %v61 = vunpack.c.l.b16 %v16
  %v62 = vunpack.c.l.b16 %v17
  %v63 = vunpack.c.l.b16 %v18
  %v64 = vunpack.c.l.b16 %v19
  %v65 = vunpack.c.l.b16 %v20
  %v66 = vunpack.c.l.b16 %v21
  %v67 = vunpack.c.l.b16 %v22
  %v68 = vunpack.c.l.b16 %v23
  %v69 = vunpack.c.l.b16 %v24
  %v70 = vunpack.c.l.b16 %v25
  %v71 = vunpack.c.l.b16 %v26
  %v72 = vunpack.c.l.b16 %v27
  %v73 = vunpack.c.l.b16 %v28
  %v74 = vunpack.c.l.b16 %v29
  %v75 = vunpack.c.l.b16 %v30
  %v76 = vpack.c.b16 %v61, %v60
  %v77 = vpack.c.b16 %v63, %v62
  %v78 = vpack.c.b16 %v65, %v64
  %v79 = vpack.c.b16 %v67, %v66
  %v80 = vpack.c.b16 %v69, %v68
  %v81 = vpack.c.b16 %v71, %v70
  %v82 = vpack.c.b16 %v73, %v72
  %v83 = vpack.c.b16 %v75, %v74
  %v90 = vunpack.c.l.b16 %v31
  %v91 = vunpack.c.l.b16 %v32
  %v92 = vunpack.c.l.b16 %v33
  %v93 = vunpack.c.l.b16 %v34
  %v94 = vunpack.c.l.b16 %v35
  %v95 = vunpack.c.l.b16 %v36
  %v96 = vpack.c.b16 %v91, %v90
  %v97 = vpack.c.b16 %v93, %v92
  %v98 = vpack.c.b16 %v95, %v94
  %vm102 = vcmask 392192
  %v104 = vsel %vm102, %v76, 0
  %v107 = vsel %vm102, %v77, 0
  %v110 = vsel %vm102, %v78, 0
  %v113 = vsel %vm102, %v79, 0
  %v116 = vsel %vm102, %v80, 0
  %v119 = vsel %vm102, %v81, 0
  %v122 = vsel %vm102, %v82, 0
  %v125 = vsel %vm102, %v83, 0
  %127 = vmatprep.subr.bf16.mxu0 0
  %128 = vmatpush1.bf16.msra.mxu0 0
  %129 = vmatprep.subr.bf16.mxu0 0
  %130 = vmatpush1.bf16.msra.mxu0 0
  %131 = vmatprep.subr.bf16.mxu0 0
  %132 = vmatpush1.bf16.msra.mxu0 0
  %133 = vmatprep.subr.bf16.mxu0 0
  %134 = vmatpush1.bf16.msra.mxu0 0
  %135 = vmatprep.subr.bf16.mxu0 0
  %136 = vmatpush1.bf16.msra.mxu0 0
  %137 = vmatprep.subr.bf16.mxu0 0
  %138 = vmatpush1.bf16.msra.mxu0 %v98
  %139 = vmatprep.subr.bf16.mxu0 0
  %140 = vmatpush1.bf16.msra.mxu0 %v97
  %141 = vmatprep.subr.bf16.mxu0 0
  %142 = vmatpush1.bf16.msra.mxu0 %v96
  %143 = vmatprep.subr.bf16.mxu0 0
  %144 = vmatpush2.bf16.msra.mxu0 0
  %145 = vmatprep.subr.bf16.mxu0 0
  %146 = vmatpush2.bf16.msra.mxu0 0
  %147 = vmatprep.subr.bf16.mxu0 0
  %148 = vmatpush2.bf16.msra.mxu0 0
  %149 = vmatprep.subr.bf16.mxu0 0
  %150 = vmatpush2.bf16.msra.mxu0 0
  %151 = vmatprep.subr.bf16.mxu0 0
  %152 = vmatpush2.bf16.msra.mxu0 0
  %153 = vmatprep.subr.bf16.mxu0 0
  %154 = vmatpush2.bf16.msra.mxu0 0
  %155 = vmatprep.subr.bf16.mxu0 0
  %156 = vmatpush2.bf16.msra.mxu0 0
  %157 = vmatprep.subr.bf16.mxu0 0
  %158 = vmatpush2.bf16.msra.mxu0 0
  %159 = vmatprep.mubr.bf16.mxu0 0
  %160 = vmatmul.mubr.bf16.gmra.mxu0 %v104
  %v161 = vpop.f32.mrf.mxu0
  %v162 = vadd.f32 %v42, %v161
  %v163 = vpop.f32.mrf.mxu0
  %v164 = vpop.f32.mrf.mxu0
  %v165 = vadd.f32 %v42, %v164
  %v166 = vpop.f32.mrf.mxu0
  %167 = vmatprep.mubr.bf16.mxu0 0
  %168 = vmatmul.mubr.bf16.gmra.mxu0 %v107
  %v169 = vpop.f32.mrf.mxu0
  %v170 = vadd.f32 %v42, %v169
  %v171 = vpop.f32.mrf.mxu0
  %v172 = vpop.f32.mrf.mxu0
  %v173 = vadd.f32 %v42, %v172
  %v174 = vpop.f32.mrf.mxu0
  %175 = vmatprep.mubr.bf16.mxu0 0
  %176 = vmatmul.mubr.bf16.gmra.mxu0 %v110
  %v177 = vpop.f32.mrf.mxu0
  %v178 = vadd.f32 %v42, %v177
  %v179 = vpop.f32.mrf.mxu0
  %v180 = vpop.f32.mrf.mxu0
  %v181 = vadd.f32 %v42, %v180
  %v182 = vpop.f32.mrf.mxu0
  %183 = vmatprep.mubr.bf16.mxu0 0
  %184 = vmatmul.mubr.bf16.gmra.mxu0 %v113
  %v185 = vpop.f32.mrf.mxu0
  %v186 = vadd.f32 %v42, %v185
  %v187 = vpop.f32.mrf.mxu0
  %v188 = vpop.f32.mrf.mxu0
  %v189 = vadd.f32 %v42, %v188
  %v190 = vpop.f32.mrf.mxu0
  %191 = vmatprep.mubr.bf16.mxu0 0
  %192 = vmatmul.mubr.bf16.gmra.mxu0 %v116
  %v193 = vpop.f32.mrf.mxu0
  %v194 = vadd.f32 %v42, %v193
  %v195 = vpop.f32.mrf.mxu0
  %v196 = vpop.f32.mrf.mxu0
  %v197 = vadd.f32 %v42, %v196
  %v198 = vpop.f32.mrf.mxu0
  %199 = vmatprep.mubr.bf16.mxu0 0
  %200 = vmatmul.mubr.bf16.gmra.mxu0 %v119
  %v201 = vpop.f32.mrf.mxu0
  %v202 = vadd.f32 %v42, %v201
  %v203 = vpop.f32.mrf.mxu0
  %v204 = vpop.f32.mrf.mxu0
  %v205 = vadd.f32 %v42, %v204
  %v206 = vpop.f32.mrf.mxu0
  %207 = vmatprep.mubr.bf16.mxu0 0
  %208 = vmatmul.mubr.bf16.gmra.mxu0 %v122
  %v209 = vpop.f32.mrf.mxu0
  %v210 = vadd.f32 %v42, %v209
  %v211 = vpop.f32.mrf.mxu0
  %v212 = vpop.f32.mrf.mxu0
  %v213 = vadd.f32 %v42, %v212
  %v214 = vpop.f32.mrf.mxu0
  %215 = vmatprep.mubr.bf16.mxu0 0
  %216 = vmatmul.mubr.bf16.gmra.mxu0 %v125
  %v217 = vpop.f32.mrf.mxu0
  %v218 = vadd.f32 %v42, %v217
  %v219 = vpop.f32.mrf.mxu0
  %v220 = vpop.f32.mrf.mxu0
  %v221 = vadd.f32 %v42, %v220
  %v222 = vpop.f32.mrf.mxu0
  %223 = vdwg.mxu0
  %v224 = vmax.f32 %v162, 0.0
  %v225 = vmax.f32 %v165, 0.0
  %v226 = vmax.f32 %v170, 0.0
  %v227 = vmax.f32 %v173, 0.0
  %v228 = vmax.f32 %v178, 0.0
  %v229 = vmax.f32 %v181, 0.0
  %v230 = vmax.f32 %v186, 0.0
  %v231 = vmax.f32 %v189, 0.0
  %v232 = vmax.f32 %v194, 0.0
  %v233 = vmax.f32 %v197, 0.0
  %v234 = vmax.f32 %v202, 0.0
  %v235 = vmax.f32 %v205, 0.0
  %v236 = vmax.f32 %v210, 0.0
  %v237 = vmax.f32 %v213, 0.0
  %v238 = vmax.f32 %v218, 0.0
  %v239 = vmax.f32 %v221, 0.0
  %v240 = vpack.c.bf16 %v225, %v224
  %v241 = vpack.c.bf16 %v227, %v226
  %v242 = vpack.c.bf16 %v229, %v228
  %v243 = vpack.c.bf16 %v231, %v230
  %v244 = vpack.c.bf16 %v233, %v232
  %v245 = vpack.c.bf16 %v235, %v234
  %v246 = vpack.c.bf16 %v237, %v236
  %v247 = vpack.c.bf16 %v239, %v238
  %v256 = vunpack.c.l.b16 %v240
  %v257 = vunpack.c.h.b16 %v240
  %v258 = vunpack.c.l.b16 %v241
  %v259 = vunpack.c.h.b16 %v241
  %v260 = vunpack.c.l.b16 %v242
  %v261 = vunpack.c.h.b16 %v242
  %v262 = vunpack.c.l.b16 %v243
  %v263 = vunpack.c.h.b16 %v243
  %v264 = vunpack.c.l.b16 %v244
  %v265 = vunpack.c.h.b16 %v244
  %v266 = vunpack.c.l.b16 %v245
  %v267 = vunpack.c.h.b16 %v245
  %v268 = vunpack.c.l.b16 %v246
  %v269 = vunpack.c.h.b16 %v246
  %v270 = vunpack.c.l.b16 %v247
  %v271 = vunpack.c.h.b16 %v247
  %v272 = vpack.c.b16 %v256, %v256
  %v273 = vpack.c.b16 %v257, %v257
  %v274 = vpack.c.b16 %v258, %v258
  %v275 = vpack.c.b16 %v259, %v259
  %v276 = vpack.c.b16 %v260, %v260
  %v277 = vpack.c.b16 %v261, %v261
  %v278 = vpack.c.b16 %v262, %v262
  %v279 = vpack.c.b16 %v263, %v263
  %v280 = vpack.c.b16 %v264, %v264
  %v281 = vpack.c.b16 %v265, %v265
  %v282 = vpack.c.b16 %v266, %v266
  %v283 = vpack.c.b16 %v267, %v267
  %v284 = vpack.c.b16 %v268, %v268
  %v285 = vpack.c.b16 %v269, %v269
  %v286 = vpack.c.b16 %v270, %v270
  %v287 = vpack.c.b16 %v271, %v271
  %vm304 = vcmask 125952
  %305 = vst.msk [vmem:[%s3] sm:$0xf] %vm304, %v272
  %306 = vst.msk [vmem:[%s3 + $0x4] sm:$0xf] %vm304, %v273
  %307 = vst.msk [vmem:[%s3 + $0x8] sm:$0xf] %vm304, %v274
  %308 = vst.msk [vmem:[%s3 + $0xc] sm:$0xf] %vm304, %v275
  %309 = vst.msk [vmem:[%s3 + $0x10] sm:$0xf] %vm304, %v276
  %310 = vst.msk [vmem:[%s3 + $0x14] sm:$0xf] %vm304, %v277
  %311 = vst.msk [vmem:[%s3 + $0x18] sm:$0xf] %vm304, %v278
  %312 = vst.msk [vmem:[%s3 + $0x1c] sm:$0xf] %vm304, %v279
  %313 = vst.msk [vmem:[%s3 + $0x20] sm:$0xf] %vm304, %v280
  %314 = vst.msk [vmem:[%s3 + $0x24] sm:$0xf] %vm304, %v281
  %315 = vst.msk [vmem:[%s3 + $0x28] sm:$0xf] %vm304, %v282
  %316 = vst.msk [vmem:[%s3 + $0x2c] sm:$0xf] %vm304, %v283
  %317 = vst.msk [vmem:[%s3 + $0x30] sm:$0xf] %vm304, %v284
  %318 = vst.msk [vmem:[%s3 + $0x34] sm:$0xf] %vm304, %v285
  %319 = vst.msk [vmem:[%s3 + $0x38] sm:$0xf] %vm304, %v286
  %320 = vst.msk [vmem:[%s3 + $0x3c] sm:$0xf] %vm304, %v287
  // Predicated region
  $region14: #{vqvae_encoder_forward.6} parent=0 // pred_check
    _
  $region15: #{vqvae_encoder_forward.6} parent=0 // pred_check_branch
    %322 = sbr.rel (0) target = $region17
  $region16: #{vqvae_encoder_forward.6} parent=0 // pred_region
    _
  $region17: #{vqvae_encoder_forward.6} parent=0 // pred_fallthru
    _
  // Predicated region
  $region18: #{vqvae_encoder_forward.6} parent=0 // pred_check
    _
  $region19: #{vqvae_encoder_forward.6} parent=0 // pred_check_branch
    %324 = sbr.rel (0) target = $region21
  $region20: #{vqvae_encoder_forward.6} parent=0 // pred_region
    _
  $region21: #{vqvae_encoder_forward.6} parent=0 // pred_fallthru
    _

// kernel: vqvae_encoder_forward.7
$region0: #{vqvae_encoder_forward.7}
  #allocation0 [shape = 'u32[]', space=smem, size = 0x4, offset = 0x4, fixed_abs, tag = 'smem constant byte address 0x4 - core index']
  #allocation1 [shape = 'u32[144,128]{1,0:T(1,128)}', space=vmem, size = 0x12000, scoped, tag = 'internal scratch']
  %s0 = inlined_call_operand.vmem [shape: bf16[32,256], index: 0, kind: input, shape index: {}]
  %s1 = inlined_call_operand.vmem [shape: bf16[256,128], index: 1, kind: input, shape index: {}]
  %s2 = inlined_call_operand.vmem [shape: f32[1,128], index: 2, kind: input, shape index: {}]
  %s3 = inlined_call_operand.vmem [shape: bf16[32,128], index: 3, kind: output, shape index: {}]
  %s4 = sld [smem:[#allocation0]]
  $region22: #{vqvae_encoder_forward.7} parent=0
    _
  %s6 = ssub.s32 1, %s4
  %s7 = scalar_select 0, %s6, %s4
  // Predicated region
  $region2: #{vqvae_encoder_forward.7} parent=0 // pred_check
    _
  $region3: #{vqvae_encoder_forward.7} parent=0 // pred_check_branch
    %9 = sbr.rel (0) target = $region5
  $region4: #{vqvae_encoder_forward.7} parent=0 // pred_region
    _
  $region5: #{vqvae_encoder_forward.7} parent=0 // pred_fallthru
    _
  // Predicated region
  $region6: #{vqvae_encoder_forward.7} parent=0 // pred_check
    _
  $region7: #{vqvae_encoder_forward.7} parent=0 // pred_check_branch
    %11 = sbr.rel (0) target = $region9
  $region8: #{vqvae_encoder_forward.7} parent=0 // pred_region
    _
  $region9: #{vqvae_encoder_forward.7} parent=0 // pred_fallthru
    _
  // Predicated region
  $region10: #{vqvae_encoder_forward.7} parent=0 // pred_check
    _
  $region11: #{vqvae_encoder_forward.7} parent=0 // pred_check_branch
    %13 = sbr.rel (0) target = $region13
  $region12: #{vqvae_encoder_forward.7} parent=0 // pred_region
    _
  $region13: #{vqvae_encoder_forward.7} parent=0 // pred_fallthru
    _
  %v15 = vld [vmem:[%s0] sm:$0xff]
  %v16 = vld [vmem:[%s0 + $0x8] sm:$0xff]
  %v17 = vld [vmem:[%s0 + $0x10] sm:$0xff]
  %v18 = vld [vmem:[%s0 + $0x18] sm:$0xff]
  %v19 = vld [vmem:[%s1] sm:$0xf]
  %v20 = vld [vmem:[%s1 + $0x4] sm:$0xf]
  %v21 = vld [vmem:[%s1 + $0x8] sm:$0xf]
  %v22 = vld [vmem:[%s1 + $0xc] sm:$0xf]
  %v23 = vld [vmem:[%s1 + $0x10] sm:$0xf]
  %v24 = vld [vmem:[%s1 + $0x14] sm:$0xf]
  %v25 = vld [vmem:[%s1 + $0x18] sm:$0xf]
  %v26 = vld [vmem:[%s1 + $0x1c] sm:$0xf]
  %v27 = vld [vmem:[%s1 + $0x20] sm:$0xf]
  %v28 = vld [vmem:[%s1 + $0x24] sm:$0xf]
  %v29 = vld [vmem:[%s1 + $0x28] sm:$0xf]
  %v30 = vld [vmem:[%s1 + $0x2c] sm:$0xf]
  %v31 = vld [vmem:[%s1 + $0x30] sm:$0xf]
  %v32 = vld [vmem:[%s1 + $0x34] sm:$0xf]
  %v33 = vld [vmem:[%s1 + $0x38] sm:$0xf]
  %v34 = vld [vmem:[%s1 + $0x3c] sm:$0xf]
  %v35 = vld [vmem:[%s1 + $0x40] sm:$0xf]
  %v36 = vld [vmem:[%s1 + $0x44] sm:$0xf]
  %v37 = vld [vmem:[%s1 + $0x48] sm:$0xf]
  %v38 = vld [vmem:[%s1 + $0x4c] sm:$0xf]
  %v39 = vld [vmem:[%s1 + $0x50] sm:$0xf]
  %v40 = vld [vmem:[%s1 + $0x54] sm:$0xf]
  %v41 = vld [vmem:[%s1 + $0x58] sm:$0xf]
  %v42 = vld [vmem:[%s1 + $0x5c] sm:$0xf]
  %v43 = vld [vmem:[%s1 + $0x60] sm:$0xf]
  %v44 = vld [vmem:[%s1 + $0x64] sm:$0xf]
  %v45 = vld [vmem:[%s1 + $0x68] sm:$0xf]
  %v46 = vld [vmem:[%s1 + $0x6c] sm:$0xf]
  %v47 = vld [vmem:[%s1 + $0x70] sm:$0xf]
  %v48 = vld [vmem:[%s1 + $0x74] sm:$0xf]
  %v49 = vld [vmem:[%s1 + $0x78] sm:$0xf]
  %v50 = vld [vmem:[%s1 + $0x7c] sm:$0xf]
  %v51 = vld [vmem:[%s2] sm:$0x1]
  %v53 = vlaneseq
  %v54 = vshrl.u32 %v53, 7
  %v55 = vsub.s32 0, %v54
  %v56 = vrot.slane %v51, %v55
  %v62 = vunpack.c.l.b16 %v15
  %v63 = vunpack.c.h.b16 %v15
  %v64 = vunpack.c.l.b16 %v16
  %v65 = vunpack.c.h.b16 %v16
  %v66 = vunpack.c.l.b16 %v17
  %v67 = vunpack.c.h.b16 %v17
  %v68 = vunpack.c.l.b16 %v18
  %v69 = vunpack.c.h.b16 %v18
  %v70 = vpack.c.b16 %v64, %v62
  %v71 = vpack.c.b16 %v65, %v63
  %v72 = vpack.c.b16 %v68, %v66
  %v73 = vpack.c.b16 %v69, %v67
  %v110 = vunpack.c.l.b16 %v19
  %v111 = vunpack.c.l.b16 %v20
  %v112 = vunpack.c.l.b16 %v21
  %v113 = vunpack.c.l.b16 %v22
  %v114 = vunpack.c.l.b16 %v23
  %v115 = vunpack.c.l.b16 %v24
  %v116 = vunpack.c.l.b16 %v25
  %v117 = vunpack.c.l.b16 %v26
  %v118 = vunpack.c.l.b16 %v27
  %v119 = vunpack.c.l.b16 %v28
  %v120 = vunpack.c.l.b16 %v29
  %v121 = vunpack.c.l.b16 %v30
  %v122 = vunpack.c.l.b16 %v31
  %v123 = vunpack.c.l.b16 %v32
  %v124 = vunpack.c.l.b16 %v33
  %v125 = vunpack.c.l.b16 %v34
  %v126 = vunpack.c.l.b16 %v35
  %v127 = vunpack.c.l.b16 %v36
  %v128 = vunpack.c.l.b16 %v37
  %v129 = vunpack.c.l.b16 %v38
  %v130 = vunpack.c.l.b16 %v39
  %v131 = vunpack.c.l.b16 %v40
  %v132 = vunpack.c.l.b16 %v41
  %v133 = vunpack.c.l.b16 %v42
  %v134 = vunpack.c.l.b16 %v43
  %v135 = vunpack.c.l.b16 %v44
  %v136 = vunpack.c.l.b16 %v45
  %v137 = vunpack.c.l.b16 %v46
  %v138 = vunpack.c.l.b16 %v47
  %v139 = vunpack.c.l.b16 %v48
  %v140 = vunpack.c.l.b16 %v49
  %v141 = vunpack.c.l.b16 %v50
  %v142 = vpack.c.b16 %v111, %v110
  %v143 = vpack.c.b16 %v113, %v112
  %v144 = vpack.c.b16 %v115, %v114
  %v145 = vpack.c.b16 %v117, %v116
  %v146 = vpack.c.b16 %v119, %v118
  %v147 = vpack.c.b16 %v121, %v120
  %v148 = vpack.c.b16 %v123, %v122
  %v149 = vpack.c.b16 %v125, %v124
  %v150 = vpack.c.b16 %v127, %v126
  %v151 = vpack.c.b16 %v129, %v128
  %v152 = vpack.c.b16 %v131, %v130
  %v153 = vpack.c.b16 %v133, %v132
  %v154 = vpack.c.b16 %v135, %v134
  %v155 = vpack.c.b16 %v137, %v136
  %v156 = vpack.c.b16 %v139, %v138
  %v157 = vpack.c.b16 %v141, %v140
  %174 = vmatprep.subr.bf16.mxu0 0
  %175 = vmatpush1.bf16.msra.mxu0 %v149
  %176 = vmatprep.subr.bf16.mxu0 0
  %177 = vmatpush1.bf16.msra.mxu0 %v148
  %178 = vmatprep.subr.bf16.mxu0 0
  %179 = vmatpush1.bf16.msra.mxu0 %v147
  %180 = vmatprep.subr.bf16.mxu0 0
  %181 = vmatpush1.bf16.msra.mxu0 %v146
  %182 = vmatprep.subr.bf16.mxu0 0
  %183 = vmatpush1.bf16.msra.mxu0 %v145
  %184 = vmatprep.subr.bf16.mxu0 0
  %185 = vmatpush1.bf16.msra.mxu0 %v144
  %186 = vmatprep.subr.bf16.mxu0 0
  %187 = vmatpush1.bf16.msra.mxu0 %v143
  %188 = vmatprep.subr.bf16.mxu0 0
  %189 = vmatpush1.bf16.msra.mxu0 %v142
  %190 = vmatprep.subr.bf16.mxu0 0
  %191 = vmatpush2.bf16.msra.mxu0 %v157
  %192 = vmatprep.subr.bf16.mxu0 0
  %193 = vmatpush2.bf16.msra.mxu0 %v156
  %194 = vmatprep.subr.bf16.mxu0 0
  %195 = vmatpush2.bf16.msra.mxu0 %v155
  %196 = vmatprep.subr.bf16.mxu0 0
  %197 = vmatpush2.bf16.msra.mxu0 %v154
  %198 = vmatprep.subr.bf16.mxu0 0
  %199 = vmatpush2.bf16.msra.mxu0 %v153
  %200 = vmatprep.subr.bf16.mxu0 0
  %201 = vmatpush2.bf16.msra.mxu0 %v152
  %202 = vmatprep.subr.bf16.mxu0 0
  %203 = vmatpush2.bf16.msra.mxu0 %v151
  %204 = vmatprep.subr.bf16.mxu0 0
  %205 = vmatpush2.bf16.msra.mxu0 %v150
  %206 = vmatprep.mubr.bf16.mxu0 %v71
  %207 = vmatmul.mubr.bf16.gmra.mxu0 %v70
  %v208 = vpop.f32.mrf.mxu0
  %v209 = vadd.f32 %v56, %v208
  %v210 = vpop.f32.mrf.mxu0
  %v211 = vpop.f32.mrf.mxu0
  %v212 = vadd.f32 %v56, %v211
  %v213 = vpop.f32.mrf.mxu0
  %214 = vmatprep.mubr.bf16.mxu0 %v73
  %215 = vmatmul.mubr.bf16.gmra.mxu0 %v72
  %v216 = vpop.f32.mrf.mxu0
  %v217 = vadd.f32 %v56, %v216
  %v218 = vpop.f32.mrf.mxu0
  %v219 = vpop.f32.mrf.mxu0
  %v220 = vadd.f32 %v56, %v219
  %v221 = vpop.f32.mrf.mxu0
  %222 = vdwg.mxu0
  %v223 = vmax.f32 %v209, 0.0
  %v224 = vmax.f32 %v212, 0.0
  %v225 = vmax.f32 %v217, 0.0
  %v226 = vmax.f32 %v220, 0.0
  %v227 = vpack.c.bf16 %v224, %v223
  %v228 = vpack.c.bf16 %v226, %v225
  %v231 = vunpack.c.l.b16 %v227
  %v232 = vunpack.c.h.b16 %v227
  %v233 = vunpack.c.l.b16 %v228
  %v234 = vunpack.c.h.b16 %v228
  %v235 = vpack.c.b16 %v231, %v231
  %v236 = vpack.c.b16 %v232, %v232
  %v237 = vpack.c.b16 %v233, %v233
  %v238 = vpack.c.b16 %v234, %v234
  %243 = vst [vmem:[%s3] sm:$0xf] %v235
  %244 = vst [vmem:[%s3 + $0x4] sm:$0xf] %v236
  %245 = vst [vmem:[%s3 + $0x8] sm:$0xf] %v237
  %246 = vst [vmem:[%s3 + $0xc] sm:$0xf] %v238
  // Predicated region
  $region14: #{vqvae_encoder_forward.7} parent=0 // pred_check
    _
  $region15: #{vqvae_encoder_forward.7} parent=0 // pred_check_branch
    %248 = sbr.rel (0) target = $region17
  $region16: #{vqvae_encoder_forward.7} parent=0 // pred_region
    _
  $region17: #{vqvae_encoder_forward.7} parent=0 // pred_fallthru
    _
  // Predicated region
  $region18: #{vqvae_encoder_forward.7} parent=0 // pred_check
    _
  $region19: #{vqvae_encoder_forward.7} parent=0 // pred_check_branch
    %250 = sbr.rel (0) target = $region21
  $region20: #{vqvae_encoder_forward.7} parent=0 // pred_region
    _
  $region21: #{vqvae_encoder_forward.7} parent=0 // pred_fallthru
    _

// kernel: vqvae_encoder_forward.11
$region0: #{vqvae_encoder_forward.11}
  #allocation0 [shape = 'u32[]', space=smem, size = 0x4, offset = 0x4, fixed_abs, tag = 'smem constant byte address 0x4 - core index']
  #allocation1 [shape = 'u32[144,128]{1,0:T(1,128)}', space=vmem, size = 0x12000, scoped, tag = 'internal scratch']
  %s0 = inlined_call_operand.vmem [shape: bf16[64,128], index: 0, kind: input, shape index: {}]
  %s1 = inlined_call_operand.vmem [shape: bf16[128,128], index: 1, kind: input, shape index: {}]
  %s2 = inlined_call_operand.vmem [shape: f32[1,128], index: 2, kind: input, shape index: {}]
  %s3 = inlined_call_operand.vmem [shape: f32[64,128], index: 3, kind: output, shape index: {}]
  %s4 = sld [smem:[#allocation0]]
  $region22: #{vqvae_encoder_forward.11} parent=0
    _
  %s6 = ssub.s32 1, %s4
  %s7 = scalar_select 0, %s6, %s4
  // Predicated region
  $region2: #{vqvae_encoder_forward.11} parent=0 // pred_check
    _
  $region3: #{vqvae_encoder_forward.11} parent=0 // pred_check_branch
    %9 = sbr.rel (0) target = $region5
  $region4: #{vqvae_encoder_forward.11} parent=0 // pred_region
    _
  $region5: #{vqvae_encoder_forward.11} parent=0 // pred_fallthru
    _
  // Predicated region
  $region6: #{vqvae_encoder_forward.11} parent=0 // pred_check
    _
  $region7: #{vqvae_encoder_forward.11} parent=0 // pred_check_branch
    %11 = sbr.rel (0) target = $region9
  $region8: #{vqvae_encoder_forward.11} parent=0 // pred_region
    _
  $region9: #{vqvae_encoder_forward.11} parent=0 // pred_fallthru
    _
  // Predicated region
  $region10: #{vqvae_encoder_forward.11} parent=0 // pred_check
    _
  $region11: #{vqvae_encoder_forward.11} parent=0 // pred_check_branch
    %13 = sbr.rel (0) target = $region13
  $region12: #{vqvae_encoder_forward.11} parent=0 // pred_region
    _
  $region13: #{vqvae_encoder_forward.11} parent=0 // pred_fallthru
    _
  %v15 = vld [vmem:[%s0] sm:$0xf]
  %v16 = vld [vmem:[%s0 + $0x4] sm:$0xf]
  %v17 = vld [vmem:[%s0 + $0x8] sm:$0xf]
  %v18 = vld [vmem:[%s0 + $0xc] sm:$0xf]
  %v19 = vld [vmem:[%s0 + $0x10] sm:$0xf]
  %v20 = vld [vmem:[%s0 + $0x14] sm:$0xf]
  %v21 = vld [vmem:[%s0 + $0x18] sm:$0xf]
  %v22 = vld [vmem:[%s0 + $0x1c] sm:$0xf]
  %v23 = vmax.bf16 %v15, 0
  %v24 = vmax.bf16 %v16, 0
  %v25 = vmax.bf16 %v17, 0
  %v26 = vmax.bf16 %v18, 0
  %v27 = vmax.bf16 %v19, 0
  %v28 = vmax.bf16 %v20, 0
  %v29 = vmax.bf16 %v21, 0
  %v30 = vmax.bf16 %v22, 0
  %v31 = vld [vmem:[%s1] sm:$0xf]
  %v32 = vld [vmem:[%s1 + $0x4] sm:$0xf]
  %v33 = vld [vmem:[%s1 + $0x8] sm:$0xf]
  %v34 = vld [vmem:[%s1 + $0xc] sm:$0xf]
  %v35 = vld [vmem:[%s1 + $0x10] sm:$0xf]
  %v36 = vld [vmem:[%s1 + $0x14] sm:$0xf]
  %v37 = vld [vmem:[%s1 + $0x18] sm:$0xf]
  %v38 = vld [vmem:[%s1 + $0x1c] sm:$0xf]
  %v39 = vld [vmem:[%s1 + $0x20] sm:$0xf]
  %v40 = vld [vmem:[%s1 + $0x24] sm:$0xf]
  %v41 = vld [vmem:[%s1 + $0x28] sm:$0xf]
  %v42 = vld [vmem:[%s1 + $0x2c] sm:$0xf]
  %v43 = vld [vmem:[%s1 + $0x30] sm:$0xf]
  %v44 = vld [vmem:[%s1 + $0x34] sm:$0xf]
  %v45 = vld [vmem:[%s1 + $0x38] sm:$0xf]
  %v46 = vld [vmem:[%s1 + $0x3c] sm:$0xf]
  %v47 = vld [vmem:[%s2] sm:$0x1]
  %v49 = vlaneseq
  %v50 = vshrl.u32 %v49, 7
  %v51 = vsub.s32 0, %v50
  %v52 = vrot.slane %v47, %v51
  %v62 = vunpack.c.l.b16 %v23
  %v63 = vunpack.c.l.b16 %v24
  %v64 = vunpack.c.l.b16 %v25
  %v65 = vunpack.c.l.b16 %v26
  %v66 = vunpack.c.l.b16 %v27
  %v67 = vunpack.c.l.b16 %v28
  %v68 = vunpack.c.l.b16 %v29
  %v69 = vunpack.c.l.b16 %v30
  %v70 = vpack.c.b16 %v63, %v62
  %v71 = vpack.c.b16 %v65, %v64
  %v72 = vpack.c.b16 %v67, %v66
  %v73 = vpack.c.b16 %v69, %v68
  %v94 = vunpack.c.l.b16 %v31
  %v95 = vunpack.c.l.b16 %v32
  %v96 = vunpack.c.l.b16 %v33
  %v97 = vunpack.c.l.b16 %v34
  %v98 = vunpack.c.l.b16 %v35
  %v99 = vunpack.c.l.b16 %v36
  %v100 = vunpack.c.l.b16 %v37
  %v101 = vunpack.c.l.b16 %v38
  %v102 = vunpack.c.l.b16 %v39
  %v103 = vunpack.c.l.b16 %v40
  %v104 = vunpack.c.l.b16 %v41
  %v105 = vunpack.c.l.b16 %v42
  %v106 = vunpack.c.l.b16 %v43
  %v107 = vunpack.c.l.b16 %v44
  %v108 = vunpack.c.l.b16 %v45
  %v109 = vunpack.c.l.b16 %v46
  %v110 = vpack.c.b16 %v95, %v94
  %v111 = vpack.c.b16 %v97, %v96
  %v112 = vpack.c.b16 %v99, %v98
  %v113 = vpack.c.b16 %v101, %v100
  %v114 = vpack.c.b16 %v103, %v102
  %v115 = vpack.c.b16 %v105, %v104
  %v116 = vpack.c.b16 %v107, %v106
  %v117 = vpack.c.b16 %v109, %v108
  %126 = vmatprep.subr.bf16.mxu0 0
  %127 = vmatpush1.bf16.msra.mxu0 %v117
  %128 = vmatprep.subr.bf16.mxu0 0
  %129 = vmatpush1.bf16.msra.mxu0 %v116
  %130 = vmatprep.subr.bf16.mxu0 0
  %131 = vmatpush1.bf16.msra.mxu0 %v115
  %132 = vmatprep.subr.bf16.mxu0 0
  %133 = vmatpush1.bf16.msra.mxu0 %v114
  %134 = vmatprep.subr.bf16.mxu0 0
  %135 = vmatpush1.bf16.msra.mxu0 %v113
  %136 = vmatprep.subr.bf16.mxu0 0
  %137 = vmatpush1.bf16.msra.mxu0 %v112
  %138 = vmatprep.subr.bf16.mxu0 0
  %139 = vmatpush1.bf16.msra.mxu0 %v111
  %140 = vmatprep.subr.bf16.mxu0 0
  %141 = vmatpush1.bf16.msra.mxu0 %v110
  %142 = vmatprep.subr.bf16.mxu0 0
  %143 = vmatpush2.bf16.msra.mxu0 0
  %144 = vmatprep.subr.bf16.mxu0 0
  %145 = vmatpush2.bf16.msra.mxu0 0
  %146 = vmatprep.subr.bf16.mxu0 0
  %147 = vmatpush2.bf16.msra.mxu0 0
  %148 = vmatprep.subr.bf16.mxu0 0
  %149 = vmatpush2.bf16.msra.mxu0 0
  %150 = vmatprep.subr.bf16.mxu0 0
  %151 = vmatpush2.bf16.msra.mxu0 0
  %152 = vmatprep.subr.bf16.mxu0 0
  %153 = vmatpush2.bf16.msra.mxu0 0
  %154 = vmatprep.subr.bf16.mxu0 0
  %155 = vmatpush2.bf16.msra.mxu0 0
  %156 = vmatprep.subr.bf16.mxu0 0
  %157 = vmatpush2.bf16.msra.mxu0 0
  %158 = vmatprep.mubr.bf16.mxu0 0
  %159 = vmatmul.mubr.bf16.gmra.mxu0 %v70
  %v160 = vpop.f32.mrf.mxu0
  %v161 = vadd.f32 %v52, %v160
  %v162 = vpop.f32.mrf.mxu0
  %v163 = vpop.f32.mrf.mxu0
  %v164 = vadd.f32 %v52, %v163
  %v165 = vpop.f32.mrf.mxu0
  %166 = vmatprep.mubr.bf16.mxu0 0
  %167 = vmatmul.mubr.bf16.gmra.mxu0 %v71
  %v168 = vpop.f32.mrf.mxu0
  %v169 = vadd.f32 %v52, %v168
  %v170 = vpop.f32.mrf.mxu0
  %v171 = vpop.f32.mrf.mxu0
  %v172 = vadd.f32 %v52, %v171
  %v173 = vpop.f32.mrf.mxu0
  %174 = vmatprep.mubr.bf16.mxu0 0
  %175 = vmatmul.mubr.bf16.gmra.mxu0 %v72
  %v176 = vpop.f32.mrf.mxu0
  %v177 = vadd.f32 %v52, %v176
  %v178 = vpop.f32.mrf.mxu0
  %v179 = vpop.f32.mrf.mxu0
  %v180 = vadd.f32 %v52, %v179
  %v181 = vpop.f32.mrf.mxu0
  %182 = vmatprep.mubr.bf16.mxu0 0
  %183 = vmatmul.mubr.bf16.gmra.mxu0 %v73
  %v184 = vpop.f32.mrf.mxu0
  %v185 = vadd.f32 %v52, %v184
  %v186 = vpop.f32.mrf.mxu0
  %v187 = vpop.f32.mrf.mxu0
  %v188 = vadd.f32 %v52, %v187
  %v189 = vpop.f32.mrf.mxu0
  %190 = vdwg.mxu0
  %191 = vst [vmem:[%s3] sm:$0xff] %v161
  %192 = vst [vmem:[%s3 + $0x8] sm:$0xff] %v164
  %193 = vst [vmem:[%s3 + $0x10] sm:$0xff] %v169
  %194 = vst [vmem:[%s3 + $0x18] sm:$0xff] %v172
  %195 = vst [vmem:[%s3 + $0x20] sm:$0xff] %v177
  %196 = vst [vmem:[%s3 + $0x28] sm:$0xff] %v180
  %197 = vst [vmem:[%s3 + $0x30] sm:$0xff] %v185
  %198 = vst [vmem:[%s3 + $0x38] sm:$0xff] %v188
  // Predicated region
  $region14: #{vqvae_encoder_forward.11} parent=0 // pred_check
    _
  $region15: #{vqvae_encoder_forward.11} parent=0 // pred_check_branch
    %200 = sbr.rel (0) target = $region17
  $region16: #{vqvae_encoder_forward.11} parent=0 // pred_region
    _
  $region17: #{vqvae_encoder_forward.11} parent=0 // pred_fallthru
    _
  // Predicated region
  $region18: #{vqvae_encoder_forward.11} parent=0 // pred_check
    _
  $region19: #{vqvae_encoder_forward.11} parent=0 // pred_check_branch
    %202 = sbr.rel (0) target = $region21
  $region20: #{vqvae_encoder_forward.11} parent=0 // pred_region
    _
  $region21: #{vqvae_encoder_forward.11} parent=0 // pred_fallthru
    _

// kernel: vqvae_encoder_forward.8
$region0: #{vqvae_encoder_forward.8}
  #allocation0 [shape = 'u32[]', space=smem, size = 0x4, offset = 0x4, fixed_abs, tag = 'smem constant byte address 0x4 - core index']
  #allocation1 [shape = 'u32[144,128]{1,0:T(1,128)}', space=vmem, size = 0x12000, scoped, tag = 'internal scratch']
  #allocation2 [shape = 'bf16[64,128]{1,0:T(8,128)(2,1)}', space=vmem, size = 0x4000, scoped, tag = 'scratch operand']
  #allocation3 [shape = 'bf16[32,1152]{1,0:T(8,128)(2,1)}', space=vmem, size = 0x12000, scoped, tag = 'scratch operand']
  %s0 = inlined_call_operand.vmem [shape: bf16[2,4,8,128], index: 0, kind: input, shape index: {}, may-alias: {0,1,2}]
  %s1 = inlined_call_operand.vmem [shape: bf16[2,4,8,128], index: 1, kind: input, shape index: {}, may-alias: {0,1,2}]
  %s2 = inlined_call_operand.vmem [shape: bf16[2,4,8,128], index: 2, kind: input, shape index: {}, may-alias: {0,1,2}]
  %s3 = inlined_call_operand.vmem [shape: f32[32,1], index: 3, kind: input, shape index: {}]
  %s4 = inlined_call_operand.vmem [shape: bf16[1152,128], index: 4, kind: input, shape index: {}]
  %s5 = inlined_call_operand.vmem [shape: f32[1,128], index: 5, kind: input, shape index: {}]
  %s6 = inlined_call_operand.vmem [shape: bf16[2,4,8,128], index: 6, kind: output, shape index: {}]
  %s7 = sld [smem:[#allocation0]]
  $region61: #{vqvae_encoder_forward.8} parent=0
    _
  %s9 = ssub.s32 1, %s7
  %s10 = scalar_select 0, %s9, %s7
  loop: start=0, step=1, limit=4
  $region2: #{vqvae_encoder_forward.8} parent=0 // loop_pre_header
    _
  $region3: #{vqvae_encoder_forward.8} parent=0 // loop_header
    %s12 = sphi 0, %s16
    %p13 = scmp.ge.s32.totalorder %s12, 4
    %s19 = sphi 0, %s31
    %s20 = sphi 0, %s27
    %s21 = sphi 0, %s19
    %s22 = sphi 0, %s20
    %s23 = sphi 0, %s21
    %s24 = sphi 0, %s22
    %s36 = sphi 0, %s38
    %s39 = sphi 0, %s36
    %s40 = sphi 0, %s39
    %s56 = sphi 0, %s40
    %s72 = sphi 0, %s74
    %s75 = sphi 0, %s72
    %s76 = sphi 0, %s75
    %s92 = sphi 0, %s76
    %s108 = sphi 0, %s110
    %s111 = sphi 0, %s108
    %s112 = sphi 0, %s111
    %s128 = sphi 0, %s112
    %s132 = sphi 0, %s132
    %s134 = sphi 0, %s132
    %s135 = sphi 0, %s134
    %s149 = sphi 0, %s135
    %s153 = sphi 0, %s153
    %s155 = sphi 0, %s153
    %s156 = sphi 0, %s155
    %s170 = sphi 0, %s156
    %s174 = sphi 0, %s174
    %s176 = sphi 0, %s174
    %s177 = sphi 0, %s176
    %s191 = sphi 0, %s177
    %s199 = sphi 0, %s201
    %s202 = sphi 0, %s199
    %s203 = sphi 0, %s202
    %s219 = sphi 0, %s203
  $region4: #{vqvae_encoder_forward.8} parent=0 // loop_header_branch
    %15 = sbr.rel (%p13) target = $region8
  $region5: #{vqvae_encoder_forward.8} parent=0 // loop_body
    %s17 = ssub.s32 %s12, 1
    %s18 = ssub.s32 %s12, 2
    %s25 = sadd.s32 1, %s20
    %p26 = scmp.ge.s32.totalorder %s25, 1
    %s27 = scalar_select %p26, 0, %s25
    %s28 = sadd.s32 1, %s19
    %s29 = scalar_select %p26, %s28, %s19
    %p30 = scmp.ge.s32.totalorder %s29, 2
    %s31 = scalar_select %p30, 0, %s29
    %s32 = ssub.s32 %s19, %s31
    %s33 = ssub.s32 %s20, %s27
    %s34 = sor.u32 %s32, %s33
    %p35 = scmp.eq.s32.totalorder %s34, 0
    %s37 = sadd.s32 %s36, 1
    %s38 = scalar_select %p35, %s36, %s37
    %p41 = pneg %p35
    %p42 = scmp.eq.s32.totalorder %s12, 1
    %p43 = por %p41, %p42
    %p44 = scmp.ne.s32.totalorder %s36, %s39
    %p45 = scmp.eq.s32.totalorder %s12, 0
    %p46 = por %p44, %p45
    %p47 = scmp.ne.s32.totalorder %s36, %s39
    %p48 = scmp.eq.s32.totalorder %s17, 1
    %p49 = por %p47, %p48
    %p50 = scmp.ne.s32.totalorder %s39, %s40
    %p51 = scmp.eq.s32.totalorder %s17, 0
    %p52 = por %p50, %p51
    %p53 = scmp.ne.s32.totalorder %s39, %s40
    %p54 = scmp.eq.s32.totalorder %s18, 1
    %p55 = por %p53, %p54
    %p57 = scmp.ne.s32.totalorder %s40, %s56
    %p58 = scmp.eq.s32.totalorder %s18, 0
    %p59 = por %p57, %p58
    %s60 = smul.u32 %s20, 4
    %s61 = ssub.s32 %s60, 1
    %p62 = scmp.gt.s32.totalorder %s61, 0
    %s63 = scalar_select %p62, %s61, 0
    %s64 = smul.u32 %s27, 4
    %s65 = ssub.s32 %s64, 1
    %p66 = scmp.gt.s32.totalorder %s65, 0
    %s67 = scalar_select %p66, %s65, 0
    %s68 = ssub.s32 %s19, %s31
    %s69 = ssub.s32 %s63, %s67
    %s70 = sor.u32 %s68, %s69
    %p71 = scmp.eq.s32.totalorder %s70, 0
    %s73 = sadd.s32 %s72, 1
    %s74 = scalar_select %p71, %s72, %s73
    %p77 = pneg %p71
    %p78 = scmp.eq.s32.totalorder %s12, 1
    %p79 = por %p77, %p78
    %p80 = scmp.ne.s32.totalorder %s72, %s75
    %p81 = scmp.eq.s32.totalorder %s12, 0
    %p82 = por %p80, %p81
    %p83 = scmp.ne.s32.totalorder %s72, %s75
    %p84 = scmp.eq.s32.totalorder %s17, 1
    %p85 = por %p83, %p84
    %p86 = scmp.ne.s32.totalorder %s75, %s76
    %p87 = scmp.eq.s32.totalorder %s17, 0
    %p88 = por %p86, %p87
    %p89 = scmp.ne.s32.totalorder %s75, %s76
    %p90 = scmp.eq.s32.totalorder %s18, 1
    %p91 = por %p89, %p90
    %p93 = scmp.ne.s32.totalorder %s76, %s92
    %p94 = scmp.eq.s32.totalorder %s18, 0
    %p95 = por %p93, %p94
    %s96 = sadd.s32 %s20, 1
    %s97 = smul.u32 %s96, 4
    %p98 = scmp.lt.s32.totalorder %s97, 3
    %s99 = scalar_select %p98, %s97, 3
    %s100 = sadd.s32 %s27, 1
    %s101 = smul.u32 %s100, 4
    %p102 = scmp.lt.s32.totalorder %s101, 3
    %s103 = scalar_select %p102, %s101, 3
    %s104 = ssub.s32 %s19, %s31
    %s105 = ssub.s32 %s99, %s103
    %s106 = sor.u32 %s104, %s105
    %p107 = scmp.eq.s32.totalorder %s106, 0
    %s109 = sadd.s32 %s108, 1
    %s110 = scalar_select %p107, %s108, %s109
    %p113 = pneg %p107
    %p114 = scmp.eq.s32.totalorder %s12, 1
    %p115 = por %p113, %p114
    %p116 = scmp.ne.s32.totalorder %s108, %s111
    %p117 = scmp.eq.s32.totalorder %s12, 0
    %p118 = por %p116, %p117
    %p119 = scmp.ne.s32.totalorder %s108, %s111
    %p120 = scmp.eq.s32.totalorder %s17, 1
    %p121 = por %p119, %p120
    %p122 = scmp.ne.s32.totalorder %s111, %s112
    %p123 = scmp.eq.s32.totalorder %s17, 0
    %p124 = por %p122, %p123
    %p125 = scmp.ne.s32.totalorder %s111, %s112
    %p126 = scmp.eq.s32.totalorder %s18, 1
    %p127 = por %p125, %p126
    %p129 = scmp.ne.s32.totalorder %s112, %s128
    %p130 = scmp.eq.s32.totalorder %s18, 0
    %p131 = por %p129, %p130
    %s133 = sadd.s32 %s132, 1
    %p136 = scmp.eq.s32.totalorder %s12, 1
    %p137 = scmp.ne.s32.totalorder %s132, %s134
    %p138 = scmp.eq.s32.totalorder %s12, 0
    %p139 = por %p137, %p138
    %p140 = scmp.ne.s32.totalorder %s132, %s134
    %p141 = scmp.eq.s32.totalorder %s17, 1
    %p142 = por %p140, %p141
    %p143 = scmp.ne.s32.totalorder %s134, %s135
    %p144 = scmp.eq.s32.totalorder %s17, 0
    %p145 = por %p143, %p144
    %p146 = scmp.ne.s32.totalorder %s134, %s135
    %p147 = scmp.eq.s32.totalorder %s18, 1
    %p148 = por %p146, %p147
    %p150 = scmp.ne.s32.totalorder %s135, %s149
    %p151 = scmp.eq.s32.totalorder %s18, 0
    %p152 = por %p150, %p151
    %s154 = sadd.s32 %s153, 1
    %p157 = scmp.eq.s32.totalorder %s12, 1
    %p158 = scmp.ne.s32.totalorder %s153, %s155
    %p159 = scmp.eq.s32.totalorder %s12, 0
    %p160 = por %p158, %p159
    %p161 = scmp.ne.s32.totalorder %s153, %s155
    %p162 = scmp.eq.s32.totalorder %s17, 1
    %p163 = por %p161, %p162
    %p164 = scmp.ne.s32.totalorder %s155, %s156
    %p165 = scmp.eq.s32.totalorder %s17, 0
    %p166 = por %p164, %p165
    %p167 = scmp.ne.s32.totalorder %s155, %s156
    %p168 = scmp.eq.s32.totalorder %s18, 1
    %p169 = por %p167, %p168
    %p171 = scmp.ne.s32.totalorder %s156, %s170
    %p172 = scmp.eq.s32.totalorder %s18, 0
    %p173 = por %p171, %p172
    %s175 = sadd.s32 %s174, 1
    %p178 = scmp.eq.s32.totalorder %s12, 1
    %p179 = scmp.ne.s32.totalorder %s174, %s176
    %p180 = scmp.eq.s32.totalorder %s12, 0
    %p181 = por %p179, %p180
    %p182 = scmp.ne.s32.totalorder %s174, %s176
    %p183 = scmp.eq.s32.totalorder %s17, 1
    %p184 = por %p182, %p183
    %p185 = scmp.ne.s32.totalorder %s176, %s177
    %p186 = scmp.eq.s32.totalorder %s17, 0
    %p187 = por %p185, %p186
    %p188 = scmp.ne.s32.totalorder %s176, %s177
    %p189 = scmp.eq.s32.totalorder %s18, 1
    %p190 = por %p188, %p189
    %p192 = scmp.ne.s32.totalorder %s177, %s191
    %p193 = scmp.eq.s32.totalorder %s18, 0
    %p194 = por %p192, %p193
    %s195 = ssub.s32 %s19, %s31
    %s196 = ssub.s32 %s20, %s27
    %s197 = sor.u32 %s195, %s196
    %p198 = scmp.eq.s32.totalorder %s197, 0
    %s200 = sadd.s32 %s199, 1
    %s201 = scalar_select %p198, %s199, %s200
    %p204 = pneg %p198
    %p205 = scmp.eq.s32.totalorder %s12, 1
    %p206 = por %p204, %p205
    %p207 = scmp.ne.s32.totalorder %s199, %s202
    %p208 = scmp.eq.s32.totalorder %s12, 0
    %p209 = por %p207, %p208
    %p210 = scmp.ne.s32.totalorder %s199, %s202
    %p211 = scmp.eq.s32.totalorder %s17, 1
    %p212 = por %p210, %p211
    %p213 = scmp.ne.s32.totalorder %s202, %s203
    %p214 = scmp.eq.s32.totalorder %s17, 0
    %p215 = por %p213, %p214
    %p216 = scmp.ne.s32.totalorder %s202, %s203
    %p217 = scmp.eq.s32.totalorder %s18, 1
    %p218 = por %p216, %p217
    %p220 = scmp.ne.s32.totalorder %s203, %s219
    %p221 = scmp.eq.s32.totalorder %s18, 0
    %p222 = por %p220, %p221
    %p223 = scmp.le.s32.totalorder 1, %s12
    %p224 = scmp.lt.s32.totalorder %s12, 3
    %p225 = pnand %p223, %p224
    %p226 = pneg %p225
    // Predicated region
    $region9: #{vqvae_encoder_forward.8} parent=5 // pred_check
      _
    $region10: #{vqvae_encoder_forward.8} parent=5 // pred_check_branch
      %228 = sbr.rel (%p225) target = $region12
    $region11: #{vqvae_encoder_forward.8} parent=5 // pred_region
      %s229 = ssub.s32 %s12, 1
      // Predicated region
      $region13: #{vqvae_encoder_forward.8} parent=11 // pred_check
        %p230 = pneg %p145
      $region14: #{vqvae_encoder_forward.8} parent=11 // pred_check_branch
        %232 = sbr.rel (%p230) target = $region16
      $region15: #{vqvae_encoder_forward.8} parent=11 // pred_region
        _
      $region16: #{vqvae_encoder_forward.8} parent=11 // pred_fallthru
        _
      // Predicated region
      $region17: #{vqvae_encoder_forward.8} parent=11 // pred_check
        %p233 = pneg %p166
      $region18: #{vqvae_encoder_forward.8} parent=11 // pred_check_branch
        %235 = sbr.rel (%p233) target = $region20
      $region19: #{vqvae_encoder_forward.8} parent=11 // pred_region
        _
      $region20: #{vqvae_encoder_forward.8} parent=11 // pred_fallthru
        _
      // Predicated region
      $region21: #{vqvae_encoder_forward.8} parent=11 // pred_check
        %p236 = pneg %p187
      $region22: #{vqvae_encoder_forward.8} parent=11 // pred_check_branch
        %238 = sbr.rel (%p236) target = $region24
      $region23: #{vqvae_encoder_forward.8} parent=11 // pred_region
        _
      $region24: #{vqvae_encoder_forward.8} parent=11 // pred_fallthru
        _
    $region12: #{vqvae_encoder_forward.8} parent=5 // pred_fallthru
      _
    %p239 = scmp.lt.s32.totalorder %s12, 2
    // Predicated region
    $region25: #{vqvae_encoder_forward.8} parent=5 // pred_check
      %p240 = pneg %p239
    $region26: #{vqvae_encoder_forward.8} parent=5 // pred_check_branch
      %242 = sbr.rel (%p240) target = $region28
    $region27: #{vqvae_encoder_forward.8} parent=5 // pred_region
      // Predicated region
      $region29: #{vqvae_encoder_forward.8} parent=27 // pred_check
        %p243 = pneg %p46
      $region30: #{vqvae_encoder_forward.8} parent=27 // pred_check_branch
        %245 = sbr.rel (%p243) target = $region32
      $region31: #{vqvae_encoder_forward.8} parent=27 // pred_region
        %s246 = smul.u32 4, %s20
        %p247 = scmp.lt.s32.totalorder %s19, 1
        %s248 = scalar_select %p247, %s19, 1
        %p249 = scmp.lt.s32.totalorder %s246, 3
        %s250 = scalar_select %p249, %s246, 3
        %s251 = smul.addr %s248, 4
        %s252 = sadd.s32 %s250, %s251
        %s253 = smul.addr %s252, 4
        %s254 = scalar_lea.vmem %s0, %s253
        %s255 = smul.u32 4, %s20
      $region32: #{vqvae_encoder_forward.8} parent=27 // pred_fallthru
        _
      // Predicated region
      $region33: #{vqvae_encoder_forward.8} parent=27 // pred_check
        %p256 = pneg %p82
      $region34: #{vqvae_encoder_forward.8} parent=27 // pred_check_branch
        %258 = sbr.rel (%p256) target = $region36
      $region35: #{vqvae_encoder_forward.8} parent=27 // pred_region
        %s259 = smul.u32 %s20, 4
        %s260 = ssub.s32 %s259, 1
        %p261 = scmp.gt.s32.totalorder %s260, 0
        %s262 = scalar_select %p261, %s260, 0
        %p263 = scmp.lt.s32.totalorder %s19, 1
        %s264 = scalar_select %p263, %s19, 1
        %p265 = scmp.lt.s32.totalorder %s262, 3
        %s266 = scalar_select %p265, %s262, 3
        %s267 = smul.addr %s264, 4
        %s268 = sadd.s32 %s266, %s267
        %s269 = smul.addr %s268, 4
        %s270 = scalar_lea.vmem %s1, %s269
        %s271 = smul.u32 %s20, 4
        %s272 = ssub.s32 %s271, 1
        %p273 = scmp.gt.s32.totalorder %s272, 0
        %s274 = scalar_select %p273, %s272, 0
      $region36: #{vqvae_encoder_forward.8} parent=27 // pred_fallthru
        _
      // Predicated region
      $region37: #{vqvae_encoder_forward.8} parent=27 // pred_check
        %p275 = pneg %p118
      $region38: #{vqvae_encoder_forward.8} parent=27 // pred_check_branch
        %277 = sbr.rel (%p275) target = $region40
      $region39: #{vqvae_encoder_forward.8} parent=27 // pred_region
        %s278 = sadd.s32 %s20, 1
        %s279 = smul.u32 %s278, 4
        %p280 = scmp.lt.s32.totalorder %s279, 3
        %s281 = scalar_select %p280, %s279, 3
        %p282 = scmp.lt.s32.totalorder %s19, 1
        %s283 = scalar_select %p282, %s19, 1
        %p284 = scmp.lt.s32.totalorder %s281, 3
        %s285 = scalar_select %p284, %s281, 3
        %s286 = smul.addr %s283, 4
        %s287 = sadd.s32 %s285, %s286
        %s288 = smul.addr %s287, 4
        %s289 = scalar_lea.vmem %s2, %s288
        %s290 = sadd.s32 %s20, 1
        %s291 = smul.u32 %s290, 4
        %p292 = scmp.lt.s32.totalorder %s291, 3
        %s293 = scalar_select %p292, %s291, 3
      $region40: #{vqvae_encoder_forward.8} parent=27 // pred_fallthru
        _
    $region28: #{vqvae_encoder_forward.8} parent=5 // pred_fallthru
      _
    %p294 = scmp.le.s32.totalorder 1, %s12
    %p295 = scmp.lt.s32.totalorder %s12, 3
    %p296 = pnand %p294, %p295
    %p297 = pneg %p296
    // Predicated region
    $region41: #{vqvae_encoder_forward.8} parent=5 // pred_check
      _
    $region42: #{vqvae_encoder_forward.8} parent=5 // pred_check_branch
      %299 = sbr.rel (%p296) target = $region44
    $region43: #{vqvae_encoder_forward.8} parent=5 // pred_region
      %s300 = ssub.s32 %s12, 1
      %s301 = smul.u32 4, %s22
      %p302 = scmp.lt.s32.totalorder %s21, 1
      %s303 = scalar_select %p302, %s21, 1
      %p304 = scmp.lt.s32.totalorder %s301, 3
      %s305 = scalar_select %p304, %s301, 3
      %s306 = smul.addr %s303, 4
      %s307 = sadd.s32 %s305, %s306
      %s308 = smul.addr %s307, 4
      %s309 = scalar_lea.vmem %s0, %s308
      %p310 = pneg %p52
      %p311 = pneg %p49
      %s312 = smul.u32 %s22, 4
      %s313 = ssub.s32 %s312, 1
      %p314 = scmp.gt.s32.totalorder %s313, 0
      %s315 = scalar_select %p314, %s313, 0
      %p316 = scmp.lt.s32.totalorder %s21, 1
      %s317 = scalar_select %p316, %s21, 1
      %p318 = scmp.lt.s32.totalorder %s315, 3
      %s319 = scalar_select %p318, %s315, 3
      %s320 = smul.addr %s317, 4
      %s321 = sadd.s32 %s319, %s320
      %s322 = smul.addr %s321, 4
      %s323 = scalar_lea.vmem %s1, %s322
      %p324 = pneg %p88
      %p325 = pneg %p85
      %s326 = sadd.s32 %s22, 1
      %s327 = smul.u32 %s326, 4
      %p328 = scmp.lt.s32.totalorder %s327, 3
      %s329 = scalar_select %p328, %s327, 3
      %p330 = scmp.lt.s32.totalorder %s21, 1
      %s331 = scalar_select %p330, %s21, 1
      %p332 = scmp.lt.s32.totalorder %s329, 3
      %s333 = scalar_select %p332, %s329, 3
      %s334 = smul.addr %s331, 4
      %s335 = sadd.s32 %s333, %s334
      %s336 = smul.addr %s335, 4
      %s337 = scalar_lea.vmem %s2, %s336
      %p338 = pneg %p124
      %p339 = pneg %p121
      %p340 = pneg %p145
      %p341 = pneg %p142
      %p342 = pneg %p166
      %p343 = pneg %p163
      %p344 = pneg %p187
      %p345 = pneg %p184
      %p346 = pneg %p215
      %p347 = pneg %p212
      %s348 = smul.u32 4, %s22
      %p349 = scmp.lt.s32.totalorder %s21, 1
      %s350 = scalar_select %p349, %s21, 1
      %p351 = scmp.lt.s32.totalorder %s348, 3
      %s352 = scalar_select %p351, %s348, 3
      %s353 = smul.addr %s350, 4
      %s354 = sadd.s32 %s352, %s353
      %s355 = smul.addr %s354, 4
      %s356 = scalar_lea.vmem %s6, %s355
      %s357 = smul.u32 4, %s22
      %p358 = scmp.lt.s32.totalorder %s21, 1
      %s359 = scalar_select %p358, %s21, 1
      %p360 = scmp.lt.s32.totalorder %s357, 3
      %s361 = scalar_select %p360, %s357, 3
      %s362 = smul.addr %s359, 4
      %s363 = sadd.s32 %s361, %s362
      %s364 = smul.addr %s363, 4
      %s365 = scalar_lea.vmem %s0, %s364
      %s366 = smul.u32 4, %s22
      %s367 = smul.u32 %s22, 4
      %s368 = ssub.s32 %s367, 1
      %p369 = scmp.gt.s32.totalorder %s368, 0
      %s370 = scalar_select %p369, %s368, 0
      %p371 = scmp.lt.s32.totalorder %s21, 1
      %s372 = scalar_select %p371, %s21, 1
      %p373 = scmp.lt.s32.totalorder %s370, 3
      %s374 = scalar_select %p373, %s370, 3
      %s375 = smul.addr %s372, 4
      %s376 = sadd.s32 %s374, %s375
      %s377 = smul.addr %s376, 4
      %s378 = scalar_lea.vmem %s1, %s377
      %s379 = smul.u32 %s22, 4
      %s380 = ssub.s32 %s379, 1
      %p381 = scmp.gt.s32.totalorder %s380, 0
      %s382 = scalar_select %p381, %s380, 0
      %s383 = sadd.s32 %s22, 1
      %s384 = smul.u32 %s383, 4
      %p385 = scmp.lt.s32.totalorder %s384, 3
      %s386 = scalar_select %p385, %s384, 3
      %p387 = scmp.lt.s32.totalorder %s21, 1
      %s388 = scalar_select %p387, %s21, 1
      %p389 = scmp.lt.s32.totalorder %s386, 3
      %s390 = scalar_select %p389, %s386, 3
      %s391 = smul.addr %s388, 4
      %s392 = sadd.s32 %s390, %s391
      %s393 = smul.addr %s392, 4
      %s394 = scalar_lea.vmem %s2, %s393
      %s395 = sadd.s32 %s22, 1
      %s396 = smul.u32 %s395, 4
      %p397 = scmp.lt.s32.totalorder %s396, 3
      %s398 = scalar_select %p397, %s396, 3
      %s399 = smul.u32 4, %s22
      %p400 = scmp.lt.s32.totalorder %s21, 1
      %s401 = scalar_select %p400, %s21, 1
      %p402 = scmp.lt.s32.totalorder %s399, 3
      %s403 = scalar_select %p402, %s399, 3
      %s404 = smul.addr %s401, 4
      %s405 = sadd.s32 %s403, %s404
      %s406 = smul.addr %s405, 4
      %s407 = scalar_lea.vmem %s6, %s406
      %s408 = smul.u32 4, %s22
      %410 = vst [vmem:[#allocation2] sm:$0xf] 0
      %v411 = vld [vmem:[%s378] sm:$0xf]
      %412 = vst [vmem:[#allocation2 + $0x4] sm:$0xf] %v411
      %v413 = vld [vmem:[%s365] sm:$0xf]
      %v414 = vld [vmem:[%s365 + $0x4] sm:$0xf]
      %v415 = vld [vmem:[%s365 + $0x8] sm:$0xf]
      %v416 = vld [vmem:[%s365 + $0xc] sm:$0xf]
      %417 = vst [vmem:[#allocation2 + $0x8] sm:$0xf] %v413
      %418 = vst [vmem:[#allocation2 + $0xc] sm:$0xf] %v414
      %419 = vst [vmem:[#allocation2 + $0x10] sm:$0xf] %v415
      %420 = vst [vmem:[#allocation2 + $0x14] sm:$0xf] %v416
      %v421 = vld [vmem:[%s394] sm:$0xf]
      %422 = vst [vmem:[#allocation2 + $0x18] sm:$0xf] %v421
      %423 = vst [vmem:[#allocation2 + $0x1c] sm:$0xf] 0
      %p424 = scmp.eq.s32.totalorder %s22, 0
      // Predicated region
      $region45: #{vqvae_encoder_forward.8} parent=43 // pred_check
        %p425 = pneg %p424
      $region46: #{vqvae_encoder_forward.8} parent=43 // pred_check_branch
        %427 = sbr.rel (%p425) target = $region48
      $region47: #{vqvae_encoder_forward.8} parent=43 // pred_region
        %428 = vst [vmem:[#allocation2 + $0x4] sm:$0xf] 0
        %429 = vst [vmem:[#allocation2 + $0x18] sm:$0xf] 0
      $region48: #{vqvae_encoder_forward.8} parent=43 // pred_fallthru
        _
      %v430 = vld [vmem:[#allocation2] sm:$0x8]
      %v431 = vld [vmem:[#allocation2 + $0x4] sm:$0xf]
      %v432 = vld [vmem:[#allocation2 + $0x8] sm:$0xf]
      %v433 = vld [vmem:[#allocation2 + $0xc] sm:$0xf]
      %v434 = vld [vmem:[#allocation2 + $0x10] sm:$0xf]
      %vm435 = vsmask.f32 256
      %vm436 = vsmask.f32 4368
      %vm437 = vmor %vm435, %vm436
      %v439 = vshrl.u32 %v430, 16
      %v441 = vrot.slane %v439, 7
      %v442 = vrot.slane %v441, 4
      %v444 = vshrl.u32 %v431, 16
      %v446 = vrot.slane %v444, 7
      %v447 = vshll.u32 %v431, 16
      %v449 = vor.u32 %v446, %v447
      %v450 = vsel %vm437, %v442, %v449
      %v451 = vrot.slane %v446, 4
      %v453 = vshrl.u32 %v432, 16
      %v455 = vrot.slane %v453, 7
      %v456 = vshll.u32 %v432, 16
      %v458 = vor.u32 %v455, %v456
      %v459 = vsel %vm437, %v451, %v458
      %v460 = vrot.slane %v455, 4
      %v462 = vshrl.u32 %v433, 16
      %v464 = vrot.slane %v462, 7
      %v465 = vshll.u32 %v433, 16
      %v467 = vor.u32 %v464, %v465
      %v468 = vsel %vm437, %v460, %v467
      %v469 = vrot.slane %v464, 4
      %v471 = vshrl.u32 %v434, 16
      %v473 = vrot.slane %v471, 7
      %v474 = vshll.u32 %v434, 16
      %v476 = vor.u32 %v473, %v474
      %v477 = vsel %vm437, %v469, %v476
      %482 = vst [vmem:[#allocation3] sm:$0xf] %v450
      %483 = vst [vmem:[#allocation3 + $0x24] sm:$0xf] %v459
      %484 = vst [vmem:[#allocation3 + $0x48] sm:$0xf] %v468
      %485 = vst [vmem:[#allocation3 + $0x6c] sm:$0xf] %v477
      %v486 = vld [vmem:[#allocation2 + $0x4] sm:$0xf]
      %v487 = vld [vmem:[#allocation2 + $0x8] sm:$0xf]
      %v488 = vld [vmem:[#allocation2 + $0xc] sm:$0xf]
      %v489 = vld [vmem:[#allocation2 + $0x10] sm:$0xf]
      %490 = vst [vmem:[#allocation3 + $0x4] sm:$0xf] %v486
      %491 = vst [vmem:[#allocation3 + $0x28] sm:$0xf] %v487
      %492 = vst [vmem:[#allocation3 + $0x4c] sm:$0xf] %v488
      %493 = vst [vmem:[#allocation3 + $0x70] sm:$0xf] %v489
      %v494 = vld [vmem:[#allocation2 + $0x4] sm:$0xf]
      %v495 = vld [vmem:[#allocation2 + $0x8] sm:$0xf]
      %v496 = vld [vmem:[#allocation2 + $0xc] sm:$0xf]
      %v497 = vld [vmem:[#allocation2 + $0x10] sm:$0xf]
      %v498 = vld [vmem:[#allocation2 + $0x14] sm:$0x1]
      %vm499 = vsmask.f32 3328
      %vm500 = vsmask.f32 7440
      %vm501 = vmor %vm499, %vm500
      %v503 = vshrl.u32 %v494, 16
      %v505 = vrot.slane %v503, 4
      %v506 = vshll.u32 %v494, 16
      %v508 = vrot.slane %v506, 5
      %v509 = vor.u32 %v505, %v508
      %v510 = vrot.slane %v509, 4
      %v512 = vshll.u32 %v495, 16
      %v514 = vrot.slane %v512, 5
      %v515 = vsel %vm501, %v510, %v514
      %v516 = vshrl.u32 %v495, 16
      %v518 = vrot.slane %v516, 4
      %v519 = vor.u32 %v518, %v514
      %v520 = vrot.slane %v519, 4
      %v522 = vshll.u32 %v496, 16
      %v524 = vrot.slane %v522, 5
      %v525 = vsel %vm501, %v520, %v524
      %v526 = vshrl.u32 %v496, 16
      %v528 = vrot.slane %v526, 4
      %v529 = vor.u32 %v528, %v524
      %v530 = vrot.slane %v529, 4
      %v532 = vshll.u32 %v497, 16
      %v534 = vrot.slane %v532, 5
      %v535 = vsel %vm501, %v530, %v534
      %v536 = vshrl.u32 %v497, 16
      %v538 = vrot.slane %v536, 4
      %v539 = vor.u32 %v538, %v534
      %v540 = vrot.slane %v539, 4
      %v542 = vshll.u32 %v498, 16
      %v544 = vrot.slane %v542, 5
      %v545 = vsel %vm501, %v540, %v544
      %550 = vst [vmem:[#allocation3 + $0x8] sm:$0xf] %v515
      %551 = vst [vmem:[#allocation3 + $0x2c] sm:$0xf] %v525
      %552 = vst [vmem:[#allocation3 + $0x50] sm:$0xf] %v535
      %553 = vst [vmem:[#allocation3 + $0x74] sm:$0xf] %v545
      %v554 = vld [vmem:[#allocation2 + $0x4] sm:$0x8]
      %v555 = vld [vmem:[#allocation2 + $0x8] sm:$0xf]
      %v556 = vld [vmem:[#allocation2 + $0xc] sm:$0xf]
      %v557 = vld [vmem:[#allocation2 + $0x10] sm:$0xf]
      %v558 = vld [vmem:[#allocation2 + $0x14] sm:$0xf]
      %v560 = vshrl.u32 %v554, 16
      %v562 = vrot.slane %v560, 7
      %v563 = vrot.slane %v562, 4
      %v565 = vshrl.u32 %v555, 16
      %v567 = vrot.slane %v565, 7
      %v568 = vshll.u32 %v555, 16
      %v570 = vor.u32 %v567, %v568
      %v571 = vsel %vm437, %v563, %v570
      %v572 = vrot.slane %v567, 4
      %v574 = vshrl.u32 %v556, 16
      %v576 = vrot.slane %v574, 7
      %v577 = vshll.u32 %v556, 16
      %v579 = vor.u32 %v576, %v577
      %v580 = vsel %vm437, %v572, %v579
      %v581 = vrot.slane %v576, 4
      %v583 = vshrl.u32 %v557, 16
      %v585 = vrot.slane %v583, 7
      %v586 = vshll.u32 %v557, 16
      %v588 = vor.u32 %v585, %v586
      %v589 = vsel %vm437, %v581, %v588
      %v590 = vrot.slane %v585, 4
      %v592 = vshrl.u32 %v558, 16
      %v594 = vrot.slane %v592, 7
      %v595 = vshll.u32 %v558, 16
      %v597 = vor.u32 %v594, %v595
      %v598 = vsel %vm437, %v590, %v597
      %603 = vst [vmem:[#allocation3 + $0xc] sm:$0xf] %v571
      %604 = vst [vmem:[#allocation3 + $0x30] sm:$0xf] %v580
      %605 = vst [vmem:[#allocation3 + $0x54] sm:$0xf] %v589
      %606 = vst [vmem:[#allocation3 + $0x78] sm:$0xf] %v598
      %v607 = vld [vmem:[#allocation2 + $0x8] sm:$0xf]
      %v608 = vld [vmem:[#allocation2 + $0xc] sm:$0xf]
      %v609 = vld [vmem:[#allocation2 + $0x10] sm:$0xf]
      %v610 = vld [vmem:[#allocation2 + $0x14] sm:$0xf]
      %611 = vst [vmem:[#allocation3 + $0x10] sm:$0xf] %v607
      %612 = vst [vmem:[#allocation3 + $0x34] sm:$0xf] %v608
      %613 = vst [vmem:[#allocation3 + $0x58] sm:$0xf] %v609
      %614 = vst [vmem:[#allocation3 + $0x7c] sm:$0xf] %v610
      %v615 = vld [vmem:[#allocation2 + $0x8] sm:$0xf]
      %v616 = vld [vmem:[#allocation2 + $0xc] sm:$0xf]
      %v617 = vld [vmem:[#allocation2 + $0x10] sm:$0xf]
      %v618 = vld [vmem:[#allocation2 + $0x14] sm:$0xf]
      %v619 = vld [vmem:[#allocation2 + $0x18] sm:$0x1]
      %v621 = vshrl.u32 %v615, 16
      %v623 = vrot.slane %v621, 4
      %v624 = vshll.u32 %v615, 16
      %v626 = vrot.slane %v624, 5
      %v627 = vor.u32 %v623, %v626
      %v628 = vrot.slane %v627, 4
      %v630 = vshll.u32 %v616, 16
      %v632 = vrot.slane %v630, 5
      %v633 = vsel %vm501, %v628, %v632
      %v634 = vshrl.u32 %v616, 16
      %v636 = vrot.slane %v634, 4
      %v637 = vor.u32 %v636, %v632
      %v638 = vrot.slane %v637, 4
      %v640 = vshll.u32 %v617, 16
      %v642 = vrot.slane %v640, 5
      %v643 = vsel %vm501, %v638, %v642
      %v644 = vshrl.u32 %v617, 16
      %v646 = vrot.slane %v644, 4
      %v647 = vor.u32 %v646, %v642
      %v648 = vrot.slane %v647, 4
      %v650 = vshll.u32 %v618, 16
      %v652 = vrot.slane %v650, 5
      %v653 = vsel %vm501, %v648, %v652
      %v654 = vshrl.u32 %v618, 16
      %v656 = vrot.slane %v654, 4
      %v657 = vor.u32 %v656, %v652
      %v658 = vrot.slane %v657, 4
      %v660 = vshll.u32 %v619, 16
      %v662 = vrot.slane %v660, 5
      %v663 = vsel %vm501, %v658, %v662
      %668 = vst [vmem:[#allocation3 + $0x14] sm:$0xf] %v633
      %669 = vst [vmem:[#allocation3 + $0x38] sm:$0xf] %v643
      %670 = vst [vmem:[#allocation3 + $0x5c] sm:$0xf] %v653
      %671 = vst [vmem:[#allocation3 + $0x80] sm:$0xf] %v663
      %v672 = vld [vmem:[#allocation2 + $0x8] sm:$0x8]
      %v673 = vld [vmem:[#allocation2 + $0xc] sm:$0xf]
      %v674 = vld [vmem:[#allocation2 + $0x10] sm:$0xf]
      %v675 = vld [vmem:[#allocation2 + $0x14] sm:$0xf]
      %v676 = vld [vmem:[#allocation2 + $0x18] sm:$0xf]
      %v678 = vshrl.u32 %v672, 16
      %v680 = vrot.slane %v678, 7
      %v681 = vrot.slane %v680, 4
      %v683 = vshrl.u32 %v673, 16
      %v685 = vrot.slane %v683, 7
      %v686 = vshll.u32 %v673, 16
      %v688 = vor.u32 %v685, %v686
      %v689 = vsel %vm437, %v681, %v688
      %v690 = vrot.slane %v685, 4
      %v692 = vshrl.u32 %v674, 16
      %v694 = vrot.slane %v692, 7
      %v695 = vshll.u32 %v674, 16
      %v697 = vor.u32 %v694, %v695
      %v698 = vsel %vm437, %v690, %v697
      %v699 = vrot.slane %v694, 4
      %v701 = vshrl.u32 %v675, 16
      %v703 = vrot.slane %v701, 7
      %v704 = vshll.u32 %v675, 16
      %v706 = vor.u32 %v703, %v704
      %v707 = vsel %vm437, %v699, %v706
      %v708 = vrot.slane %v703, 4
      %v710 = vshrl.u32 %v676, 16
      %v712 = vrot.slane %v710, 7
      %v713 = vshll.u32 %v676, 16
      %v715 = vor.u32 %v712, %v713
      %v716 = vsel %vm437, %v708, %v715
      %721 = vst [vmem:[#allocation3 + $0x18] sm:$0xf] %v689
      %722 = vst [vmem:[#allocation3 + $0x3c] sm:$0xf] %v698
      %723 = vst [vmem:[#allocation3 + $0x60] sm:$0xf] %v707
      %724 = vst [vmem:[#allocation3 + $0x84] sm:$0xf] %v716
      %v725 = vld [vmem:[#allocation2 + $0xc] sm:$0xf]
      %v726 = vld [vmem:[#allocation2 + $0x10] sm:$0xf]
      %v727 = vld [vmem:[#allocation2 + $0x14] sm:$0xf]
      %v728 = vld [vmem:[#allocation2 + $0x18] sm:$0xf]
      %729 = vst [vmem:[#allocation3 + $0x1c] sm:$0xf] %v725
      %730 = vst [vmem:[#allocation3 + $0x40] sm:$0xf] %v726
      %731 = vst [vmem:[#allocation3 + $0x64] sm:$0xf] %v727
      %732 = vst [vmem:[#allocation3 + $0x88] sm:$0xf] %v728
      %v733 = vld [vmem:[#allocation2 + $0xc] sm:$0xf]
      %v734 = vld [vmem:[#allocation2 + $0x10] sm:$0xf]
      %v735 = vld [vmem:[#allocation2 + $0x14] sm:$0xf]
      %v736 = vld [vmem:[#allocation2 + $0x18] sm:$0xf]
      %v737 = vld [vmem:[#allocation2 + $0x1c] sm:$0x1]
      %v739 = vshrl.u32 %v733, 16
      %v741 = vrot.slane %v739, 4
      %v742 = vshll.u32 %v733, 16
      %v744 = vrot.slane %v742, 5
      %v745 = vor.u32 %v741, %v744
      %v746 = vrot.slane %v745, 4
      %v748 = vshll.u32 %v734, 16
      %v750 = vrot.slane %v748, 5
      %v751 = vsel %vm501, %v746, %v750
      %v752 = vshrl.u32 %v734, 16
      %v754 = vrot.slane %v752, 4
      %v755 = vor.u32 %v754, %v750
      %v756 = vrot.slane %v755, 4
      %v758 = vshll.u32 %v735, 16
      %v760 = vrot.slane %v758, 5
      %v761 = vsel %vm501, %v756, %v760
      %v762 = vshrl.u32 %v735, 16
      %v764 = vrot.slane %v762, 4
      %v765 = vor.u32 %v764, %v760
      %v766 = vrot.slane %v765, 4
      %v768 = vshll.u32 %v736, 16
      %v770 = vrot.slane %v768, 5
      %v771 = vsel %vm501, %v766, %v770
      %v772 = vshrl.u32 %v736, 16
      %v774 = vrot.slane %v772, 4
      %v775 = vor.u32 %v774, %v770
      %v776 = vrot.slane %v775, 4
      %v778 = vshll.u32 %v737, 16
      %v780 = vrot.slane %v778, 5
      %v781 = vsel %vm501, %v776, %v780
      %786 = vst [vmem:[#allocation3 + $0x20] sm:$0xf] %v751
      %787 = vst [vmem:[#allocation3 + $0x44] sm:$0xf] %v761
      %788 = vst [vmem:[#allocation3 + $0x68] sm:$0xf] %v771
      %789 = vst [vmem:[#allocation3 + $0x8c] sm:$0xf] %v781
      %v790 = vld [vmem:[#allocation3] sm:$0xff]
      %v791 = vld [vmem:[#allocation3 + $0x8] sm:$0xff]
      %v792 = vld [vmem:[#allocation3 + $0x10] sm:$0xff]
      %v793 = vld [vmem:[#allocation3 + $0x18] sm:$0xff]
      %v794 = vld [vmem:[#allocation3 + $0x20] sm:$0xf]
      %v795 = vld [vmem:[#allocation3 + $0x24] sm:$0xff]
      %v796 = vld [vmem:[#allocation3 + $0x2c] sm:$0xff]
      %v797 = vld [vmem:[#allocation3 + $0x34] sm:$0xff]
      %v798 = vld [vmem:[#allocation3 + $0x3c] sm:$0xff]
      %v799 = vld [vmem:[#allocation3 + $0x44] sm:$0xf]
      %v800 = vld [vmem:[#allocation3 + $0x48] sm:$0xff]
      %v801 = vld [vmem:[#allocation3 + $0x50] sm:$0xff]
      %v802 = vld [vmem:[#allocation3 + $0x58] sm:$0xff]
      %v803 = vld [vmem:[#allocation3 + $0x60] sm:$0xff]
      %v804 = vld [vmem:[#allocation3 + $0x68] sm:$0xf]
      %v805 = vld [vmem:[#allocation3 + $0x6c] sm:$0xff]
      %v806 = vld [vmem:[#allocation3 + $0x74] sm:$0xff]
      %v807 = vld [vmem:[#allocation3 + $0x7c] sm:$0xff]
      %v808 = vld [vmem:[#allocation3 + $0x84] sm:$0xff]
      %v809 = vld [vmem:[#allocation3 + $0x8c] sm:$0xf]
      %v810 = vld [vmem:[%s4] sm:$0xf]
      %v811 = vld [vmem:[%s4 + $0x4] sm:$0xf]
      %v812 = vld [vmem:[%s4 + $0x8] sm:$0xf]
      %v813 = vld [vmem:[%s4 + $0xc] sm:$0xf]
      %v814 = vld [vmem:[%s4 + $0x10] sm:$0xf]
      %v815 = vld [vmem:[%s4 + $0x14] sm:$0xf]
      %v816 = vld [vmem:[%s4 + $0x18] sm:$0xf]
      %v817 = vld [vmem:[%s4 + $0x1c] sm:$0xf]
      %v818 = vld [vmem:[%s4 + $0x20] sm:$0xf]
      %v819 = vld [vmem:[%s4 + $0x24] sm:$0xf]
      %v820 = vld [vmem:[%s4 + $0x28] sm:$0xf]
      %v821 = vld [vmem:[%s4 + $0x2c] sm:$0xf]
      %v822 = vld [vmem:[%s4 + $0x30] sm:$0xf]
      %v823 = vld [vmem:[%s4 + $0x34] sm:$0xf]
      %v824 = vld [vmem:[%s4 + $0x38] sm:$0xf]
      %v825 = vld [vmem:[%s4 + $0x3c] sm:$0xf]
      %v826 = vld [vmem:[%s4 + $0x40] sm:$0xf]
      %v827 = vld [vmem:[%s4 + $0x44] sm:$0xf]
      %v828 = vld [vmem:[%s4 + $0x48] sm:$0xf]
      %v829 = vld [vmem:[%s4 + $0x4c] sm:$0xf]
      %v830 = vld [vmem:[%s4 + $0x50] sm:$0xf]
      %v831 = vld [vmem:[%s4 + $0x54] sm:$0xf]
      %v832 = vld [vmem:[%s4 + $0x58] sm:$0xf]
      %v833 = vld [vmem:[%s4 + $0x5c] sm:$0xf]
      %v834 = vld [vmem:[%s4 + $0x60] sm:$0xf]
      %v835 = vld [vmem:[%s4 + $0x64] sm:$0xf]
      %v836 = vld [vmem:[%s4 + $0x68] sm:$0xf]
      %v837 = vld [vmem:[%s4 + $0x6c] sm:$0xf]
      %v838 = vld [vmem:[%s4 + $0x70] sm:$0xf]
      %v839 = vld [vmem:[%s4 + $0x74] sm:$0xf]
      %v840 = vld [vmem:[%s4 + $0x78] sm:$0xf]
      %v841 = vld [vmem:[%s4 + $0x7c] sm:$0xf]
      %v842 = vld [vmem:[%s4 + $0x80] sm:$0xf]
      %v843 = vld [vmem:[%s4 + $0x84] sm:$0xf]
      %v844 = vld [vmem:[%s4 + $0x88] sm:$0xf]
      %v845 = vld [vmem:[%s4 + $0x8c] sm:$0xf]
      %v846 = vld [vmem:[%s4 + $0x90] sm:$0xf]
      %v847 = vld [vmem:[%s4 + $0x94] sm:$0xf]
      %v848 = vld [vmem:[%s4 + $0x98] sm:$0xf]
      %v849 = vld [vmem:[%s4 + $0x9c] sm:$0xf]
      %v850 = vld [vmem:[%s4 + $0xa0] sm:$0xf]
      %v851 = vld [vmem:[%s4 + $0xa4] sm:$0xf]
      %v852 = vld [vmem:[%s4 + $0xa8] sm:$0xf]
      %v853 = vld [vmem:[%s4 + $0xac] sm:$0xf]
      %v854 = vld [vmem:[%s4 + $0xb0] sm:$0xf]
      %v855 = vld [vmem:[%s4 + $0xb4] sm:$0xf]
      %v856 = vld [vmem:[%s4 + $0xb8] sm:$0xf]
      %v857 = vld [vmem:[%s4 + $0xbc] sm:$0xf]
      %v858 = vld [vmem:[%s4 + $0xc0] sm:$0xf]
      %v859 = vld [vmem:[%s4 + $0xc4] sm:$0xf]
      %v860 = vld [vmem:[%s4 + $0xc8] sm:$0xf]
      %v861 = vld [vmem:[%s4 + $0xcc] sm:$0xf]
      %v862 = vld [vmem:[%s4 + $0xd0] sm:$0xf]
      %v863 = vld [vmem:[%s4 + $0xd4] sm:$0xf]
      %v864 = vld [vmem:[%s4 + $0xd8] sm:$0xf]
      %v865 = vld [vmem:[%s4 + $0xdc] sm:$0xf]
      %v866 = vld [vmem:[%s4 + $0xe0] sm:$0xf]
      %v867 = vld [vmem:[%s4 + $0xe4] sm:$0xf]
      %v868 = vld [vmem:[%s4 + $0xe8] sm:$0xf]
      %v869 = vld [vmem:[%s4 + $0xec] sm:$0xf]
      %v870 = vld [vmem:[%s4 + $0xf0] sm:$0xf]
      %v871 = vld [vmem:[%s4 + $0xf4] sm:$0xf]
      %v872 = vld [vmem:[%s4 + $0xf8] sm:$0xf]
      %v873 = vld [vmem:[%s4 + $0xfc] sm:$0xf]
      %v874 = vld [vmem:[%s4 + $0x100] sm:$0xf]
      %v875 = vld [vmem:[%s4 + $0x104] sm:$0xf]
      %v876 = vld [vmem:[%s4 + $0x108] sm:$0xf]
      %v877 = vld [vmem:[%s4 + $0x10c] sm:$0xf]
      %v878 = vld [vmem:[%s4 + $0x110] sm:$0xf]
      %v879 = vld [vmem:[%s4 + $0x114] sm:$0xf]
      %v880 = vld [vmem:[%s4 + $0x118] sm:$0xf]
      %v881 = vld [vmem:[%s4 + $0x11c] sm:$0xf]
      %v882 = vld [vmem:[%s4 + $0x120] sm:$0xf]
      %v883 = vld [vmem:[%s4 + $0x124] sm:$0xf]
      %v884 = vld [vmem:[%s4 + $0x128] sm:$0xf]
      %v885 = vld [vmem:[%s4 + $0x12c] sm:$0xf]
      %v886 = vld [vmem:[%s4 + $0x130] sm:$0xf]
      %v887 = vld [vmem:[%s4 + $0x134] sm:$0xf]
      %v888 = vld [vmem:[%s4 + $0x138] sm:$0xf]
      %v889 = vld [vmem:[%s4 + $0x13c] sm:$0xf]
      %v890 = vld [vmem:[%s4 + $0x140] sm:$0xf]
      %v891 = vld [vmem:[%s4 + $0x144] sm:$0xf]
      %v892 = vld [vmem:[%s4 + $0x148] sm:$0xf]
      %v893 = vld [vmem:[%s4 + $0x14c] sm:$0xf]
      %v894 = vld [vmem:[%s4 + $0x150] sm:$0xf]
      %v895 = vld [vmem:[%s4 + $0x154] sm:$0xf]
      %v896 = vld [vmem:[%s4 + $0x158] sm:$0xf]
      %v897 = vld [vmem:[%s4 + $0x15c] sm:$0xf]
      %v898 = vld [vmem:[%s4 + $0x160] sm:$0xf]
      %v899 = vld [vmem:[%s4 + $0x164] sm:$0xf]
      %v900 = vld [vmem:[%s4 + $0x168] sm:$0xf]
      %v901 = vld [vmem:[%s4 + $0x16c] sm:$0xf]
      %v902 = vld [vmem:[%s4 + $0x170] sm:$0xf]
      %v903 = vld [vmem:[%s4 + $0x174] sm:$0xf]
      %v904 = vld [vmem:[%s4 + $0x178] sm:$0xf]
      %v905 = vld [vmem:[%s4 + $0x17c] sm:$0xf]
      %v906 = vld [vmem:[%s4 + $0x180] sm:$0xf]
      %v907 = vld [vmem:[%s4 + $0x184] sm:$0xf]
      %v908 = vld [vmem:[%s4 + $0x188] sm:$0xf]
      %v909 = vld [vmem:[%s4 + $0x18c] sm:$0xf]
      %v910 = vld [vmem:[%s4 + $0x190] sm:$0xf]
      %v911 = vld [vmem:[%s4 + $0x194] sm:$0xf]
      %v912 = vld [vmem:[%s4 + $0x198] sm:$0xf]
      %v913 = vld [vmem:[%s4 + $0x19c] sm:$0xf]
      %v914 = vld [vmem:[%s4 + $0x1a0] sm:$0xf]
      %v915 = vld [vmem:[%s4 + $0x1a4] sm:$0xf]
      %v916 = vld [vmem:[%s4 + $0x1a8] sm:$0xf]
      %v917 = vld [vmem:[%s4 + $0x1ac] sm:$0xf]
      %v918 = vld [vmem:[%s4 + $0x1b0] sm:$0xf]
      %v919 = vld [vmem:[%s4 + $0x1b4] sm:$0xf]
      %v920 = vld [vmem:[%s4 + $0x1b8] sm:$0xf]
      %v921 = vld [vmem:[%s4 + $0x1bc] sm:$0xf]
      %v922 = vld [vmem:[%s4 + $0x1c0] sm:$0xf]
      %v923 = vld [vmem:[%s4 + $0x1c4] sm:$0xf]
      %v924 = vld [vmem:[%s4 + $0x1c8] sm:$0xf]
      %v925 = vld [vmem:[%s4 + $0x1cc] sm:$0xf]
      %v926 = vld [vmem:[%s4 + $0x1d0] sm:$0xf]
      %v927 = vld [vmem:[%s4 + $0x1d4] sm:$0xf]
      %v928 = vld [vmem:[%s4 + $0x1d8] sm:$0xf]
      %v929 = vld [vmem:[%s4 + $0x1dc] sm:$0xf]
      %v930 = vld [vmem:[%s4 + $0x1e0] sm:$0xf]
      %v931 = vld [vmem:[%s4 + $0x1e4] sm:$0xf]
      %v932 = vld [vmem:[%s4 + $0x1e8] sm:$0xf]
      %v933 = vld [vmem:[%s4 + $0x1ec] sm:$0xf]
      %v934 = vld [vmem:[%s4 + $0x1f0] sm:$0xf]
      %v935 = vld [vmem:[%s4 + $0x1f4] sm:$0xf]
      %v936 = vld [vmem:[%s4 + $0x1f8] sm:$0xf]
      %v937 = vld [vmem:[%s4 + $0x1fc] sm:$0xf]
      %v938 = vld [vmem:[%s4 + $0x200] sm:$0xf]
      %v939 = vld [vmem:[%s4 + $0x204] sm:$0xf]
      %v940 = vld [vmem:[%s4 + $0x208] sm:$0xf]
      %v941 = vld [vmem:[%s4 + $0x20c] sm:$0xf]
      %v942 = vld [vmem:[%s4 + $0x210] sm:$0xf]
      %v943 = vld [vmem:[%s4 + $0x214] sm:$0xf]
      %v944 = vld [vmem:[%s4 + $0x218] sm:$0xf]
      %v945 = vld [vmem:[%s4 + $0x21c] sm:$0xf]
      %v946 = vld [vmem:[%s4 + $0x220] sm:$0xf]
      %v947 = vld [vmem:[%s4 + $0x224] sm:$0xf]
      %v948 = vld [vmem:[%s4 + $0x228] sm:$0xf]
      %v949 = vld [vmem:[%s4 + $0x22c] sm:$0xf]
      %v950 = vld [vmem:[%s4 + $0x230] sm:$0xf]
      %v951 = vld [vmem:[%s4 + $0x234] sm:$0xf]
      %v952 = vld [vmem:[%s4 + $0x238] sm:$0xf]
      %v953 = vld [vmem:[%s4 + $0x23c] sm:$0xf]
      %v954 = vld [vmem:[%s5] sm:$0x1]
      %v956 = vlaneseq
      %v957 = vshrl.u32 %v956, 7
      %v958 = vsub.s32 0, %v957
      %v959 = vrot.slane %v954, %v958
      %v981 = vunpack.c.l.b16 %v790
      %v982 = vunpack.c.h.b16 %v790
      %v983 = vunpack.c.l.b16 %v791
      %v984 = vunpack.c.h.b16 %v791
      %v985 = vunpack.c.l.b16 %v792
      %v986 = vunpack.c.h.b16 %v792
      %v987 = vunpack.c.l.b16 %v793
      %v988 = vunpack.c.h.b16 %v793
      %v989 = vunpack.c.l.b16 %v794
      %v990 = vunpack.c.l.b16 %v795
      %v991 = vunpack.c.h.b16 %v795
      %v992 = vunpack.c.l.b16 %v796
      %v993 = vunpack.c.h.b16 %v796
      %v994 = vunpack.c.l.b16 %v797
      %v995 = vunpack.c.h.b16 %v797
      %v996 = vunpack.c.l.b16 %v798
      %v997 = vunpack.c.h.b16 %v798
      %v998 = vunpack.c.l.b16 %v799
      %v999 = vunpack.c.l.b16 %v800
      %v1000 = vunpack.c.h.b16 %v800
      %v1001 = vunpack.c.l.b16 %v801
      %v1002 = vunpack.c.h.b16 %v801
      %v1003 = vunpack.c.l.b16 %v802
      %v1004 = vunpack.c.h.b16 %v802
      %v1005 = vunpack.c.l.b16 %v803
      %v1006 = vunpack.c.h.b16 %v803
      %v1007 = vunpack.c.l.b16 %v804
      %v1008 = vunpack.c.l.b16 %v805
      %v1009 = vunpack.c.h.b16 %v805
      %v1010 = vunpack.c.l.b16 %v806
      %v1011 = vunpack.c.h.b16 %v806
      %v1012 = vunpack.c.l.b16 %v807
      %v1013 = vunpack.c.h.b16 %v807
      %v1014 = vunpack.c.l.b16 %v808
      %v1015 = vunpack.c.h.b16 %v808
      %v1016 = vunpack.c.l.b16 %v809
      %v1017 = vpack.c.b16 %v990, %v981
      %v1018 = vpack.c.b16 %v991, %v982
      %v1019 = vpack.c.b16 %v992, %v983
      %v1020 = vpack.c.b16 %v993, %v984
      %v1021 = vpack.c.b16 %v994, %v985
      %v1022 = vpack.c.b16 %v995, %v986
      %v1023 = vpack.c.b16 %v996, %v987
      %v1024 = vpack.c.b16 %v997, %v988
      %v1025 = vpack.c.b16 %v998, %v989
      %v1026 = vpack.c.b16 %v1008, %v999
      %v1027 = vpack.c.b16 %v1009, %v1000
      %v1028 = vpack.c.b16 %v1010, %v1001
      %v1029 = vpack.c.b16 %v1011, %v1002
      %v1030 = vpack.c.b16 %v1012, %v1003
      %v1031 = vpack.c.b16 %v1013, %v1004
      %v1032 = vpack.c.b16 %v1014, %v1005
      %v1033 = vpack.c.b16 %v1015, %v1006
      %v1034 = vpack.c.b16 %v1016, %v1007
      %v1197 = vunpack.c.l.b16 %v810
      %v1198 = vunpack.c.l.b16 %v811
      %v1199 = vunpack.c.l.b16 %v812
      %v1200 = vunpack.c.l.b16 %v813
      %v1201 = vunpack.c.l.b16 %v814
      %v1202 = vunpack.c.l.b16 %v815
      %v1203 = vunpack.c.l.b16 %v816
      %v1204 = vunpack.c.l.b16 %v817
      %v1205 = vunpack.c.l.b16 %v818
      %v1206 = vunpack.c.l.b16 %v819
      %v1207 = vunpack.c.l.b16 %v820
      %v1208 = vunpack.c.l.b16 %v821
      %v1209 = vunpack.c.l.b16 %v822
      %v1210 = vunpack.c.l.b16 %v823
      %v1211 = vunpack.c.l.b16 %v824
      %v1212 = vunpack.c.l.b16 %v825
      %v1213 = vunpack.c.l.b16 %v826
      %v1214 = vunpack.c.l.b16 %v827
      %v1215 = vunpack.c.l.b16 %v828
      %v1216 = vunpack.c.l.b16 %v829
      %v1217 = vunpack.c.l.b16 %v830
      %v1218 = vunpack.c.l.b16 %v831
      %v1219 = vunpack.c.l.b16 %v832
      %v1220 = vunpack.c.l.b16 %v833
      %v1221 = vunpack.c.l.b16 %v834
      %v1222 = vunpack.c.l.b16 %v835
      %v1223 = vunpack.c.l.b16 %v836
      %v1224 = vunpack.c.l.b16 %v837
      %v1225 = vunpack.c.l.b16 %v838
      %v1226 = vunpack.c.l.b16 %v839
      %v1227 = vunpack.c.l.b16 %v840
      %v1228 = vunpack.c.l.b16 %v841
      %v1229 = vunpack.c.l.b16 %v842
      %v1230 = vunpack.c.l.b16 %v843
      %v1231 = vunpack.c.l.b16 %v844
      %v1232 = vunpack.c.l.b16 %v845
      %v1233 = vunpack.c.l.b16 %v846
      %v1234 = vunpack.c.l.b16 %v847
      %v1235 = vunpack.c.l.b16 %v848
      %v1236 = vunpack.c.l.b16 %v849
      %v1237 = vunpack.c.l.b16 %v850
      %v1238 = vunpack.c.l.b16 %v851
      %v1239 = vunpack.c.l.b16 %v852
      %v1240 = vunpack.c.l.b16 %v853
      %v1241 = vunpack.c.l.b16 %v854
      %v1242 = vunpack.c.l.b16 %v855
      %v1243 = vunpack.c.l.b16 %v856
      %v1244 = vunpack.c.l.b16 %v857
      %v1245 = vunpack.c.l.b16 %v858
      %v1246 = vunpack.c.l.b16 %v859
      %v1247 = vunpack.c.l.b16 %v860
      %v1248 = vunpack.c.l.b16 %v861
      %v1249 = vunpack.c.l.b16 %v862
      %v1250 = vunpack.c.l.b16 %v863
      %v1251 = vunpack.c.l.b16 %v864
      %v1252 = vunpack.c.l.b16 %v865
      %v1253 = vunpack.c.l.b16 %v866
      %v1254 = vunpack.c.l.b16 %v867
      %v1255 = vunpack.c.l.b16 %v868
      %v1256 = vunpack.c.l.b16 %v869
      %v1257 = vunpack.c.l.b16 %v870
      %v1258 = vunpack.c.l.b16 %v871
      %v1259 = vunpack.c.l.b16 %v872
      %v1260 = vunpack.c.l.b16 %v873
      %v1261 = vunpack.c.l.b16 %v874
      %v1262 = vunpack.c.l.b16 %v875
      %v1263 = vunpack.c.l.b16 %v876
      %v1264 = vunpack.c.l.b16 %v877
      %v1265 = vunpack.c.l.b16 %v878
      %v1266 = vunpack.c.l.b16 %v879
      %v1267 = vunpack.c.l.b16 %v880
      %v1268 = vunpack.c.l.b16 %v881
      %v1269 = vunpack.c.l.b16 %v882
      %v1270 = vunpack.c.l.b16 %v883
      %v1271 = vunpack.c.l.b16 %v884
      %v1272 = vunpack.c.l.b16 %v885
      %v1273 = vunpack.c.l.b16 %v886
      %v1274 = vunpack.c.l.b16 %v887
      %v1275 = vunpack.c.l.b16 %v888
      %v1276 = vunpack.c.l.b16 %v889
      %v1277 = vunpack.c.l.b16 %v890
      %v1278 = vunpack.c.l.b16 %v891
      %v1279 = vunpack.c.l.b16 %v892
      %v1280 = vunpack.c.l.b16 %v893
      %v1281 = vunpack.c.l.b16 %v894
      %v1282 = vunpack.c.l.b16 %v895
      %v1283 = vunpack.c.l.b16 %v896
      %v1284 = vunpack.c.l.b16 %v897
      %v1285 = vunpack.c.l.b16 %v898
      %v1286 = vunpack.c.l.b16 %v899
      %v1287 = vunpack.c.l.b16 %v900
      %v1288 = vunpack.c.l.b16 %v901
      %v1289 = vunpack.c.l.b16 %v902
      %v1290 = vunpack.c.l.b16 %v903
      %v1291 = vunpack.c.l.b16 %v904
      %v1292 = vunpack.c.l.b16 %v905
      %v1293 = vunpack.c.l.b16 %v906
      %v1294 = vunpack.c.l.b16 %v907
      %v1295 = vunpack.c.l.b16 %v908
      %v1296 = vunpack.c.l.b16 %v909
      %v1297 = vunpack.c.l.b16 %v910
      %v1298 = vunpack.c.l.b16 %v911
      %v1299 = vunpack.c.l.b16 %v912
      %v1300 = vunpack.c.l.b16 %v913
      %v1301 = vunpack.c.l.b16 %v914
      %v1302 = vunpack.c.l.b16 %v915
      %v1303 = vunpack.c.l.b16 %v916
      %v1304 = vunpack.c.l.b16 %v917
      %v1305 = vunpack.c.l.b16 %v918
      %v1306 = vunpack.c.l.b16 %v919
      %v1307 = vunpack.c.l.b16 %v920
      %v1308 = vunpack.c.l.b16 %v921
      %v1309 = vunpack.c.l.b16 %v922
      %v1310 = vunpack.c.l.b16 %v923
      %v1311 = vunpack.c.l.b16 %v924
      %v1312 = vunpack.c.l.b16 %v925
      %v1313 = vunpack.c.l.b16 %v926
      %v1314 = vunpack.c.l.b16 %v927
      %v1315 = vunpack.c.l.b16 %v928
      %v1316 = vunpack.c.l.b16 %v929
      %v1317 = vunpack.c.l.b16 %v930
      %v1318 = vunpack.c.l.b16 %v931
      %v1319 = vunpack.c.l.b16 %v932
      %v1320 = vunpack.c.l.b16 %v933
      %v1321 = vunpack.c.l.b16 %v934
      %v1322 = vunpack.c.l.b16 %v935
      %v1323 = vunpack.c.l.b16 %v936
      %v1324 = vunpack.c.l.b16 %v937
      %v1325 = vunpack.c.l.b16 %v938
      %v1326 = vunpack.c.l.b16 %v939
      %v1327 = vunpack.c.l.b16 %v940
      %v1328 = vunpack.c.l.b16 %v941
      %v1329 = vunpack.c.l.b16 %v942
      %v1330 = vunpack.c.l.b16 %v943
      %v1331 = vunpack.c.l.b16 %v944
      %v1332 = vunpack.c.l.b16 %v945
      %v1333 = vunpack.c.l.b16 %v946
      %v1334 = vunpack.c.l.b16 %v947
      %v1335 = vunpack.c.l.b16 %v948
      %v1336 = vunpack.c.l.b16 %v949
      %v1337 = vunpack.c.l.b16 %v950
      %v1338 = vunpack.c.l.b16 %v951
      %v1339 = vunpack.c.l.b16 %v952
      %v1340 = vunpack.c.l.b16 %v953
      %v1341 = vpack.c.b16 %v1198, %v1197
      %v1342 = vpack.c.b16 %v1200, %v1199
      %v1343 = vpack.c.b16 %v1202, %v1201
      %v1344 = vpack.c.b16 %v1204, %v1203
      %v1345 = vpack.c.b16 %v1206, %v1205
      %v1346 = vpack.c.b16 %v1208, %v1207
      %v1347 = vpack.c.b16 %v1210, %v1209
      %v1348 = vpack.c.b16 %v1212, %v1211
      %v1349 = vpack.c.b16 %v1214, %v1213
      %v1350 = vpack.c.b16 %v1216, %v1215
      %v1351 = vpack.c.b16 %v1218, %v1217
      %v1352 = vpack.c.b16 %v1220, %v1219
      %v1353 = vpack.c.b16 %v1222, %v1221
      %v1354 = vpack.c.b16 %v1224, %v1223
      %v1355 = vpack.c.b16 %v1226, %v1225
      %v1356 = vpack.c.b16 %v1228, %v1227
      %v1357 = vpack.c.b16 %v1230, %v1229
      %v1358 = vpack.c.b16 %v1232, %v1231
      %v1359 = vpack.c.b16 %v1234, %v1233
      %v1360 = vpack.c.b16 %v1236, %v1235
      %v1361 = vpack.c.b16 %v1238, %v1237
      %v1362 = vpack.c.b16 %v1240, %v1239
      %v1363 = vpack.c.b16 %v1242, %v1241
      %v1364 = vpack.c.b16 %v1244, %v1243
      %v1365 = vpack.c.b16 %v1246, %v1245
      %v1366 = vpack.c.b16 %v1248, %v1247
      %v1367 = vpack.c.b16 %v1250, %v1249
      %v1368 = vpack.c.b16 %v1252, %v1251
      %v1369 = vpack.c.b16 %v1254, %v1253
      %v1370 = vpack.c.b16 %v1256, %v1255
      %v1371 = vpack.c.b16 %v1258, %v1257
      %v1372 = vpack.c.b16 %v1260, %v1259
      %v1373 = vpack.c.b16 %v1262, %v1261
      %v1374 = vpack.c.b16 %v1264, %v1263
      %v1375 = vpack.c.b16 %v1266, %v1265
      %v1376 = vpack.c.b16 %v1268, %v1267
      %v1377 = vpack.c.b16 %v1270, %v1269
      %v1378 = vpack.c.b16 %v1272, %v1271
      %v1379 = vpack.c.b16 %v1274, %v1273
      %v1380 = vpack.c.b16 %v1276, %v1275
      %v1381 = vpack.c.b16 %v1278, %v1277
      %v1382 = vpack.c.b16 %v1280, %v1279
      %v1383 = vpack.c.b16 %v1282, %v1281
      %v1384 = vpack.c.b16 %v1284, %v1283
      %v1385 = vpack.c.b16 %v1286, %v1285
      %v1386 = vpack.c.b16 %v1288, %v1287
      %v1387 = vpack.c.b16 %v1290, %v1289
      %v1388 = vpack.c.b16 %v1292, %v1291
      %v1389 = vpack.c.b16 %v1294, %v1293
      %v1390 = vpack.c.b16 %v1296, %v1295
      %v1391 = vpack.c.b16 %v1298, %v1297
      %v1392 = vpack.c.b16 %v1300, %v1299
      %v1393 = vpack.c.b16 %v1302, %v1301
      %v1394 = vpack.c.b16 %v1304, %v1303
      %v1395 = vpack.c.b16 %v1306, %v1305
      %v1396 = vpack.c.b16 %v1308, %v1307
      %v1397 = vpack.c.b16 %v1310, %v1309
      %v1398 = vpack.c.b16 %v1312, %v1311
      %v1399 = vpack.c.b16 %v1314, %v1313
      %v1400 = vpack.c.b16 %v1316, %v1315
      %v1401 = vpack.c.b16 %v1318, %v1317
      %v1402 = vpack.c.b16 %v1320, %v1319
      %v1403 = vpack.c.b16 %v1322, %v1321
      %v1404 = vpack.c.b16 %v1324, %v1323
      %v1405 = vpack.c.b16 %v1326, %v1325
      %v1406 = vpack.c.b16 %v1328, %v1327
      %v1407 = vpack.c.b16 %v1330, %v1329
      %v1408 = vpack.c.b16 %v1332, %v1331
      %v1409 = vpack.c.b16 %v1334, %v1333
      %v1410 = vpack.c.b16 %v1336, %v1335
      %v1411 = vpack.c.b16 %v1338, %v1337
      %v1412 = vpack.c.b16 %v1340, %v1339
      %1485 = vmatprep.subr.bf16.mxu0 0
      %1486 = vmatpush1.bf16.msra.mxu0 %v1348
      %1487 = vmatprep.subr.bf16.mxu0 0
      %1488 = vmatpush1.bf16.msra.mxu0 %v1347
      %1489 = vmatprep.subr.bf16.mxu0 0
      %1490 = vmatpush1.bf16.msra.mxu0 %v1346
      %1491 = vmatprep.subr.bf16.mxu0 0
      %1492 = vmatpush1.bf16.msra.mxu0 %v1345
      %1493 = vmatprep.subr.bf16.mxu0 0
      %1494 = vmatpush1.bf16.msra.mxu0 %v1344
      %1495 = vmatprep.subr.bf16.mxu0 0
      %1496 = vmatpush1.bf16.msra.mxu0 %v1343
      %1497 = vmatprep.subr.bf16.mxu0 0
      %1498 = vmatpush1.bf16.msra.mxu0 %v1342
      %1499 = vmatprep.subr.bf16.mxu0 0
      %1500 = vmatpush1.bf16.msra.mxu0 %v1341
      %1501 = vmatprep.subr.bf16.mxu0 0
      %1502 = vmatpush2.bf16.msra.mxu0 %v1356
      %1503 = vmatprep.subr.bf16.mxu0 0
      %1504 = vmatpush2.bf16.msra.mxu0 %v1355
      %1505 = vmatprep.subr.bf16.mxu0 0
      %1506 = vmatpush2.bf16.msra.mxu0 %v1354
      %1507 = vmatprep.subr.bf16.mxu0 0
      %1508 = vmatpush2.bf16.msra.mxu0 %v1353
      %1509 = vmatprep.subr.bf16.mxu0 0
      %1510 = vmatpush2.bf16.msra.mxu0 %v1352
      %1511 = vmatprep.subr.bf16.mxu0 0
      %1512 = vmatpush2.bf16.msra.mxu0 %v1351
      %1513 = vmatprep.subr.bf16.mxu0 0
      %1514 = vmatpush2.bf16.msra.mxu0 %v1350
      %1515 = vmatprep.subr.bf16.mxu0 0
      %1516 = vmatpush2.bf16.msra.mxu0 %v1349
      %1517 = vmatprep.mubr.bf16.mxu0 %v1018
      %1518 = vmatmul.mubr.bf16.gmra.mxu0 %v1017
      %v1519 = vpop.f32.mrf.mxu0
      %v1520 = vadd.f32 %v959, %v1519
      %v1521 = vpop.f32.mrf.mxu0
      %v1522 = vpop.f32.mrf.mxu0
      %v1523 = vadd.f32 %v959, %v1522
      %v1524 = vpop.f32.mrf.mxu0
      %1525 = vmatprep.mubr.bf16.mxu0 %v1027
      %1526 = vmatmul.mubr.bf16.gmra.mxu0 %v1026
      %v1527 = vpop.f32.mrf.mxu0
      %v1528 = vadd.f32 %v959, %v1527
      %v1529 = vpop.f32.mrf.mxu0
      %v1530 = vpop.f32.mrf.mxu0
      %v1531 = vadd.f32 %v959, %v1530
      %v1532 = vpop.f32.mrf.mxu0
      %1533 = vdwg.mxu0
      %1534 = vmatprep.subr.bf16.mxu0 0
      %1535 = vmatpush1.bf16.msra.mxu0 %v1364
      %1536 = vmatprep.subr.bf16.mxu0 0
      %1537 = vmatpush1.bf16.msra.mxu0 %v1363
      %1538 = vmatprep.subr.bf16.mxu0 0
      %1539 = vmatpush1.bf16.msra.mxu0 %v1362
      %1540 = vmatprep.subr.bf16.mxu0 0
      %1541 = vmatpush1.bf16.msra.mxu0 %v1361
      %1542 = vmatprep.subr.bf16.mxu0 0
      %1543 = vmatpush1.bf16.msra.mxu0 %v1360
      %1544 = vmatprep.subr.bf16.mxu0 0
      %1545 = vmatpush1.bf16.msra.mxu0 %v1359
      %1546 = vmatprep.subr.bf16.mxu0 0
      %1547 = vmatpush1.bf16.msra.mxu0 %v1358
      %1548 = vmatprep.subr.bf16.mxu0 0
      %1549 = vmatpush1.bf16.msra.mxu0 %v1357
      %1550 = vmatprep.subr.bf16.mxu0 0
      %1551 = vmatpush2.bf16.msra.mxu0 %v1372
      %1552 = vmatprep.subr.bf16.mxu0 0
      %1553 = vmatpush2.bf16.msra.mxu0 %v1371
      %1554 = vmatprep.subr.bf16.mxu0 0
      %1555 = vmatpush2.bf16.msra.mxu0 %v1370
      %1556 = vmatprep.subr.bf16.mxu0 0
      %1557 = vmatpush2.bf16.msra.mxu0 %v1369
      %1558 = vmatprep.subr.bf16.mxu0 0
      %1559 = vmatpush2.bf16.msra.mxu0 %v1368
      %1560 = vmatprep.subr.bf16.mxu0 0
      %1561 = vmatpush2.bf16.msra.mxu0 %v1367
      %1562 = vmatprep.subr.bf16.mxu0 0
      %1563 = vmatpush2.bf16.msra.mxu0 %v1366
      %1564 = vmatprep.subr.bf16.mxu0 0
      %1565 = vmatpush2.bf16.msra.mxu0 %v1365
      %1566 = vmatprep.mubr.bf16.mxu0 %v1020
      %1567 = vmatmul.mubr.bf16.gmra.mxu0 %v1019
      %v1568 = vpop.f32.mrf.mxu0
      %v1569 = vadd.f32 %v1520, %v1568
      %v1570 = vpop.f32.mrf.mxu0
      %v1571 = vpop.f32.mrf.mxu0
      %v1572 = vadd.f32 %v1523, %v1571
      %v1573 = vpop.f32.mrf.mxu0
      %1574 = vmatprep.mubr.bf16.mxu0 %v1029
      %1575 = vmatmul.mubr.bf16.gmra.mxu0 %v1028
      %v1576 = vpop.f32.mrf.mxu0
      %v1577 = vadd.f32 %v1528, %v1576
      %v1578 = vpop.f32.mrf.mxu0
      %v1579 = vpop.f32.mrf.mxu0
      %v1580 = vadd.f32 %v1531, %v1579
      %v1581 = vpop.f32.mrf.mxu0
      %1582 = vdwg.mxu0
      %1583 = vmatprep.subr.bf16.mxu0 0
      %1584 = vmatpush1.bf16.msra.mxu0 %v1380
      %1585 = vmatprep.subr.bf16.mxu0 0
      %1586 = vmatpush1.bf16.msra.mxu0 %v1379
      %1587 = vmatprep.subr.bf16.mxu0 0
      %1588 = vmatpush1.bf16.msra.mxu0 %v1378
      %1589 = vmatprep.subr.bf16.mxu0 0
      %1590 = vmatpush1.bf16.msra.mxu0 %v1377
      %1591 = vmatprep.subr.bf16.mxu0 0
      %1592 = vmatpush1.bf16.msra.mxu0 %v1376
      %1593 = vmatprep.subr.bf16.mxu0 0
      %1594 = vmatpush1.bf16.msra.mxu0 %v1375
      %1595 = vmatprep.subr.bf16.mxu0 0
      %1596 = vmatpush1.bf16.msra.mxu0 %v1374
      %1597 = vmatprep.subr.bf16.mxu0 0
      %1598 = vmatpush1.bf16.msra.mxu0 %v1373
      %1599 = vmatprep.subr.bf16.mxu0 0
      %1600 = vmatpush2.bf16.msra.mxu0 %v1388
      %1601 = vmatprep.subr.bf16.mxu0 0
      %1602 = vmatpush2.bf16.msra.mxu0 %v1387
      %1603 = vmatprep.subr.bf16.mxu0 0
      %1604 = vmatpush2.bf16.msra.mxu0 %v1386
      %1605 = vmatprep.subr.bf16.mxu0 0
      %1606 = vmatpush2.bf16.msra.mxu0 %v1385
      %1607 = vmatprep.subr.bf16.mxu0 0
      %1608 = vmatpush2.bf16.msra.mxu0 %v1384
      %1609 = vmatprep.subr.bf16.mxu0 0
      %1610 = vmatpush2.bf16.msra.mxu0 %v1383
      %1611 = vmatprep.subr.bf16.mxu0 0
      %1612 = vmatpush2.bf16.msra.mxu0 %v1382
      %1613 = vmatprep.subr.bf16.mxu0 0
      %1614 = vmatpush2.bf16.msra.mxu0 %v1381
      %1615 = vmatprep.mubr.bf16.mxu0 %v1022
      %1616 = vmatmul.mubr.bf16.gmra.mxu0 %v1021
      %v1617 = vpop.f32.mrf.mxu0
      %v1618 = vadd.f32 %v1569, %v1617
      %v1619 = vpop.f32.mrf.mxu0
      %v1620 = vpop.f32.mrf.mxu0
      %v1621 = vadd.f32 %v1572, %v1620
      %v1622 = vpop.f32.mrf.mxu0
      %1623 = vmatprep.mubr.bf16.mxu0 %v1031
      %1624 = vmatmul.mubr.bf16.gmra.mxu0 %v1030
      %v1625 = vpop.f32.mrf.mxu0
      %v1626 = vadd.f32 %v1577, %v1625
      %v1627 = vpop.f32.mrf.mxu0
      %v1628 = vpop.f32.mrf.mxu0
      %v1629 = vadd.f32 %v1580, %v1628
      %v1630 = vpop.f32.mrf.mxu0
      %1631 = vdwg.mxu0
      %1632 = vmatprep.subr.bf16.mxu0 0
      %1633 = vmatpush1.bf16.msra.mxu0 %v1396
      %1634 = vmatprep.subr.bf16.mxu0 0
      %1635 = vmatpush1.bf16.msra.mxu0 %v1395
      %1636 = vmatprep.subr.bf16.mxu0 0
      %1637 = vmatpush1.bf16.msra.mxu0 %v1394
      %1638 = vmatprep.subr.bf16.mxu0 0
      %1639 = vmatpush1.bf16.msra.mxu0 %v1393
      %1640 = vmatprep.subr.bf16.mxu0 0
      %1641 = vmatpush1.bf16.msra.mxu0 %v1392
      %1642 = vmatprep.subr.bf16.mxu0 0
      %1643 = vmatpush1.bf16.msra.mxu0 %v1391
      %1644 = vmatprep.subr.bf16.mxu0 0
      %1645 = vmatpush1.bf16.msra.mxu0 %v1390
      %1646 = vmatprep.subr.bf16.mxu0 0
      %1647 = vmatpush1.bf16.msra.mxu0 %v1389
      %1648 = vmatprep.subr.bf16.mxu0 0
      %1649 = vmatpush2.bf16.msra.mxu0 %v1404
      %1650 = vmatprep.subr.bf16.mxu0 0
      %1651 = vmatpush2.bf16.msra.mxu0 %v1403
      %1652 = vmatprep.subr.bf16.mxu0 0
      %1653 = vmatpush2.bf16.msra.mxu0 %v1402
      %1654 = vmatprep.subr.bf16.mxu0 0
      %1655 = vmatpush2.bf16.msra.mxu0 %v1401
      %1656 = vmatprep.subr.bf16.mxu0 0
      %1657 = vmatpush2.bf16.msra.mxu0 %v1400
      %1658 = vmatprep.subr.bf16.mxu0 0
      %1659 = vmatpush2.bf16.msra.mxu0 %v1399
      %1660 = vmatprep.subr.bf16.mxu0 0
      %1661 = vmatpush2.bf16.msra.mxu0 %v1398
      %1662 = vmatprep.subr.bf16.mxu0 0
      %1663 = vmatpush2.bf16.msra.mxu0 %v1397
      %1664 = vmatprep.mubr.bf16.mxu0 %v1024
      %1665 = vmatmul.mubr.bf16.gmra.mxu0 %v1023
      %v1666 = vpop.f32.mrf.mxu0
      %v1667 = vadd.f32 %v1618, %v1666
      %v1668 = vpop.f32.mrf.mxu0
      %v1669 = vpop.f32.mrf.mxu0
      %v1670 = vadd.f32 %v1621, %v1669
      %v1671 = vpop.f32.mrf.mxu0
      %1672 = vmatprep.mubr.bf16.mxu0 %v1033
      %1673 = vmatmul.mubr.bf16.gmra.mxu0 %v1032
      %v1674 = vpop.f32.mrf.mxu0
      %v1675 = vadd.f32 %v1626, %v1674
      %v1676 = vpop.f32.mrf.mxu0
      %v1677 = vpop.f32.mrf.mxu0
      %v1678 = vadd.f32 %v1629, %v1677
      %v1679 = vpop.f32.mrf.mxu0
      %1680 = vdwg.mxu0
      %1681 = vmatprep.subr.bf16.mxu0 0
      %1682 = vmatpush1.bf16.msra.mxu0 %v1412
      %1683 = vmatprep.subr.bf16.mxu0 0
      %1684 = vmatpush1.bf16.msra.mxu0 %v1411
      %1685 = vmatprep.subr.bf16.mxu0 0
      %1686 = vmatpush1.bf16.msra.mxu0 %v1410
      %1687 = vmatprep.subr.bf16.mxu0 0
      %1688 = vmatpush1.bf16.msra.mxu0 %v1409
      %1689 = vmatprep.subr.bf16.mxu0 0
      %1690 = vmatpush1.bf16.msra.mxu0 %v1408
      %1691 = vmatprep.subr.bf16.mxu0 0
      %1692 = vmatpush1.bf16.msra.mxu0 %v1407
      %1693 = vmatprep.subr.bf16.mxu0 0
      %1694 = vmatpush1.bf16.msra.mxu0 %v1406
      %1695 = vmatprep.subr.bf16.mxu0 0
      %1696 = vmatpush1.bf16.msra.mxu0 %v1405
      %1697 = vmatprep.subr.bf16.mxu0 0
      %1698 = vmatpush2.bf16.msra.mxu0 0
      %1699 = vmatprep.subr.bf16.mxu0 0
      %1700 = vmatpush2.bf16.msra.mxu0 0
      %1701 = vmatprep.subr.bf16.mxu0 0
      %1702 = vmatpush2.bf16.msra.mxu0 0
      %1703 = vmatprep.subr.bf16.mxu0 0
      %1704 = vmatpush2.bf16.msra.mxu0 0
      %1705 = vmatprep.subr.bf16.mxu0 0
      %1706 = vmatpush2.bf16.msra.mxu0 0
      %1707 = vmatprep.subr.bf16.mxu0 0
      %1708 = vmatpush2.bf16.msra.mxu0 0
      %1709 = vmatprep.subr.bf16.mxu0 0
      %1710 = vmatpush2.bf16.msra.mxu0 0
      %1711 = vmatprep.subr.bf16.mxu0 0
      %1712 = vmatpush2.bf16.msra.mxu0 0
      %1713 = vmatprep.mubr.bf16.mxu0 0
      %1714 = vmatmul.mubr.bf16.gmra.mxu0 %v1025
      %v1715 = vpop.f32.mrf.mxu0
      %v1716 = vadd.f32 %v1667, %v1715
      %v1717 = vpop.f32.mrf.mxu0
      %v1718 = vpop.f32.mrf.mxu0
      %v1719 = vadd.f32 %v1670, %v1718
      %v1720 = vpop.f32.mrf.mxu0
      %1721 = vmatprep.mubr.bf16.mxu0 0
      %1722 = vmatmul.mubr.bf16.gmra.mxu0 %v1034
      %v1723 = vpop.f32.mrf.mxu0
      %v1724 = vadd.f32 %v1675, %v1723
      %v1725 = vpop.f32.mrf.mxu0
      %v1726 = vpop.f32.mrf.mxu0
      %v1727 = vadd.f32 %v1678, %v1726
      %v1728 = vpop.f32.mrf.mxu0
      %1729 = vdwg.mxu0
      %v1730 = vld [vmem:[%s3] sm:$0xff]
      %v1731 = vld [vmem:[%s3 + $0x8] sm:$0xff]
      %v1732 = vld [vmem:[%s3 + $0x10] sm:$0xff]
      %v1733 = vld [vmem:[%s3 + $0x18] sm:$0xff]
      %1735 = vset.pattern.permute.xlu0 0
      %1736 = vperm.xlu0 %1735, %v1730
      %v1737 = vpop.permute.xlu0 %1736
      %1740 = vset.pattern.permute.xlu0 0
      %1741 = vperm.xlu0 %1740, %v1731
      %v1742 = vpop.permute.xlu0 %1741
      %1745 = vset.pattern.permute.xlu0 0
      %1746 = vperm.xlu0 %1745, %v1732
      %v1747 = vpop.permute.xlu0 %1746
      %1750 = vset.pattern.permute.xlu0 0
      %1751 = vperm.xlu0 %1750, %v1733
      %v1752 = vpop.permute.xlu0 %1751
      %v1754 = vmul.f32 %v1716, %v1737
      %v1755 = vmul.f32 %v1719, %v1742
      %v1756 = vmul.f32 %v1724, %v1747
      %v1757 = vmul.f32 %v1727, %v1752
      %v1758 = vpack.c.bf16 %v1755, %v1754
      %v1759 = vpack.c.bf16 %v1757, %v1756
      %v1762 = vunpack.c.l.b16 %v1758
      %v1763 = vunpack.c.h.b16 %v1758
      %v1764 = vunpack.c.l.b16 %v1759
      %v1765 = vunpack.c.h.b16 %v1759
      %v1766 = vpack.c.b16 %v1762, %v1762
      %v1767 = vpack.c.b16 %v1763, %v1763
      %v1768 = vpack.c.b16 %v1764, %v1764
      %v1769 = vpack.c.b16 %v1765, %v1765
      %1774 = vst [vmem:[%s407] sm:$0xf] %v1766
      %1775 = vst [vmem:[%s407 + $0x4] sm:$0xf] %v1767
      %1776 = vst [vmem:[%s407 + $0x8] sm:$0xf] %v1768
      %1777 = vst [vmem:[%s407 + $0xc] sm:$0xf] %v1769
      %s1778 = smul.u32 4, %s22
      %p1779 = scmp.lt.s32.totalorder %s21, 1
      %s1780 = scalar_select %p1779, %s21, 1
      %p1781 = scmp.lt.s32.totalorder %s1778, 3
      %s1782 = scalar_select %p1781, %s1778, 3
      %s1783 = smul.addr %s1780, 4
      %s1784 = sadd.s32 %s1782, %s1783
      %s1785 = smul.addr %s1784, 4
      %s1786 = scalar_lea.vmem %s6, %s1785
      // Predicated region
      $region49: #{vqvae_encoder_forward.8} parent=43 // pred_check
        %p1787 = pneg %p212
      $region50: #{vqvae_encoder_forward.8} parent=43 // pred_check_branch
        %1789 = sbr.rel (%p1787) target = $region52
      $region51: #{vqvae_encoder_forward.8} parent=43 // pred_region
        %s1790 = smul.u32 4, %s22
      $region52: #{vqvae_encoder_forward.8} parent=43 // pred_fallthru
        _
    $region44: #{vqvae_encoder_forward.8} parent=5 // pred_fallthru
      _
    %p1791 = scmp.le.s32.totalorder 2, %s12
    // Predicated region
    $region53: #{vqvae_encoder_forward.8} parent=5 // pred_check
      %p1792 = pneg %p1791
    $region54: #{vqvae_encoder_forward.8} parent=5 // pred_check_branch
      %1794 = sbr.rel (%p1792) target = $region56
    $region55: #{vqvae_encoder_forward.8} parent=5 // pred_region
      %s1795 = ssub.s32 %s12, 2
      // Predicated region
      $region57: #{vqvae_encoder_forward.8} parent=55 // pred_check
        %p1796 = pneg %p218
      $region58: #{vqvae_encoder_forward.8} parent=55 // pred_check_branch
        %1798 = sbr.rel (%p1796) target = $region60
      $region59: #{vqvae_encoder_forward.8} parent=55 // pred_region
        %s1799 = smul.u32 4, %s24
        %p1800 = scmp.lt.s32.totalorder %s23, 1
        %s1801 = scalar_select %p1800, %s23, 1
        %p1802 = scmp.lt.s32.totalorder %s1799, 3
        %s1803 = scalar_select %p1802, %s1799, 3
        %s1804 = smul.addr %s1801, 4
        %s1805 = sadd.s32 %s1803, %s1804
        %s1806 = smul.addr %s1805, 4
        %s1807 = scalar_lea.vmem %s6, %s1806
      $region60: #{vqvae_encoder_forward.8} parent=55 // pred_fallthru
        _
    $region56: #{vqvae_encoder_forward.8} parent=5 // pred_fallthru
      _
  $region6: #{vqvae_encoder_forward.8} parent=0 // loop_footer
    %s16 = sadd.s32 1, %s12
  $region7: #{vqvae_encoder_forward.8} parent=0 // loop_footer_branch
    %11 = sbr.rel target = $region3
  $region8: #{vqvae_encoder_forward.8} parent=0 // loop_exit
    _

// kernel: vqvae_encoder_forward.9
$region0: #{vqvae_encoder_forward.9}
  #allocation0 [shape = 'u32[]', space=smem, size = 0x4, offset = 0x4, fixed_abs, tag = 'smem constant byte address 0x4 - core index']
  #allocation1 [shape = 'u32[144,128]{1,0:T(1,128)}', space=vmem, size = 0x12000, scoped, tag = 'internal scratch']
  #allocation2 [shape = 'bf16[64,128]{1,0:T(8,128)(2,1)}', space=vmem, size = 0x4000, scoped, tag = 'scratch operand']
  #allocation3 [shape = 'bf16[32,1152]{1,0:T(8,128)(2,1)}', space=vmem, size = 0x12000, scoped, tag = 'scratch operand']
  %s0 = inlined_call_operand.vmem [shape: bf16[2,4,8,128], index: 0, kind: input, shape index: {}, may-alias: {0,1,2}]
  %s1 = inlined_call_operand.vmem [shape: bf16[2,4,8,128], index: 1, kind: input, shape index: {}, may-alias: {0,1,2}]
  %s2 = inlined_call_operand.vmem [shape: bf16[2,4,8,128], index: 2, kind: input, shape index: {}, may-alias: {0,1,2}]
  %s3 = inlined_call_operand.vmem [shape: f32[32,1], index: 3, kind: input, shape index: {}]
  %s4 = inlined_call_operand.vmem [shape: bf16[1152,128], index: 4, kind: input, shape index: {}]
  %s5 = inlined_call_operand.vmem [shape: f32[1,128], index: 5, kind: input, shape index: {}]
  %s6 = inlined_call_operand.vmem [shape: bf16[128,128], index: 6, kind: input, shape index: {}]
  %s7 = inlined_call_operand.vmem [shape: f32[1,128], index: 7, kind: input, shape index: {}]
  %s8 = inlined_call_operand.vmem [shape: bf16[2,4,8,128], index: 8, kind: output, shape index: {}]
  %s9 = sld [smem:[#allocation0]]
  $region69: #{vqvae_encoder_forward.9} parent=0
    _
  %s11 = ssub.s32 1, %s9
  %s12 = scalar_select 0, %s11, %s9
  loop: start=0, step=1, limit=4
  $region2: #{vqvae_encoder_forward.9} parent=0 // loop_pre_header
    _
  $region3: #{vqvae_encoder_forward.9} parent=0 // loop_header
    %s14 = sphi 0, %s18
    %p15 = scmp.ge.s32.totalorder %s14, 4
    %s21 = sphi 0, %s33
    %s22 = sphi 0, %s29
    %s23 = sphi 0, %s21
    %s24 = sphi 0, %s22
    %s25 = sphi 0, %s23
    %s26 = sphi 0, %s24
    %s38 = sphi 0, %s40
    %s41 = sphi 0, %s38
    %s42 = sphi 0, %s41
    %s58 = sphi 0, %s42
    %s74 = sphi 0, %s76
    %s77 = sphi 0, %s74
    %s78 = sphi 0, %s77
    %s94 = sphi 0, %s78
    %s110 = sphi 0, %s112
    %s113 = sphi 0, %s110
    %s114 = sphi 0, %s113
    %s130 = sphi 0, %s114
    %s134 = sphi 0, %s134
    %s136 = sphi 0, %s134
    %s137 = sphi 0, %s136
    %s151 = sphi 0, %s137
    %s155 = sphi 0, %s155
    %s157 = sphi 0, %s155
    %s158 = sphi 0, %s157
    %s172 = sphi 0, %s158
    %s176 = sphi 0, %s176
    %s178 = sphi 0, %s176
    %s179 = sphi 0, %s178
    %s193 = sphi 0, %s179
    %s197 = sphi 0, %s197
    %s199 = sphi 0, %s197
    %s200 = sphi 0, %s199
    %s214 = sphi 0, %s200
    %s218 = sphi 0, %s218
    %s220 = sphi 0, %s218
    %s221 = sphi 0, %s220
    %s235 = sphi 0, %s221
    %s243 = sphi 0, %s245
    %s246 = sphi 0, %s243
    %s247 = sphi 0, %s246
    %s263 = sphi 0, %s247
  $region4: #{vqvae_encoder_forward.9} parent=0 // loop_header_branch
    %17 = sbr.rel (%p15) target = $region8
  $region5: #{vqvae_encoder_forward.9} parent=0 // loop_body
    %s19 = ssub.s32 %s14, 1
    %s20 = ssub.s32 %s14, 2
    %s27 = sadd.s32 1, %s22
    %p28 = scmp.ge.s32.totalorder %s27, 1
    %s29 = scalar_select %p28, 0, %s27
    %s30 = sadd.s32 1, %s21
    %s31 = scalar_select %p28, %s30, %s21
    %p32 = scmp.ge.s32.totalorder %s31, 2
    %s33 = scalar_select %p32, 0, %s31
    %s34 = ssub.s32 %s21, %s33
    %s35 = ssub.s32 %s22, %s29
    %s36 = sor.u32 %s34, %s35
    %p37 = scmp.eq.s32.totalorder %s36, 0
    %s39 = sadd.s32 %s38, 1
    %s40 = scalar_select %p37, %s38, %s39
    %p43 = pneg %p37
    %p44 = scmp.eq.s32.totalorder %s14, 1
    %p45 = por %p43, %p44
    %p46 = scmp.ne.s32.totalorder %s38, %s41
    %p47 = scmp.eq.s32.totalorder %s14, 0
    %p48 = por %p46, %p47
    %p49 = scmp.ne.s32.totalorder %s38, %s41
    %p50 = scmp.eq.s32.totalorder %s19, 1
    %p51 = por %p49, %p50
    %p52 = scmp.ne.s32.totalorder %s41, %s42
    %p53 = scmp.eq.s32.totalorder %s19, 0
    %p54 = por %p52, %p53
    %p55 = scmp.ne.s32.totalorder %s41, %s42
    %p56 = scmp.eq.s32.totalorder %s20, 1
    %p57 = por %p55, %p56
    %p59 = scmp.ne.s32.totalorder %s42, %s58
    %p60 = scmp.eq.s32.totalorder %s20, 0
    %p61 = por %p59, %p60
    %s62 = smul.u32 %s22, 4
    %s63 = ssub.s32 %s62, 1
    %p64 = scmp.gt.s32.totalorder %s63, 0
    %s65 = scalar_select %p64, %s63, 0
    %s66 = smul.u32 %s29, 4
    %s67 = ssub.s32 %s66, 1
    %p68 = scmp.gt.s32.totalorder %s67, 0
    %s69 = scalar_select %p68, %s67, 0
    %s70 = ssub.s32 %s21, %s33
    %s71 = ssub.s32 %s65, %s69
    %s72 = sor.u32 %s70, %s71
    %p73 = scmp.eq.s32.totalorder %s72, 0
    %s75 = sadd.s32 %s74, 1
    %s76 = scalar_select %p73, %s74, %s75
    %p79 = pneg %p73
    %p80 = scmp.eq.s32.totalorder %s14, 1
    %p81 = por %p79, %p80
    %p82 = scmp.ne.s32.totalorder %s74, %s77
    %p83 = scmp.eq.s32.totalorder %s14, 0
    %p84 = por %p82, %p83
    %p85 = scmp.ne.s32.totalorder %s74, %s77
    %p86 = scmp.eq.s32.totalorder %s19, 1
    %p87 = por %p85, %p86
    %p88 = scmp.ne.s32.totalorder %s77, %s78
    %p89 = scmp.eq.s32.totalorder %s19, 0
    %p90 = por %p88, %p89
    %p91 = scmp.ne.s32.totalorder %s77, %s78
    %p92 = scmp.eq.s32.totalorder %s20, 1
    %p93 = por %p91, %p92
    %p95 = scmp.ne.s32.totalorder %s78, %s94
    %p96 = scmp.eq.s32.totalorder %s20, 0
    %p97 = por %p95, %p96
    %s98 = sadd.s32 %s22, 1
    %s99 = smul.u32 %s98, 4
    %p100 = scmp.lt.s32.totalorder %s99, 3
    %s101 = scalar_select %p100, %s99, 3
    %s102 = sadd.s32 %s29, 1
    %s103 = smul.u32 %s102, 4
    %p104 = scmp.lt.s32.totalorder %s103, 3
    %s105 = scalar_select %p104, %s103, 3
    %s106 = ssub.s32 %s21, %s33
    %s107 = ssub.s32 %s101, %s105
    %s108 = sor.u32 %s106, %s107
    %p109 = scmp.eq.s32.totalorder %s108, 0
    %s111 = sadd.s32 %s110, 1
    %s112 = scalar_select %p109, %s110, %s111
    %p115 = pneg %p109
    %p116 = scmp.eq.s32.totalorder %s14, 1
    %p117 = por %p115, %p116
    %p118 = scmp.ne.s32.totalorder %s110, %s113
    %p119 = scmp.eq.s32.totalorder %s14, 0
    %p120 = por %p118, %p119
    %p121 = scmp.ne.s32.totalorder %s110, %s113
    %p122 = scmp.eq.s32.totalorder %s19, 1
    %p123 = por %p121, %p122
    %p124 = scmp.ne.s32.totalorder %s113, %s114
    %p125 = scmp.eq.s32.totalorder %s19, 0
    %p126 = por %p124, %p125
    %p127 = scmp.ne.s32.totalorder %s113, %s114
    %p128 = scmp.eq.s32.totalorder %s20, 1
    %p129 = por %p127, %p128
    %p131 = scmp.ne.s32.totalorder %s114, %s130
    %p132 = scmp.eq.s32.totalorder %s20, 0
    %p133 = por %p131, %p132
    %s135 = sadd.s32 %s134, 1
    %p138 = scmp.eq.s32.totalorder %s14, 1
    %p139 = scmp.ne.s32.totalorder %s134, %s136
    %p140 = scmp.eq.s32.totalorder %s14, 0
    %p141 = por %p139, %p140
    %p142 = scmp.ne.s32.totalorder %s134, %s136
    %p143 = scmp.eq.s32.totalorder %s19, 1
    %p144 = por %p142, %p143
    %p145 = scmp.ne.s32.totalorder %s136, %s137
    %p146 = scmp.eq.s32.totalorder %s19, 0
    %p147 = por %p145, %p146
    %p148 = scmp.ne.s32.totalorder %s136, %s137
    %p149 = scmp.eq.s32.totalorder %s20, 1
    %p150 = por %p148, %p149
    %p152 = scmp.ne.s32.totalorder %s137, %s151
    %p153 = scmp.eq.s32.totalorder %s20, 0
    %p154 = por %p152, %p153
    %s156 = sadd.s32 %s155, 1
    %p159 = scmp.eq.s32.totalorder %s14, 1
    %p160 = scmp.ne.s32.totalorder %s155, %s157
    %p161 = scmp.eq.s32.totalorder %s14, 0
    %p162 = por %p160, %p161
    %p163 = scmp.ne.s32.totalorder %s155, %s157
    %p164 = scmp.eq.s32.totalorder %s19, 1
    %p165 = por %p163, %p164
    %p166 = scmp.ne.s32.totalorder %s157, %s158
    %p167 = scmp.eq.s32.totalorder %s19, 0
    %p168 = por %p166, %p167
    %p169 = scmp.ne.s32.totalorder %s157, %s158
    %p170 = scmp.eq.s32.totalorder %s20, 1
    %p171 = por %p169, %p170
    %p173 = scmp.ne.s32.totalorder %s158, %s172
    %p174 = scmp.eq.s32.totalorder %s20, 0
    %p175 = por %p173, %p174
    %s177 = sadd.s32 %s176, 1
    %p180 = scmp.eq.s32.totalorder %s14, 1
    %p181 = scmp.ne.s32.totalorder %s176, %s178
    %p182 = scmp.eq.s32.totalorder %s14, 0
    %p183 = por %p181, %p182
    %p184 = scmp.ne.s32.totalorder %s176, %s178
    %p185 = scmp.eq.s32.totalorder %s19, 1
    %p186 = por %p184, %p185
    %p187 = scmp.ne.s32.totalorder %s178, %s179
    %p188 = scmp.eq.s32.totalorder %s19, 0
    %p189 = por %p187, %p188
    %p190 = scmp.ne.s32.totalorder %s178, %s179
    %p191 = scmp.eq.s32.totalorder %s20, 1
    %p192 = por %p190, %p191
    %p194 = scmp.ne.s32.totalorder %s179, %s193
    %p195 = scmp.eq.s32.totalorder %s20, 0
    %p196 = por %p194, %p195
    %s198 = sadd.s32 %s197, 1
    %p201 = scmp.eq.s32.totalorder %s14, 1
    %p202 = scmp.ne.s32.totalorder %s197, %s199
    %p203 = scmp.eq.s32.totalorder %s14, 0
    %p204 = por %p202, %p203
    %p205 = scmp.ne.s32.totalorder %s197, %s199
    %p206 = scmp.eq.s32.totalorder %s19, 1
    %p207 = por %p205, %p206
    %p208 = scmp.ne.s32.totalorder %s199, %s200
    %p209 = scmp.eq.s32.totalorder %s19, 0
    %p210 = por %p208, %p209
    %p211 = scmp.ne.s32.totalorder %s199, %s200
    %p212 = scmp.eq.s32.totalorder %s20, 1
    %p213 = por %p211, %p212
    %p215 = scmp.ne.s32.totalorder %s200, %s214
    %p216 = scmp.eq.s32.totalorder %s20, 0
    %p217 = por %p215, %p216
    %s219 = sadd.s32 %s218, 1
    %p222 = scmp.eq.s32.totalorder %s14, 1
    %p223 = scmp.ne.s32.totalorder %s218, %s220
    %p224 = scmp.eq.s32.totalorder %s14, 0
    %p225 = por %p223, %p224
    %p226 = scmp.ne.s32.totalorder %s218, %s220
    %p227 = scmp.eq.s32.totalorder %s19, 1
    %p228 = por %p226, %p227
    %p229 = scmp.ne.s32.totalorder %s220, %s221
    %p230 = scmp.eq.s32.totalorder %s19, 0
    %p231 = por %p229, %p230
    %p232 = scmp.ne.s32.totalorder %s220, %s221
    %p233 = scmp.eq.s32.totalorder %s20, 1
    %p234 = por %p232, %p233
    %p236 = scmp.ne.s32.totalorder %s221, %s235
    %p237 = scmp.eq.s32.totalorder %s20, 0
    %p238 = por %p236, %p237
    %s239 = ssub.s32 %s21, %s33
    %s240 = ssub.s32 %s22, %s29
    %s241 = sor.u32 %s239, %s240
    %p242 = scmp.eq.s32.totalorder %s241, 0
    %s244 = sadd.s32 %s243, 1
    %s245 = scalar_select %p242, %s243, %s244
    %p248 = pneg %p242
    %p249 = scmp.eq.s32.totalorder %s14, 1
    %p250 = por %p248, %p249
    %p251 = scmp.ne.s32.totalorder %s243, %s246
    %p252 = scmp.eq.s32.totalorder %s14, 0
    %p253 = por %p251, %p252
    %p254 = scmp.ne.s32.totalorder %s243, %s246
    %p255 = scmp.eq.s32.totalorder %s19, 1
    %p256 = por %p254, %p255
    %p257 = scmp.ne.s32.totalorder %s246, %s247
    %p258 = scmp.eq.s32.totalorder %s19, 0
    %p259 = por %p257, %p258
    %p260 = scmp.ne.s32.totalorder %s246, %s247
    %p261 = scmp.eq.s32.totalorder %s20, 1
    %p262 = por %p260, %p261
    %p264 = scmp.ne.s32.totalorder %s247, %s263
    %p265 = scmp.eq.s32.totalorder %s20, 0
    %p266 = por %p264, %p265
    %p267 = scmp.le.s32.totalorder 1, %s14
    %p268 = scmp.lt.s32.totalorder %s14, 3
    %p269 = pnand %p267, %p268
    %p270 = pneg %p269
    // Predicated region
    $region9: #{vqvae_encoder_forward.9} parent=5 // pred_check
      _
    $region10: #{vqvae_encoder_forward.9} parent=5 // pred_check_branch
      %272 = sbr.rel (%p269) target = $region12
    $region11: #{vqvae_encoder_forward.9} parent=5 // pred_region
      %s273 = ssub.s32 %s14, 1
      // Predicated region
      $region13: #{vqvae_encoder_forward.9} parent=11 // pred_check
        %p274 = pneg %p147
      $region14: #{vqvae_encoder_forward.9} parent=11 // pred_check_branch
        %276 = sbr.rel (%p274) target = $region16
      $region15: #{vqvae_encoder_forward.9} parent=11 // pred_region
        _
      $region16: #{vqvae_encoder_forward.9} parent=11 // pred_fallthru
        _
      // Predicated region
      $region17: #{vqvae_encoder_forward.9} parent=11 // pred_check
        %p277 = pneg %p168
      $region18: #{vqvae_encoder_forward.9} parent=11 // pred_check_branch
        %279 = sbr.rel (%p277) target = $region20
      $region19: #{vqvae_encoder_forward.9} parent=11 // pred_region
        _
      $region20: #{vqvae_encoder_forward.9} parent=11 // pred_fallthru
        _
      // Predicated region
      $region21: #{vqvae_encoder_forward.9} parent=11 // pred_check
        %p280 = pneg %p189
      $region22: #{vqvae_encoder_forward.9} parent=11 // pred_check_branch
        %282 = sbr.rel (%p280) target = $region24
      $region23: #{vqvae_encoder_forward.9} parent=11 // pred_region
        _
      $region24: #{vqvae_encoder_forward.9} parent=11 // pred_fallthru
        _
      // Predicated region
      $region25: #{vqvae_encoder_forward.9} parent=11 // pred_check
        %p283 = pneg %p210
      $region26: #{vqvae_encoder_forward.9} parent=11 // pred_check_branch
        %285 = sbr.rel (%p283) target = $region28
      $region27: #{vqvae_encoder_forward.9} parent=11 // pred_region
        _
      $region28: #{vqvae_encoder_forward.9} parent=11 // pred_fallthru
        _
      // Predicated region
      $region29: #{vqvae_encoder_forward.9} parent=11 // pred_check
        %p286 = pneg %p231
      $region30: #{vqvae_encoder_forward.9} parent=11 // pred_check_branch
        %288 = sbr.rel (%p286) target = $region32
      $region31: #{vqvae_encoder_forward.9} parent=11 // pred_region
        _
      $region32: #{vqvae_encoder_forward.9} parent=11 // pred_fallthru
        _
    $region12: #{vqvae_encoder_forward.9} parent=5 // pred_fallthru
      _
    %p289 = scmp.lt.s32.totalorder %s14, 2
    // Predicated region
    $region33: #{vqvae_encoder_forward.9} parent=5 // pred_check
      %p290 = pneg %p289
    $region34: #{vqvae_encoder_forward.9} parent=5 // pred_check_branch
      %292 = sbr.rel (%p290) target = $region36
    $region35: #{vqvae_encoder_forward.9} parent=5 // pred_region
      // Predicated region
      $region37: #{vqvae_encoder_forward.9} parent=35 // pred_check
        %p293 = pneg %p48
      $region38: #{vqvae_encoder_forward.9} parent=35 // pred_check_branch
        %295 = sbr.rel (%p293) target = $region40
      $region39: #{vqvae_encoder_forward.9} parent=35 // pred_region
        %s296 = smul.u32 4, %s22
        %p297 = scmp.lt.s32.totalorder %s21, 1
        %s298 = scalar_select %p297, %s21, 1
        %p299 = scmp.lt.s32.totalorder %s296, 3
        %s300 = scalar_select %p299, %s296, 3
        %s301 = smul.addr %s298, 4
        %s302 = sadd.s32 %s300, %s301
        %s303 = smul.addr %s302, 4
        %s304 = scalar_lea.vmem %s0, %s303
        %s305 = smul.u32 4, %s22
      $region40: #{vqvae_encoder_forward.9} parent=35 // pred_fallthru
        _
      // Predicated region
      $region41: #{vqvae_encoder_forward.9} parent=35 // pred_check
        %p306 = pneg %p84
      $region42: #{vqvae_encoder_forward.9} parent=35 // pred_check_branch
        %308 = sbr.rel (%p306) target = $region44
      $region43: #{vqvae_encoder_forward.9} parent=35 // pred_region
        %s309 = smul.u32 %s22, 4
        %s310 = ssub.s32 %s309, 1
        %p311 = scmp.gt.s32.totalorder %s310, 0
        %s312 = scalar_select %p311, %s310, 0
        %p313 = scmp.lt.s32.totalorder %s21, 1
        %s314 = scalar_select %p313, %s21, 1
        %p315 = scmp.lt.s32.totalorder %s312, 3
        %s316 = scalar_select %p315, %s312, 3
        %s317 = smul.addr %s314, 4
        %s318 = sadd.s32 %s316, %s317
        %s319 = smul.addr %s318, 4
        %s320 = scalar_lea.vmem %s1, %s319
        %s321 = smul.u32 %s22, 4
        %s322 = ssub.s32 %s321, 1
        %p323 = scmp.gt.s32.totalorder %s322, 0
        %s324 = scalar_select %p323, %s322, 0
      $region44: #{vqvae_encoder_forward.9} parent=35 // pred_fallthru
        _
      // Predicated region
      $region45: #{vqvae_encoder_forward.9} parent=35 // pred_check
        %p325 = pneg %p120
      $region46: #{vqvae_encoder_forward.9} parent=35 // pred_check_branch
        %327 = sbr.rel (%p325) target = $region48
      $region47: #{vqvae_encoder_forward.9} parent=35 // pred_region
        %s328 = sadd.s32 %s22, 1
        %s329 = smul.u32 %s328, 4
        %p330 = scmp.lt.s32.totalorder %s329, 3
        %s331 = scalar_select %p330, %s329, 3
        %p332 = scmp.lt.s32.totalorder %s21, 1
        %s333 = scalar_select %p332, %s21, 1
        %p334 = scmp.lt.s32.totalorder %s331, 3
        %s335 = scalar_select %p334, %s331, 3
        %s336 = smul.addr %s333, 4
        %s337 = sadd.s32 %s335, %s336
        %s338 = smul.addr %s337, 4
        %s339 = scalar_lea.vmem %s2, %s338
        %s340 = sadd.s32 %s22, 1
        %s341 = smul.u32 %s340, 4
        %p342 = scmp.lt.s32.totalorder %s341, 3
        %s343 = scalar_select %p342, %s341, 3
      $region48: #{vqvae_encoder_forward.9} parent=35 // pred_fallthru
        _
    $region36: #{vqvae_encoder_forward.9} parent=5 // pred_fallthru
      _
    %p344 = scmp.le.s32.totalorder 1, %s14
    %p345 = scmp.lt.s32.totalorder %s14, 3
    %p346 = pnand %p344, %p345
    %p347 = pneg %p346
    // Predicated region
    $region49: #{vqvae_encoder_forward.9} parent=5 // pred_check
      _
    $region50: #{vqvae_encoder_forward.9} parent=5 // pred_check_branch
      %349 = sbr.rel (%p346) target = $region52
    $region51: #{vqvae_encoder_forward.9} parent=5 // pred_region
      %s350 = ssub.s32 %s14, 1
      %s351 = smul.u32 4, %s24
      %p352 = scmp.lt.s32.totalorder %s23, 1
      %s353 = scalar_select %p352, %s23, 1
      %p354 = scmp.lt.s32.totalorder %s351, 3
      %s355 = scalar_select %p354, %s351, 3
      %s356 = smul.addr %s353, 4
      %s357 = sadd.s32 %s355, %s356
      %s358 = smul.addr %s357, 4
      %s359 = scalar_lea.vmem %s0, %s358
      %p360 = pneg %p54
      %p361 = pneg %p51
      %s362 = smul.u32 %s24, 4
      %s363 = ssub.s32 %s362, 1
      %p364 = scmp.gt.s32.totalorder %s363, 0
      %s365 = scalar_select %p364, %s363, 0
      %p366 = scmp.lt.s32.totalorder %s23, 1
      %s367 = scalar_select %p366, %s23, 1
      %p368 = scmp.lt.s32.totalorder %s365, 3
      %s369 = scalar_select %p368, %s365, 3
      %s370 = smul.addr %s367, 4
      %s371 = sadd.s32 %s369, %s370
      %s372 = smul.addr %s371, 4
      %s373 = scalar_lea.vmem %s1, %s372
      %p374 = pneg %p90
      %p375 = pneg %p87
      %s376 = sadd.s32 %s24, 1
      %s377 = smul.u32 %s376, 4
      %p378 = scmp.lt.s32.totalorder %s377, 3
      %s379 = scalar_select %p378, %s377, 3
      %p380 = scmp.lt.s32.totalorder %s23, 1
      %s381 = scalar_select %p380, %s23, 1
      %p382 = scmp.lt.s32.totalorder %s379, 3
      %s383 = scalar_select %p382, %s379, 3
      %s384 = smul.addr %s381, 4
      %s385 = sadd.s32 %s383, %s384
      %s386 = smul.addr %s385, 4
      %s387 = scalar_lea.vmem %s2, %s386
      %p388 = pneg %p126
      %p389 = pneg %p123
      %p390 = pneg %p147
      %p391 = pneg %p144
      %p392 = pneg %p168
      %p393 = pneg %p165
      %p394 = pneg %p189
      %p395 = pneg %p186
      %p396 = pneg %p210
      %p397 = pneg %p207
      %p398 = pneg %p231
      %p399 = pneg %p228
      %p400 = pneg %p259
      %p401 = pneg %p256
      %s402 = smul.u32 4, %s24
      %p403 = scmp.lt.s32.totalorder %s23, 1
      %s404 = scalar_select %p403, %s23, 1
      %p405 = scmp.lt.s32.totalorder %s402, 3
      %s406 = scalar_select %p405, %s402, 3
      %s407 = smul.addr %s404, 4
      %s408 = sadd.s32 %s406, %s407
      %s409 = smul.addr %s408, 4
      %s410 = scalar_lea.vmem %s8, %s409
      %s411 = smul.u32 4, %s24
      %p412 = scmp.lt.s32.totalorder %s23, 1
      %s413 = scalar_select %p412, %s23, 1
      %p414 = scmp.lt.s32.totalorder %s411, 3
      %s415 = scalar_select %p414, %s411, 3
      %s416 = smul.addr %s413, 4
      %s417 = sadd.s32 %s415, %s416
      %s418 = smul.addr %s417, 4
      %s419 = scalar_lea.vmem %s0, %s418
      %s420 = smul.u32 4, %s24
      %s421 = smul.u32 %s24, 4
      %s422 = ssub.s32 %s421, 1
      %p423 = scmp.gt.s32.totalorder %s422, 0
      %s424 = scalar_select %p423, %s422, 0
      %p425 = scmp.lt.s32.totalorder %s23, 1
      %s426 = scalar_select %p425, %s23, 1
      %p427 = scmp.lt.s32.totalorder %s424, 3
      %s428 = scalar_select %p427, %s424, 3
      %s429 = smul.addr %s426, 4
      %s430 = sadd.s32 %s428, %s429
      %s431 = smul.addr %s430, 4
      %s432 = scalar_lea.vmem %s1, %s431
      %s433 = smul.u32 %s24, 4
      %s434 = ssub.s32 %s433, 1
      %p435 = scmp.gt.s32.totalorder %s434, 0
      %s436 = scalar_select %p435, %s434, 0
      %s437 = sadd.s32 %s24, 1
      %s438 = smul.u32 %s437, 4
      %p439 = scmp.lt.s32.totalorder %s438, 3
      %s440 = scalar_select %p439, %s438, 3
      %p441 = scmp.lt.s32.totalorder %s23, 1
      %s442 = scalar_select %p441, %s23, 1
      %p443 = scmp.lt.s32.totalorder %s440, 3
      %s444 = scalar_select %p443, %s440, 3
      %s445 = smul.addr %s442, 4
      %s446 = sadd.s32 %s444, %s445
      %s447 = smul.addr %s446, 4
      %s448 = scalar_lea.vmem %s2, %s447
      %s449 = sadd.s32 %s24, 1
      %s450 = smul.u32 %s449, 4
      %p451 = scmp.lt.s32.totalorder %s450, 3
      %s452 = scalar_select %p451, %s450, 3
      %s453 = smul.u32 4, %s24
      %p454 = scmp.lt.s32.totalorder %s23, 1
      %s455 = scalar_select %p454, %s23, 1
      %p456 = scmp.lt.s32.totalorder %s453, 3
      %s457 = scalar_select %p456, %s453, 3
      %s458 = smul.addr %s455, 4
      %s459 = sadd.s32 %s457, %s458
      %s460 = smul.addr %s459, 4
      %s461 = scalar_lea.vmem %s8, %s460
      %s462 = smul.u32 4, %s24
      %464 = vst [vmem:[#allocation2] sm:$0xf] 0
      %v465 = vld [vmem:[%s432] sm:$0xf]
      %v466 = vmax.bf16 %v465, 0
      %467 = vst [vmem:[#allocation2 + $0x4] sm:$0xf] %v466
      %v468 = vld [vmem:[%s419] sm:$0xf]
      %v469 = vld [vmem:[%s419 + $0x4] sm:$0xf]
      %v470 = vld [vmem:[%s419 + $0x8] sm:$0xf]
      %v471 = vld [vmem:[%s419 + $0xc] sm:$0xf]
      %v472 = vmax.bf16 %v468, 0
      %v473 = vmax.bf16 %v469, 0
      %v474 = vmax.bf16 %v470, 0
      %v475 = vmax.bf16 %v471, 0
      %476 = vst [vmem:[#allocation2 + $0x8] sm:$0xf] %v472
      %477 = vst [vmem:[#allocation2 + $0xc] sm:$0xf] %v473
      %478 = vst [vmem:[#allocation2 + $0x10] sm:$0xf] %v474
      %479 = vst [vmem:[#allocation2 + $0x14] sm:$0xf] %v475
      %v480 = vld [vmem:[%s448] sm:$0xf]
      %v481 = vmax.bf16 %v480, 0
      %482 = vst [vmem:[#allocation2 + $0x18] sm:$0xf] %v481
      %483 = vst [vmem:[#allocation2 + $0x1c] sm:$0xf] 0
      %p484 = scmp.eq.s32.totalorder %s24, 0
      // Predicated region
      $region53: #{vqvae_encoder_forward.9} parent=51 // pred_check
        %p485 = pneg %p484
      $region54: #{vqvae_encoder_forward.9} parent=51 // pred_check_branch
        %487 = sbr.rel (%p485) target = $region56
      $region55: #{vqvae_encoder_forward.9} parent=51 // pred_region
        %488 = vst [vmem:[#allocation2 + $0x4] sm:$0xf] 0
        %489 = vst [vmem:[#allocation2 + $0x18] sm:$0xf] 0
      $region56: #{vqvae_encoder_forward.9} parent=51 // pred_fallthru
        _
      %v490 = vld [vmem:[#allocation2] sm:$0x8]
      %v491 = vld [vmem:[#allocation2 + $0x4] sm:$0xf]
      %v492 = vld [vmem:[#allocation2 + $0x8] sm:$0xf]
      %v493 = vld [vmem:[#allocation2 + $0xc] sm:$0xf]
      %v494 = vld [vmem:[#allocation2 + $0x10] sm:$0xf]
      %vm495 = vsmask.f32 256
      %vm496 = vsmask.f32 4368
      %vm497 = vmor %vm495, %vm496
      %v499 = vshrl.u32 %v490, 16
      %v501 = vrot.slane %v499, 7
      %v502 = vrot.slane %v501, 4
      %v504 = vshrl.u32 %v491, 16
      %v506 = vrot.slane %v504, 7
      %v507 = vshll.u32 %v491, 16
      %v509 = vor.u32 %v506, %v507
      %v510 = vsel %vm497, %v502, %v509
      %v511 = vrot.slane %v506, 4
      %v513 = vshrl.u32 %v492, 16
      %v515 = vrot.slane %v513, 7
      %v516 = vshll.u32 %v492, 16
      %v518 = vor.u32 %v515, %v516
      %v519 = vsel %vm497, %v511, %v518
      %v520 = vrot.slane %v515, 4
      %v522 = vshrl.u32 %v493, 16
      %v524 = vrot.slane %v522, 7
      %v525 = vshll.u32 %v493, 16
      %v527 = vor.u32 %v524, %v525
      %v528 = vsel %vm497, %v520, %v527
      %v529 = vrot.slane %v524, 4
      %v531 = vshrl.u32 %v494, 16
      %v533 = vrot.slane %v531, 7
      %v534 = vshll.u32 %v494, 16
      %v536 = vor.u32 %v533, %v534
      %v537 = vsel %vm497, %v529, %v536
      %542 = vst [vmem:[#allocation3] sm:$0xf] %v510
      %543 = vst [vmem:[#allocation3 + $0x24] sm:$0xf] %v519
      %544 = vst [vmem:[#allocation3 + $0x48] sm:$0xf] %v528
      %545 = vst [vmem:[#allocation3 + $0x6c] sm:$0xf] %v537
      %v546 = vld [vmem:[#allocation2 + $0x4] sm:$0xf]
      %v547 = vld [vmem:[#allocation2 + $0x8] sm:$0xf]
      %v548 = vld [vmem:[#allocation2 + $0xc] sm:$0xf]
      %v549 = vld [vmem:[#allocation2 + $0x10] sm:$0xf]
      %550 = vst [vmem:[#allocation3 + $0x4] sm:$0xf] %v546
      %551 = vst [vmem:[#allocation3 + $0x28] sm:$0xf] %v547
      %552 = vst [vmem:[#allocation3 + $0x4c] sm:$0xf] %v548
      %553 = vst [vmem:[#allocation3 + $0x70] sm:$0xf] %v549
      %v554 = vld [vmem:[#allocation2 + $0x4] sm:$0xf]
      %v555 = vld [vmem:[#allocation2 + $0x8] sm:$0xf]
      %v556 = vld [vmem:[#allocation2 + $0xc] sm:$0xf]
      %v557 = vld [vmem:[#allocation2 + $0x10] sm:$0xf]
      %v558 = vld [vmem:[#allocation2 + $0x14] sm:$0x1]
      %vm559 = vsmask.f32 3328
      %vm560 = vsmask.f32 7440
      %vm561 = vmor %vm559, %vm560
      %v563 = vshrl.u32 %v554, 16
      %v565 = vrot.slane %v563, 4
      %v566 = vshll.u32 %v554, 16
      %v568 = vrot.slane %v566, 5
      %v569 = vor.u32 %v565, %v568
      %v570 = vrot.slane %v569, 4
      %v572 = vshll.u32 %v555, 16
      %v574 = vrot.slane %v572, 5
      %v575 = vsel %vm561, %v570, %v574
      %v576 = vshrl.u32 %v555, 16
      %v578 = vrot.slane %v576, 4
      %v579 = vor.u32 %v578, %v574
      %v580 = vrot.slane %v579, 4
      %v582 = vshll.u32 %v556, 16
      %v584 = vrot.slane %v582, 5
      %v585 = vsel %vm561, %v580, %v584
      %v586 = vshrl.u32 %v556, 16
      %v588 = vrot.slane %v586, 4
      %v589 = vor.u32 %v588, %v584
      %v590 = vrot.slane %v589, 4
      %v592 = vshll.u32 %v557, 16
      %v594 = vrot.slane %v592, 5
      %v595 = vsel %vm561, %v590, %v594
      %v596 = vshrl.u32 %v557, 16
      %v598 = vrot.slane %v596, 4
      %v599 = vor.u32 %v598, %v594
      %v600 = vrot.slane %v599, 4
      %v602 = vshll.u32 %v558, 16
      %v604 = vrot.slane %v602, 5
      %v605 = vsel %vm561, %v600, %v604
      %610 = vst [vmem:[#allocation3 + $0x8] sm:$0xf] %v575
      %611 = vst [vmem:[#allocation3 + $0x2c] sm:$0xf] %v585
      %612 = vst [vmem:[#allocation3 + $0x50] sm:$0xf] %v595
      %613 = vst [vmem:[#allocation3 + $0x74] sm:$0xf] %v605
      %v614 = vld [vmem:[#allocation2 + $0x4] sm:$0x8]
      %v615 = vld [vmem:[#allocation2 + $0x8] sm:$0xf]
      %v616 = vld [vmem:[#allocation2 + $0xc] sm:$0xf]
      %v617 = vld [vmem:[#allocation2 + $0x10] sm:$0xf]
      %v618 = vld [vmem:[#allocation2 + $0x14] sm:$0xf]
      %v620 = vshrl.u32 %v614, 16
      %v622 = vrot.slane %v620, 7
      %v623 = vrot.slane %v622, 4
      %v625 = vshrl.u32 %v615, 16
      %v627 = vrot.slane %v625, 7
      %v628 = vshll.u32 %v615, 16
      %v630 = vor.u32 %v627, %v628
      %v631 = vsel %vm497, %v623, %v630
      %v632 = vrot.slane %v627, 4
      %v634 = vshrl.u32 %v616, 16
      %v636 = vrot.slane %v634, 7
      %v637 = vshll.u32 %v616, 16
      %v639 = vor.u32 %v636, %v637
      %v640 = vsel %vm497, %v632, %v639
      %v641 = vrot.slane %v636, 4
      %v643 = vshrl.u32 %v617, 16
      %v645 = vrot.slane %v643, 7
      %v646 = vshll.u32 %v617, 16
      %v648 = vor.u32 %v645, %v646
      %v649 = vsel %vm497, %v641, %v648
      %v650 = vrot.slane %v645, 4
      %v652 = vshrl.u32 %v618, 16
      %v654 = vrot.slane %v652, 7
      %v655 = vshll.u32 %v618, 16
      %v657 = vor.u32 %v654, %v655
      %v658 = vsel %vm497, %v650, %v657
      %663 = vst [vmem:[#allocation3 + $0xc] sm:$0xf] %v631
      %664 = vst [vmem:[#allocation3 + $0x30] sm:$0xf] %v640
      %665 = vst [vmem:[#allocation3 + $0x54] sm:$0xf] %v649
      %666 = vst [vmem:[#allocation3 + $0x78] sm:$0xf] %v658
      %v667 = vld [vmem:[#allocation2 + $0x8] sm:$0xf]
      %v668 = vld [vmem:[#allocation2 + $0xc] sm:$0xf]
      %v669 = vld [vmem:[#allocation2 + $0x10] sm:$0xf]
      %v670 = vld [vmem:[#allocation2 + $0x14] sm:$0xf]
      %671 = vst [vmem:[#allocation3 + $0x10] sm:$0xf] %v667
      %672 = vst [vmem:[#allocation3 + $0x34] sm:$0xf] %v668
      %673 = vst [vmem:[#allocation3 + $0x58] sm:$0xf] %v669
      %674 = vst [vmem:[#allocation3 + $0x7c] sm:$0xf] %v670
      %v675 = vld [vmem:[#allocation2 + $0x8] sm:$0xf]
      %v676 = vld [vmem:[#allocation2 + $0xc] sm:$0xf]
      %v677 = vld [vmem:[#allocation2 + $0x10] sm:$0xf]
      %v678 = vld [vmem:[#allocation2 + $0x14] sm:$0xf]
      %v679 = vld [vmem:[#allocation2 + $0x18] sm:$0x1]
      %v681 = vshrl.u32 %v675, 16
      %v683 = vrot.slane %v681, 4
      %v684 = vshll.u32 %v675, 16
      %v686 = vrot.slane %v684, 5
      %v687 = vor.u32 %v683, %v686
      %v688 = vrot.slane %v687, 4
      %v690 = vshll.u32 %v676, 16
      %v692 = vrot.slane %v690, 5
      %v693 = vsel %vm561, %v688, %v692
      %v694 = vshrl.u32 %v676, 16
      %v696 = vrot.slane %v694, 4
      %v697 = vor.u32 %v696, %v692
      %v698 = vrot.slane %v697, 4
      %v700 = vshll.u32 %v677, 16
      %v702 = vrot.slane %v700, 5
      %v703 = vsel %vm561, %v698, %v702
      %v704 = vshrl.u32 %v677, 16
      %v706 = vrot.slane %v704, 4
      %v707 = vor.u32 %v706, %v702
      %v708 = vrot.slane %v707, 4
      %v710 = vshll.u32 %v678, 16
      %v712 = vrot.slane %v710, 5
      %v713 = vsel %vm561, %v708, %v712
      %v714 = vshrl.u32 %v678, 16
      %v716 = vrot.slane %v714, 4
      %v717 = vor.u32 %v716, %v712
      %v718 = vrot.slane %v717, 4
      %v720 = vshll.u32 %v679, 16
      %v722 = vrot.slane %v720, 5
      %v723 = vsel %vm561, %v718, %v722
      %728 = vst [vmem:[#allocation3 + $0x14] sm:$0xf] %v693
      %729 = vst [vmem:[#allocation3 + $0x38] sm:$0xf] %v703
      %730 = vst [vmem:[#allocation3 + $0x5c] sm:$0xf] %v713
      %731 = vst [vmem:[#allocation3 + $0x80] sm:$0xf] %v723
      %v732 = vld [vmem:[#allocation2 + $0x8] sm:$0x8]
      %v733 = vld [vmem:[#allocation2 + $0xc] sm:$0xf]
      %v734 = vld [vmem:[#allocation2 + $0x10] sm:$0xf]
      %v735 = vld [vmem:[#allocation2 + $0x14] sm:$0xf]
      %v736 = vld [vmem:[#allocation2 + $0x18] sm:$0xf]
      %v738 = vshrl.u32 %v732, 16
      %v740 = vrot.slane %v738, 7
      %v741 = vrot.slane %v740, 4
      %v743 = vshrl.u32 %v733, 16
      %v745 = vrot.slane %v743, 7
      %v746 = vshll.u32 %v733, 16
      %v748 = vor.u32 %v745, %v746
      %v749 = vsel %vm497, %v741, %v748
      %v750 = vrot.slane %v745, 4
      %v752 = vshrl.u32 %v734, 16
      %v754 = vrot.slane %v752, 7
      %v755 = vshll.u32 %v734, 16
      %v757 = vor.u32 %v754, %v755
      %v758 = vsel %vm497, %v750, %v757
      %v759 = vrot.slane %v754, 4
      %v761 = vshrl.u32 %v735, 16
      %v763 = vrot.slane %v761, 7
      %v764 = vshll.u32 %v735, 16
      %v766 = vor.u32 %v763, %v764
      %v767 = vsel %vm497, %v759, %v766
      %v768 = vrot.slane %v763, 4
      %v770 = vshrl.u32 %v736, 16
      %v772 = vrot.slane %v770, 7
      %v773 = vshll.u32 %v736, 16
      %v775 = vor.u32 %v772, %v773
      %v776 = vsel %vm497, %v768, %v775
      %781 = vst [vmem:[#allocation3 + $0x18] sm:$0xf] %v749
      %782 = vst [vmem:[#allocation3 + $0x3c] sm:$0xf] %v758
      %783 = vst [vmem:[#allocation3 + $0x60] sm:$0xf] %v767
      %784 = vst [vmem:[#allocation3 + $0x84] sm:$0xf] %v776
      %v785 = vld [vmem:[#allocation2 + $0xc] sm:$0xf]
      %v786 = vld [vmem:[#allocation2 + $0x10] sm:$0xf]
      %v787 = vld [vmem:[#allocation2 + $0x14] sm:$0xf]
      %v788 = vld [vmem:[#allocation2 + $0x18] sm:$0xf]
      %789 = vst [vmem:[#allocation3 + $0x1c] sm:$0xf] %v785
      %790 = vst [vmem:[#allocation3 + $0x40] sm:$0xf] %v786
      %791 = vst [vmem:[#allocation3 + $0x64] sm:$0xf] %v787
      %792 = vst [vmem:[#allocation3 + $0x88] sm:$0xf] %v788
      %v793 = vld [vmem:[#allocation2 + $0xc] sm:$0xf]
      %v794 = vld [vmem:[#allocation2 + $0x10] sm:$0xf]
      %v795 = vld [vmem:[#allocation2 + $0x14] sm:$0xf]
      %v796 = vld [vmem:[#allocation2 + $0x18] sm:$0xf]
      %v797 = vld [vmem:[#allocation2 + $0x1c] sm:$0x1]
      %v799 = vshrl.u32 %v793, 16
      %v801 = vrot.slane %v799, 4
      %v802 = vshll.u32 %v793, 16
      %v804 = vrot.slane %v802, 5
      %v805 = vor.u32 %v801, %v804
      %v806 = vrot.slane %v805, 4
      %v808 = vshll.u32 %v794, 16
      %v810 = vrot.slane %v808, 5
      %v811 = vsel %vm561, %v806, %v810
      %v812 = vshrl.u32 %v794, 16
      %v814 = vrot.slane %v812, 4
      %v815 = vor.u32 %v814, %v810
      %v816 = vrot.slane %v815, 4
      %v818 = vshll.u32 %v795, 16
      %v820 = vrot.slane %v818, 5
      %v821 = vsel %vm561, %v816, %v820
      %v822 = vshrl.u32 %v795, 16
      %v824 = vrot.slane %v822, 4
      %v825 = vor.u32 %v824, %v820
      %v826 = vrot.slane %v825, 4
      %v828 = vshll.u32 %v796, 16
      %v830 = vrot.slane %v828, 5
      %v831 = vsel %vm561, %v826, %v830
      %v832 = vshrl.u32 %v796, 16
      %v834 = vrot.slane %v832, 4
      %v835 = vor.u32 %v834, %v830
      %v836 = vrot.slane %v835, 4
      %v838 = vshll.u32 %v797, 16
      %v840 = vrot.slane %v838, 5
      %v841 = vsel %vm561, %v836, %v840
      %846 = vst [vmem:[#allocation3 + $0x20] sm:$0xf] %v811
      %847 = vst [vmem:[#allocation3 + $0x44] sm:$0xf] %v821
      %848 = vst [vmem:[#allocation3 + $0x68] sm:$0xf] %v831
      %849 = vst [vmem:[#allocation3 + $0x8c] sm:$0xf] %v841
      %v850 = vld [vmem:[#allocation3] sm:$0xff]
      %v851 = vld [vmem:[#allocation3 + $0x8] sm:$0xff]
      %v852 = vld [vmem:[#allocation3 + $0x10] sm:$0xff]
      %v853 = vld [vmem:[#allocation3 + $0x18] sm:$0xff]
      %v854 = vld [vmem:[#allocation3 + $0x20] sm:$0xf]
      %v855 = vld [vmem:[#allocation3 + $0x24] sm:$0xff]
      %v856 = vld [vmem:[#allocation3 + $0x2c] sm:$0xff]
      %v857 = vld [vmem:[#allocation3 + $0x34] sm:$0xff]
      %v858 = vld [vmem:[#allocation3 + $0x3c] sm:$0xff]
      %v859 = vld [vmem:[#allocation3 + $0x44] sm:$0xf]
      %v860 = vld [vmem:[#allocation3 + $0x48] sm:$0xff]
      %v861 = vld [vmem:[#allocation3 + $0x50] sm:$0xff]
      %v862 = vld [vmem:[#allocation3 + $0x58] sm:$0xff]
      %v863 = vld [vmem:[#allocation3 + $0x60] sm:$0xff]
      %v864 = vld [vmem:[#allocation3 + $0x68] sm:$0xf]
      %v865 = vld [vmem:[#allocation3 + $0x6c] sm:$0xff]
      %v866 = vld [vmem:[#allocation3 + $0x74] sm:$0xff]
      %v867 = vld [vmem:[#allocation3 + $0x7c] sm:$0xff]
      %v868 = vld [vmem:[#allocation3 + $0x84] sm:$0xff]
      %v869 = vld [vmem:[#allocation3 + $0x8c] sm:$0xf]
      %v870 = vld [vmem:[%s4] sm:$0xf]
      %v871 = vld [vmem:[%s4 + $0x4] sm:$0xf]
      %v872 = vld [vmem:[%s4 + $0x8] sm:$0xf]
      %v873 = vld [vmem:[%s4 + $0xc] sm:$0xf]
      %v874 = vld [vmem:[%s4 + $0x10] sm:$0xf]
      %v875 = vld [vmem:[%s4 + $0x14] sm:$0xf]
      %v876 = vld [vmem:[%s4 + $0x18] sm:$0xf]
      %v877 = vld [vmem:[%s4 + $0x1c] sm:$0xf]
      %v878 = vld [vmem:[%s4 + $0x20] sm:$0xf]
      %v879 = vld [vmem:[%s4 + $0x24] sm:$0xf]
      %v880 = vld [vmem:[%s4 + $0x28] sm:$0xf]
      %v881 = vld [vmem:[%s4 + $0x2c] sm:$0xf]
      %v882 = vld [vmem:[%s4 + $0x30] sm:$0xf]
      %v883 = vld [vmem:[%s4 + $0x34] sm:$0xf]
      %v884 = vld [vmem:[%s4 + $0x38] sm:$0xf]
      %v885 = vld [vmem:[%s4 + $0x3c] sm:$0xf]
      %v886 = vld [vmem:[%s4 + $0x40] sm:$0xf]
      %v887 = vld [vmem:[%s4 + $0x44] sm:$0xf]
      %v888 = vld [vmem:[%s4 + $0x48] sm:$0xf]
      %v889 = vld [vmem:[%s4 + $0x4c] sm:$0xf]
      %v890 = vld [vmem:[%s4 + $0x50] sm:$0xf]
      %v891 = vld [vmem:[%s4 + $0x54] sm:$0xf]
      %v892 = vld [vmem:[%s4 + $0x58] sm:$0xf]
      %v893 = vld [vmem:[%s4 + $0x5c] sm:$0xf]
      %v894 = vld [vmem:[%s4 + $0x60] sm:$0xf]
      %v895 = vld [vmem:[%s4 + $0x64] sm:$0xf]
      %v896 = vld [vmem:[%s4 + $0x68] sm:$0xf]
      %v897 = vld [vmem:[%s4 + $0x6c] sm:$0xf]
      %v898 = vld [vmem:[%s4 + $0x70] sm:$0xf]
      %v899 = vld [vmem:[%s4 + $0x74] sm:$0xf]
      %v900 = vld [vmem:[%s4 + $0x78] sm:$0xf]
      %v901 = vld [vmem:[%s4 + $0x7c] sm:$0xf]
      %v902 = vld [vmem:[%s4 + $0x80] sm:$0xf]
      %v903 = vld [vmem:[%s4 + $0x84] sm:$0xf]
      %v904 = vld [vmem:[%s4 + $0x88] sm:$0xf]
      %v905 = vld [vmem:[%s4 + $0x8c] sm:$0xf]
      %v906 = vld [vmem:[%s4 + $0x90] sm:$0xf]
      %v907 = vld [vmem:[%s4 + $0x94] sm:$0xf]
      %v908 = vld [vmem:[%s4 + $0x98] sm:$0xf]
      %v909 = vld [vmem:[%s4 + $0x9c] sm:$0xf]
      %v910 = vld [vmem:[%s4 + $0xa0] sm:$0xf]
      %v911 = vld [vmem:[%s4 + $0xa4] sm:$0xf]
      %v912 = vld [vmem:[%s4 + $0xa8] sm:$0xf]
      %v913 = vld [vmem:[%s4 + $0xac] sm:$0xf]
      %v914 = vld [vmem:[%s4 + $0xb0] sm:$0xf]
      %v915 = vld [vmem:[%s4 + $0xb4] sm:$0xf]
      %v916 = vld [vmem:[%s4 + $0xb8] sm:$0xf]
      %v917 = vld [vmem:[%s4 + $0xbc] sm:$0xf]
      %v918 = vld [vmem:[%s4 + $0xc0] sm:$0xf]
      %v919 = vld [vmem:[%s4 + $0xc4] sm:$0xf]
      %v920 = vld [vmem:[%s4 + $0xc8] sm:$0xf]
      %v921 = vld [vmem:[%s4 + $0xcc] sm:$0xf]
      %v922 = vld [vmem:[%s4 + $0xd0] sm:$0xf]
      %v923 = vld [vmem:[%s4 + $0xd4] sm:$0xf]
      %v924 = vld [vmem:[%s4 + $0xd8] sm:$0xf]
      %v925 = vld [vmem:[%s4 + $0xdc] sm:$0xf]
      %v926 = vld [vmem:[%s4 + $0xe0] sm:$0xf]
      %v927 = vld [vmem:[%s4 + $0xe4] sm:$0xf]
      %v928 = vld [vmem:[%s4 + $0xe8] sm:$0xf]
      %v929 = vld [vmem:[%s4 + $0xec] sm:$0xf]
      %v930 = vld [vmem:[%s4 + $0xf0] sm:$0xf]
      %v931 = vld [vmem:[%s4 + $0xf4] sm:$0xf]
      %v932 = vld [vmem:[%s4 + $0xf8] sm:$0xf]
      %v933 = vld [vmem:[%s4 + $0xfc] sm:$0xf]
      %v934 = vld [vmem:[%s4 + $0x100] sm:$0xf]
      %v935 = vld [vmem:[%s4 + $0x104] sm:$0xf]
      %v936 = vld [vmem:[%s4 + $0x108] sm:$0xf]
      %v937 = vld [vmem:[%s4 + $0x10c] sm:$0xf]
      %v938 = vld [vmem:[%s4 + $0x110] sm:$0xf]
      %v939 = vld [vmem:[%s4 + $0x114] sm:$0xf]
      %v940 = vld [vmem:[%s4 + $0x118] sm:$0xf]
      %v941 = vld [vmem:[%s4 + $0x11c] sm:$0xf]
      %v942 = vld [vmem:[%s4 + $0x120] sm:$0xf]
      %v943 = vld [vmem:[%s4 + $0x124] sm:$0xf]
      %v944 = vld [vmem:[%s4 + $0x128] sm:$0xf]
      %v945 = vld [vmem:[%s4 + $0x12c] sm:$0xf]
      %v946 = vld [vmem:[%s4 + $0x130] sm:$0xf]
      %v947 = vld [vmem:[%s4 + $0x134] sm:$0xf]
      %v948 = vld [vmem:[%s4 + $0x138] sm:$0xf]
      %v949 = vld [vmem:[%s4 + $0x13c] sm:$0xf]
      %v950 = vld [vmem:[%s4 + $0x140] sm:$0xf]
      %v951 = vld [vmem:[%s4 + $0x144] sm:$0xf]
      %v952 = vld [vmem:[%s4 + $0x148] sm:$0xf]
      %v953 = vld [vmem:[%s4 + $0x14c] sm:$0xf]
      %v954 = vld [vmem:[%s4 + $0x150] sm:$0xf]
      %v955 = vld [vmem:[%s4 + $0x154] sm:$0xf]
      %v956 = vld [vmem:[%s4 + $0x158] sm:$0xf]
      %v957 = vld [vmem:[%s4 + $0x15c] sm:$0xf]
      %v958 = vld [vmem:[%s4 + $0x160] sm:$0xf]
      %v959 = vld [vmem:[%s4 + $0x164] sm:$0xf]
      %v960 = vld [vmem:[%s4 + $0x168] sm:$0xf]
      %v961 = vld [vmem:[%s4 + $0x16c] sm:$0xf]
      %v962 = vld [vmem:[%s4 + $0x170] sm:$0xf]
      %v963 = vld [vmem:[%s4 + $0x174] sm:$0xf]
      %v964 = vld [vmem:[%s4 + $0x178] sm:$0xf]
      %v965 = vld [vmem:[%s4 + $0x17c] sm:$0xf]
      %v966 = vld [vmem:[%s4 + $0x180] sm:$0xf]
      %v967 = vld [vmem:[%s4 + $0x184] sm:$0xf]
      %v968 = vld [vmem:[%s4 + $0x188] sm:$0xf]
      %v969 = vld [vmem:[%s4 + $0x18c] sm:$0xf]
      %v970 = vld [vmem:[%s4 + $0x190] sm:$0xf]
      %v971 = vld [vmem:[%s4 + $0x194] sm:$0xf]
      %v972 = vld [vmem:[%s4 + $0x198] sm:$0xf]
      %v973 = vld [vmem:[%s4 + $0x19c] sm:$0xf]
      %v974 = vld [vmem:[%s4 + $0x1a0] sm:$0xf]
      %v975 = vld [vmem:[%s4 + $0x1a4] sm:$0xf]
      %v976 = vld [vmem:[%s4 + $0x1a8] sm:$0xf]
      %v977 = vld [vmem:[%s4 + $0x1ac] sm:$0xf]
      %v978 = vld [vmem:[%s4 + $0x1b0] sm:$0xf]
      %v979 = vld [vmem:[%s4 + $0x1b4] sm:$0xf]
      %v980 = vld [vmem:[%s4 + $0x1b8] sm:$0xf]
      %v981 = vld [vmem:[%s4 + $0x1bc] sm:$0xf]
      %v982 = vld [vmem:[%s4 + $0x1c0] sm:$0xf]
      %v983 = vld [vmem:[%s4 + $0x1c4] sm:$0xf]
      %v984 = vld [vmem:[%s4 + $0x1c8] sm:$0xf]
      %v985 = vld [vmem:[%s4 + $0x1cc] sm:$0xf]
      %v986 = vld [vmem:[%s4 + $0x1d0] sm:$0xf]
      %v987 = vld [vmem:[%s4 + $0x1d4] sm:$0xf]
      %v988 = vld [vmem:[%s4 + $0x1d8] sm:$0xf]
      %v989 = vld [vmem:[%s4 + $0x1dc] sm:$0xf]
      %v990 = vld [vmem:[%s4 + $0x1e0] sm:$0xf]
      %v991 = vld [vmem:[%s4 + $0x1e4] sm:$0xf]
      %v992 = vld [vmem:[%s4 + $0x1e8] sm:$0xf]
      %v993 = vld [vmem:[%s4 + $0x1ec] sm:$0xf]
      %v994 = vld [vmem:[%s4 + $0x1f0] sm:$0xf]
      %v995 = vld [vmem:[%s4 + $0x1f4] sm:$0xf]
      %v996 = vld [vmem:[%s4 + $0x1f8] sm:$0xf]
      %v997 = vld [vmem:[%s4 + $0x1fc] sm:$0xf]
      %v998 = vld [vmem:[%s4 + $0x200] sm:$0xf]
      %v999 = vld [vmem:[%s4 + $0x204] sm:$0xf]
      %v1000 = vld [vmem:[%s4 + $0x208] sm:$0xf]
      %v1001 = vld [vmem:[%s4 + $0x20c] sm:$0xf]
      %v1002 = vld [vmem:[%s4 + $0x210] sm:$0xf]
      %v1003 = vld [vmem:[%s4 + $0x214] sm:$0xf]
      %v1004 = vld [vmem:[%s4 + $0x218] sm:$0xf]
      %v1005 = vld [vmem:[%s4 + $0x21c] sm:$0xf]
      %v1006 = vld [vmem:[%s4 + $0x220] sm:$0xf]
      %v1007 = vld [vmem:[%s4 + $0x224] sm:$0xf]
      %v1008 = vld [vmem:[%s4 + $0x228] sm:$0xf]
      %v1009 = vld [vmem:[%s4 + $0x22c] sm:$0xf]
      %v1010 = vld [vmem:[%s4 + $0x230] sm:$0xf]
      %v1011 = vld [vmem:[%s4 + $0x234] sm:$0xf]
      %v1012 = vld [vmem:[%s4 + $0x238] sm:$0xf]
      %v1013 = vld [vmem:[%s4 + $0x23c] sm:$0xf]
      %v1014 = vld [vmem:[%s5] sm:$0x1]
      %v1016 = vlaneseq
      %v1017 = vshrl.u32 %v1016, 7
      %v1018 = vsub.s32 0, %v1017
      %v1019 = vrot.slane %v1014, %v1018
      %v1041 = vunpack.c.l.b16 %v850
      %v1042 = vunpack.c.h.b16 %v850
      %v1043 = vunpack.c.l.b16 %v851
      %v1044 = vunpack.c.h.b16 %v851
      %v1045 = vunpack.c.l.b16 %v852
      %v1046 = vunpack.c.h.b16 %v852
      %v1047 = vunpack.c.l.b16 %v853
      %v1048 = vunpack.c.h.b16 %v853
      %v1049 = vunpack.c.l.b16 %v854
      %v1050 = vunpack.c.l.b16 %v855
      %v1051 = vunpack.c.h.b16 %v855
      %v1052 = vunpack.c.l.b16 %v856
      %v1053 = vunpack.c.h.b16 %v856
      %v1054 = vunpack.c.l.b16 %v857
      %v1055 = vunpack.c.h.b16 %v857
      %v1056 = vunpack.c.l.b16 %v858
      %v1057 = vunpack.c.h.b16 %v858
      %v1058 = vunpack.c.l.b16 %v859
      %v1059 = vunpack.c.l.b16 %v860
      %v1060 = vunpack.c.h.b16 %v860
      %v1061 = vunpack.c.l.b16 %v861
      %v1062 = vunpack.c.h.b16 %v861
      %v1063 = vunpack.c.l.b16 %v862
      %v1064 = vunpack.c.h.b16 %v862
      %v1065 = vunpack.c.l.b16 %v863
      %v1066 = vunpack.c.h.b16 %v863
      %v1067 = vunpack.c.l.b16 %v864
      %v1068 = vunpack.c.l.b16 %v865
      %v1069 = vunpack.c.h.b16 %v865
      %v1070 = vunpack.c.l.b16 %v866
      %v1071 = vunpack.c.h.b16 %v866
      %v1072 = vunpack.c.l.b16 %v867
      %v1073 = vunpack.c.h.b16 %v867
      %v1074 = vunpack.c.l.b16 %v868
      %v1075 = vunpack.c.h.b16 %v868
      %v1076 = vunpack.c.l.b16 %v869
      %v1077 = vpack.c.b16 %v1050, %v1041
      %v1078 = vpack.c.b16 %v1051, %v1042
      %v1079 = vpack.c.b16 %v1052, %v1043
      %v1080 = vpack.c.b16 %v1053, %v1044
      %v1081 = vpack.c.b16 %v1054, %v1045
      %v1082 = vpack.c.b16 %v1055, %v1046
      %v1083 = vpack.c.b16 %v1056, %v1047
      %v1084 = vpack.c.b16 %v1057, %v1048
      %v1085 = vpack.c.b16 %v1058, %v1049
      %v1086 = vpack.c.b16 %v1068, %v1059
      %v1087 = vpack.c.b16 %v1069, %v1060
      %v1088 = vpack.c.b16 %v1070, %v1061
      %v1089 = vpack.c.b16 %v1071, %v1062
      %v1090 = vpack.c.b16 %v1072, %v1063
      %v1091 = vpack.c.b16 %v1073, %v1064
      %v1092 = vpack.c.b16 %v1074, %v1065
      %v1093 = vpack.c.b16 %v1075, %v1066
      %v1094 = vpack.c.b16 %v1076, %v1067
      %v1257 = vunpack.c.l.b16 %v870
      %v1258 = vunpack.c.l.b16 %v871
      %v1259 = vunpack.c.l.b16 %v872
      %v1260 = vunpack.c.l.b16 %v873
      %v1261 = vunpack.c.l.b16 %v874
      %v1262 = vunpack.c.l.b16 %v875
      %v1263 = vunpack.c.l.b16 %v876
      %v1264 = vunpack.c.l.b16 %v877
      %v1265 = vunpack.c.l.b16 %v878
      %v1266 = vunpack.c.l.b16 %v879
      %v1267 = vunpack.c.l.b16 %v880
      %v1268 = vunpack.c.l.b16 %v881
      %v1269 = vunpack.c.l.b16 %v882
      %v1270 = vunpack.c.l.b16 %v883
      %v1271 = vunpack.c.l.b16 %v884
      %v1272 = vunpack.c.l.b16 %v885
      %v1273 = vunpack.c.l.b16 %v886
      %v1274 = vunpack.c.l.b16 %v887
      %v1275 = vunpack.c.l.b16 %v888
      %v1276 = vunpack.c.l.b16 %v889
      %v1277 = vunpack.c.l.b16 %v890
      %v1278 = vunpack.c.l.b16 %v891
      %v1279 = vunpack.c.l.b16 %v892
      %v1280 = vunpack.c.l.b16 %v893
      %v1281 = vunpack.c.l.b16 %v894
      %v1282 = vunpack.c.l.b16 %v895
      %v1283 = vunpack.c.l.b16 %v896
      %v1284 = vunpack.c.l.b16 %v897
      %v1285 = vunpack.c.l.b16 %v898
      %v1286 = vunpack.c.l.b16 %v899
      %v1287 = vunpack.c.l.b16 %v900
      %v1288 = vunpack.c.l.b16 %v901
      %v1289 = vunpack.c.l.b16 %v902
      %v1290 = vunpack.c.l.b16 %v903
      %v1291 = vunpack.c.l.b16 %v904
      %v1292 = vunpack.c.l.b16 %v905
      %v1293 = vunpack.c.l.b16 %v906
      %v1294 = vunpack.c.l.b16 %v907
      %v1295 = vunpack.c.l.b16 %v908
      %v1296 = vunpack.c.l.b16 %v909
      %v1297 = vunpack.c.l.b16 %v910
      %v1298 = vunpack.c.l.b16 %v911
      %v1299 = vunpack.c.l.b16 %v912
      %v1300 = vunpack.c.l.b16 %v913
      %v1301 = vunpack.c.l.b16 %v914
      %v1302 = vunpack.c.l.b16 %v915
      %v1303 = vunpack.c.l.b16 %v916
      %v1304 = vunpack.c.l.b16 %v917
      %v1305 = vunpack.c.l.b16 %v918
      %v1306 = vunpack.c.l.b16 %v919
      %v1307 = vunpack.c.l.b16 %v920
      %v1308 = vunpack.c.l.b16 %v921
      %v1309 = vunpack.c.l.b16 %v922
      %v1310 = vunpack.c.l.b16 %v923
      %v1311 = vunpack.c.l.b16 %v924
      %v1312 = vunpack.c.l.b16 %v925
      %v1313 = vunpack.c.l.b16 %v926
      %v1314 = vunpack.c.l.b16 %v927
      %v1315 = vunpack.c.l.b16 %v928
      %v1316 = vunpack.c.l.b16 %v929
      %v1317 = vunpack.c.l.b16 %v930
      %v1318 = vunpack.c.l.b16 %v931
      %v1319 = vunpack.c.l.b16 %v932
      %v1320 = vunpack.c.l.b16 %v933
      %v1321 = vunpack.c.l.b16 %v934
      %v1322 = vunpack.c.l.b16 %v935
      %v1323 = vunpack.c.l.b16 %v936
      %v1324 = vunpack.c.l.b16 %v937
      %v1325 = vunpack.c.l.b16 %v938
      %v1326 = vunpack.c.l.b16 %v939
      %v1327 = vunpack.c.l.b16 %v940
      %v1328 = vunpack.c.l.b16 %v941
      %v1329 = vunpack.c.l.b16 %v942
      %v1330 = vunpack.c.l.b16 %v943
      %v1331 = vunpack.c.l.b16 %v944
      %v1332 = vunpack.c.l.b16 %v945
      %v1333 = vunpack.c.l.b16 %v946
      %v1334 = vunpack.c.l.b16 %v947
      %v1335 = vunpack.c.l.b16 %v948
      %v1336 = vunpack.c.l.b16 %v949
      %v1337 = vunpack.c.l.b16 %v950
      %v1338 = vunpack.c.l.b16 %v951
      %v1339 = vunpack.c.l.b16 %v952
      %v1340 = vunpack.c.l.b16 %v953
      %v1341 = vunpack.c.l.b16 %v954
      %v1342 = vunpack.c.l.b16 %v955
      %v1343 = vunpack.c.l.b16 %v956
      %v1344 = vunpack.c.l.b16 %v957
      %v1345 = vunpack.c.l.b16 %v958
      %v1346 = vunpack.c.l.b16 %v959
      %v1347 = vunpack.c.l.b16 %v960
      %v1348 = vunpack.c.l.b16 %v961
      %v1349 = vunpack.c.l.b16 %v962
      %v1350 = vunpack.c.l.b16 %v963
      %v1351 = vunpack.c.l.b16 %v964
      %v1352 = vunpack.c.l.b16 %v965
      %v1353 = vunpack.c.l.b16 %v966
      %v1354 = vunpack.c.l.b16 %v967
      %v1355 = vunpack.c.l.b16 %v968
      %v1356 = vunpack.c.l.b16 %v969
      %v1357 = vunpack.c.l.b16 %v970
      %v1358 = vunpack.c.l.b16 %v971
      %v1359 = vunpack.c.l.b16 %v972
      %v1360 = vunpack.c.l.b16 %v973
      %v1361 = vunpack.c.l.b16 %v974
      %v1362 = vunpack.c.l.b16 %v975
      %v1363 = vunpack.c.l.b16 %v976
      %v1364 = vunpack.c.l.b16 %v977
      %v1365 = vunpack.c.l.b16 %v978
      %v1366 = vunpack.c.l.b16 %v979
      %v1367 = vunpack.c.l.b16 %v980
      %v1368 = vunpack.c.l.b16 %v981
      %v1369 = vunpack.c.l.b16 %v982
      %v1370 = vunpack.c.l.b16 %v983
      %v1371 = vunpack.c.l.b16 %v984
      %v1372 = vunpack.c.l.b16 %v985
      %v1373 = vunpack.c.l.b16 %v986
      %v1374 = vunpack.c.l.b16 %v987
      %v1375 = vunpack.c.l.b16 %v988
      %v1376 = vunpack.c.l.b16 %v989
      %v1377 = vunpack.c.l.b16 %v990
      %v1378 = vunpack.c.l.b16 %v991
      %v1379 = vunpack.c.l.b16 %v992
      %v1380 = vunpack.c.l.b16 %v993
      %v1381 = vunpack.c.l.b16 %v994
      %v1382 = vunpack.c.l.b16 %v995
      %v1383 = vunpack.c.l.b16 %v996
      %v1384 = vunpack.c.l.b16 %v997
      %v1385 = vunpack.c.l.b16 %v998
      %v1386 = vunpack.c.l.b16 %v999
      %v1387 = vunpack.c.l.b16 %v1000
      %v1388 = vunpack.c.l.b16 %v1001
      %v1389 = vunpack.c.l.b16 %v1002
      %v1390 = vunpack.c.l.b16 %v1003
      %v1391 = vunpack.c.l.b16 %v1004
      %v1392 = vunpack.c.l.b16 %v1005
      %v1393 = vunpack.c.l.b16 %v1006
      %v1394 = vunpack.c.l.b16 %v1007
      %v1395 = vunpack.c.l.b16 %v1008
      %v1396 = vunpack.c.l.b16 %v1009
      %v1397 = vunpack.c.l.b16 %v1010
      %v1398 = vunpack.c.l.b16 %v1011
      %v1399 = vunpack.c.l.b16 %v1012
      %v1400 = vunpack.c.l.b16 %v1013
      %v1401 = vpack.c.b16 %v1258, %v1257
      %v1402 = vpack.c.b16 %v1260, %v1259
      %v1403 = vpack.c.b16 %v1262, %v1261
      %v1404 = vpack.c.b16 %v1264, %v1263
      %v1405 = vpack.c.b16 %v1266, %v1265
      %v1406 = vpack.c.b16 %v1268, %v1267
      %v1407 = vpack.c.b16 %v1270, %v1269
      %v1408 = vpack.c.b16 %v1272, %v1271
      %v1409 = vpack.c.b16 %v1274, %v1273
      %v1410 = vpack.c.b16 %v1276, %v1275
      %v1411 = vpack.c.b16 %v1278, %v1277
      %v1412 = vpack.c.b16 %v1280, %v1279
      %v1413 = vpack.c.b16 %v1282, %v1281
      %v1414 = vpack.c.b16 %v1284, %v1283
      %v1415 = vpack.c.b16 %v1286, %v1285
      %v1416 = vpack.c.b16 %v1288, %v1287
      %v1417 = vpack.c.b16 %v1290, %v1289
      %v1418 = vpack.c.b16 %v1292, %v1291
      %v1419 = vpack.c.b16 %v1294, %v1293
      %v1420 = vpack.c.b16 %v1296, %v1295
      %v1421 = vpack.c.b16 %v1298, %v1297
      %v1422 = vpack.c.b16 %v1300, %v1299
      %v1423 = vpack.c.b16 %v1302, %v1301
      %v1424 = vpack.c.b16 %v1304, %v1303
      %v1425 = vpack.c.b16 %v1306, %v1305
      %v1426 = vpack.c.b16 %v1308, %v1307
      %v1427 = vpack.c.b16 %v1310, %v1309
      %v1428 = vpack.c.b16 %v1312, %v1311
      %v1429 = vpack.c.b16 %v1314, %v1313
      %v1430 = vpack.c.b16 %v1316, %v1315
      %v1431 = vpack.c.b16 %v1318, %v1317
      %v1432 = vpack.c.b16 %v1320, %v1319
      %v1433 = vpack.c.b16 %v1322, %v1321
      %v1434 = vpack.c.b16 %v1324, %v1323
      %v1435 = vpack.c.b16 %v1326, %v1325
      %v1436 = vpack.c.b16 %v1328, %v1327
      %v1437 = vpack.c.b16 %v1330, %v1329
      %v1438 = vpack.c.b16 %v1332, %v1331
      %v1439 = vpack.c.b16 %v1334, %v1333
      %v1440 = vpack.c.b16 %v1336, %v1335
      %v1441 = vpack.c.b16 %v1338, %v1337
      %v1442 = vpack.c.b16 %v1340, %v1339
      %v1443 = vpack.c.b16 %v1342, %v1341
      %v1444 = vpack.c.b16 %v1344, %v1343
      %v1445 = vpack.c.b16 %v1346, %v1345
      %v1446 = vpack.c.b16 %v1348, %v1347
      %v1447 = vpack.c.b16 %v1350, %v1349
      %v1448 = vpack.c.b16 %v1352, %v1351
      %v1449 = vpack.c.b16 %v1354, %v1353
      %v1450 = vpack.c.b16 %v1356, %v1355
      %v1451 = vpack.c.b16 %v1358, %v1357
      %v1452 = vpack.c.b16 %v1360, %v1359
      %v1453 = vpack.c.b16 %v1362, %v1361
      %v1454 = vpack.c.b16 %v1364, %v1363
      %v1455 = vpack.c.b16 %v1366, %v1365
      %v1456 = vpack.c.b16 %v1368, %v1367
      %v1457 = vpack.c.b16 %v1370, %v1369
      %v1458 = vpack.c.b16 %v1372, %v1371
      %v1459 = vpack.c.b16 %v1374, %v1373
      %v1460 = vpack.c.b16 %v1376, %v1375
      %v1461 = vpack.c.b16 %v1378, %v1377
      %v1462 = vpack.c.b16 %v1380, %v1379
      %v1463 = vpack.c.b16 %v1382, %v1381
      %v1464 = vpack.c.b16 %v1384, %v1383
      %v1465 = vpack.c.b16 %v1386, %v1385
      %v1466 = vpack.c.b16 %v1388, %v1387
      %v1467 = vpack.c.b16 %v1390, %v1389
      %v1468 = vpack.c.b16 %v1392, %v1391
      %v1469 = vpack.c.b16 %v1394, %v1393
      %v1470 = vpack.c.b16 %v1396, %v1395
      %v1471 = vpack.c.b16 %v1398, %v1397
      %v1472 = vpack.c.b16 %v1400, %v1399
      %1545 = vmatprep.subr.bf16.mxu0 0
      %1546 = vmatpush1.bf16.msra.mxu0 %v1408
      %1547 = vmatprep.subr.bf16.mxu0 0
      %1548 = vmatpush1.bf16.msra.mxu0 %v1407
      %1549 = vmatprep.subr.bf16.mxu0 0
      %1550 = vmatpush1.bf16.msra.mxu0 %v1406
      %1551 = vmatprep.subr.bf16.mxu0 0
      %1552 = vmatpush1.bf16.msra.mxu0 %v1405
      %1553 = vmatprep.subr.bf16.mxu0 0
      %1554 = vmatpush1.bf16.msra.mxu0 %v1404
      %1555 = vmatprep.subr.bf16.mxu0 0
      %1556 = vmatpush1.bf16.msra.mxu0 %v1403
      %1557 = vmatprep.subr.bf16.mxu0 0
      %1558 = vmatpush1.bf16.msra.mxu0 %v1402
      %1559 = vmatprep.subr.bf16.mxu0 0
      %1560 = vmatpush1.bf16.msra.mxu0 %v1401
      %1561 = vmatprep.subr.bf16.mxu0 0
      %1562 = vmatpush2.bf16.msra.mxu0 %v1416
      %1563 = vmatprep.subr.bf16.mxu0 0
      %1564 = vmatpush2.bf16.msra.mxu0 %v1415
      %1565 = vmatprep.subr.bf16.mxu0 0
      %1566 = vmatpush2.bf16.msra.mxu0 %v1414
      %1567 = vmatprep.subr.bf16.mxu0 0
      %1568 = vmatpush2.bf16.msra.mxu0 %v1413
      %1569 = vmatprep.subr.bf16.mxu0 0
      %1570 = vmatpush2.bf16.msra.mxu0 %v1412
      %1571 = vmatprep.subr.bf16.mxu0 0
      %1572 = vmatpush2.bf16.msra.mxu0 %v1411
      %1573 = vmatprep.subr.bf16.mxu0 0
      %1574 = vmatpush2.bf16.msra.mxu0 %v1410
      %1575 = vmatprep.subr.bf16.mxu0 0
      %1576 = vmatpush2.bf16.msra.mxu0 %v1409
      %1577 = vmatprep.mubr.bf16.mxu0 %v1078
      %1578 = vmatmul.mubr.bf16.gmra.mxu0 %v1077
      %v1579 = vpop.f32.mrf.mxu0
      %v1580 = vadd.f32 %v1019, %v1579
      %v1581 = vpop.f32.mrf.mxu0
      %v1582 = vpop.f32.mrf.mxu0
      %v1583 = vadd.f32 %v1019, %v1582
      %v1584 = vpop.f32.mrf.mxu0
      %1585 = vmatprep.mubr.bf16.mxu0 %v1087
      %1586 = vmatmul.mubr.bf16.gmra.mxu0 %v1086
      %v1587 = vpop.f32.mrf.mxu0
      %v1588 = vadd.f32 %v1019, %v1587
      %v1589 = vpop.f32.mrf.mxu0
      %v1590 = vpop.f32.mrf.mxu0
      %v1591 = vadd.f32 %v1019, %v1590
      %v1592 = vpop.f32.mrf.mxu0
      %1593 = vdwg.mxu0
      %1594 = vmatprep.subr.bf16.mxu0 0
      %1595 = vmatpush1.bf16.msra.mxu0 %v1424
      %1596 = vmatprep.subr.bf16.mxu0 0
      %1597 = vmatpush1.bf16.msra.mxu0 %v1423
      %1598 = vmatprep.subr.bf16.mxu0 0
      %1599 = vmatpush1.bf16.msra.mxu0 %v1422
      %1600 = vmatprep.subr.bf16.mxu0 0
      %1601 = vmatpush1.bf16.msra.mxu0 %v1421
      %1602 = vmatprep.subr.bf16.mxu0 0
      %1603 = vmatpush1.bf16.msra.mxu0 %v1420
      %1604 = vmatprep.subr.bf16.mxu0 0
      %1605 = vmatpush1.bf16.msra.mxu0 %v1419
      %1606 = vmatprep.subr.bf16.mxu0 0
      %1607 = vmatpush1.bf16.msra.mxu0 %v1418
      %1608 = vmatprep.subr.bf16.mxu0 0
      %1609 = vmatpush1.bf16.msra.mxu0 %v1417
      %1610 = vmatprep.subr.bf16.mxu0 0
      %1611 = vmatpush2.bf16.msra.mxu0 %v1432
      %1612 = vmatprep.subr.bf16.mxu0 0
      %1613 = vmatpush2.bf16.msra.mxu0 %v1431
      %1614 = vmatprep.subr.bf16.mxu0 0
      %1615 = vmatpush2.bf16.msra.mxu0 %v1430
      %1616 = vmatprep.subr.bf16.mxu0 0
      %1617 = vmatpush2.bf16.msra.mxu0 %v1429
      %1618 = vmatprep.subr.bf16.mxu0 0
      %1619 = vmatpush2.bf16.msra.mxu0 %v1428
      %1620 = vmatprep.subr.bf16.mxu0 0
      %1621 = vmatpush2.bf16.msra.mxu0 %v1427
      %1622 = vmatprep.subr.bf16.mxu0 0
      %1623 = vmatpush2.bf16.msra.mxu0 %v1426
      %1624 = vmatprep.subr.bf16.mxu0 0
      %1625 = vmatpush2.bf16.msra.mxu0 %v1425
      %1626 = vmatprep.mubr.bf16.mxu0 %v1080
      %1627 = vmatmul.mubr.bf16.gmra.mxu0 %v1079
      %v1628 = vpop.f32.mrf.mxu0
      %v1629 = vadd.f32 %v1580, %v1628
      %v1630 = vpop.f32.mrf.mxu0
      %v1631 = vpop.f32.mrf.mxu0
      %v1632 = vadd.f32 %v1583, %v1631
      %v1633 = vpop.f32.mrf.mxu0
      %1634 = vmatprep.mubr.bf16.mxu0 %v1089
      %1635 = vmatmul.mubr.bf16.gmra.mxu0 %v1088
      %v1636 = vpop.f32.mrf.mxu0
      %v1637 = vadd.f32 %v1588, %v1636
      %v1638 = vpop.f32.mrf.mxu0
      %v1639 = vpop.f32.mrf.mxu0
      %v1640 = vadd.f32 %v1591, %v1639
      %v1641 = vpop.f32.mrf.mxu0
      %1642 = vdwg.mxu0
      %1643 = vmatprep.subr.bf16.mxu0 0
      %1644 = vmatpush1.bf16.msra.mxu0 %v1440
      %1645 = vmatprep.subr.bf16.mxu0 0
      %1646 = vmatpush1.bf16.msra.mxu0 %v1439
      %1647 = vmatprep.subr.bf16.mxu0 0
      %1648 = vmatpush1.bf16.msra.mxu0 %v1438
      %1649 = vmatprep.subr.bf16.mxu0 0
      %1650 = vmatpush1.bf16.msra.mxu0 %v1437
      %1651 = vmatprep.subr.bf16.mxu0 0
      %1652 = vmatpush1.bf16.msra.mxu0 %v1436
      %1653 = vmatprep.subr.bf16.mxu0 0
      %1654 = vmatpush1.bf16.msra.mxu0 %v1435
      %1655 = vmatprep.subr.bf16.mxu0 0
      %1656 = vmatpush1.bf16.msra.mxu0 %v1434
      %1657 = vmatprep.subr.bf16.mxu0 0
      %1658 = vmatpush1.bf16.msra.mxu0 %v1433
      %1659 = vmatprep.subr.bf16.mxu0 0
      %1660 = vmatpush2.bf16.msra.mxu0 %v1448
      %1661 = vmatprep.subr.bf16.mxu0 0
      %1662 = vmatpush2.bf16.msra.mxu0 %v1447
      %1663 = vmatprep.subr.bf16.mxu0 0
      %1664 = vmatpush2.bf16.msra.mxu0 %v1446
      %1665 = vmatprep.subr.bf16.mxu0 0
      %1666 = vmatpush2.bf16.msra.mxu0 %v1445
      %1667 = vmatprep.subr.bf16.mxu0 0
      %1668 = vmatpush2.bf16.msra.mxu0 %v1444
      %1669 = vmatprep.subr.bf16.mxu0 0
      %1670 = vmatpush2.bf16.msra.mxu0 %v1443
      %1671 = vmatprep.subr.bf16.mxu0 0
      %1672 = vmatpush2.bf16.msra.mxu0 %v1442
      %1673 = vmatprep.subr.bf16.mxu0 0
      %1674 = vmatpush2.bf16.msra.mxu0 %v1441
      %1675 = vmatprep.mubr.bf16.mxu0 %v1082
      %1676 = vmatmul.mubr.bf16.gmra.mxu0 %v1081
      %v1677 = vpop.f32.mrf.mxu0
      %v1678 = vadd.f32 %v1629, %v1677
      %v1679 = vpop.f32.mrf.mxu0
      %v1680 = vpop.f32.mrf.mxu0
      %v1681 = vadd.f32 %v1632, %v1680
      %v1682 = vpop.f32.mrf.mxu0
      %1683 = vmatprep.mubr.bf16.mxu0 %v1091
      %1684 = vmatmul.mubr.bf16.gmra.mxu0 %v1090
      %v1685 = vpop.f32.mrf.mxu0
      %v1686 = vadd.f32 %v1637, %v1685
      %v1687 = vpop.f32.mrf.mxu0
      %v1688 = vpop.f32.mrf.mxu0
      %v1689 = vadd.f32 %v1640, %v1688
      %v1690 = vpop.f32.mrf.mxu0
      %1691 = vdwg.mxu0
      %1692 = vmatprep.subr.bf16.mxu0 0
      %1693 = vmatpush1.bf16.msra.mxu0 %v1456
      %1694 = vmatprep.subr.bf16.mxu0 0
      %1695 = vmatpush1.bf16.msra.mxu0 %v1455
      %1696 = vmatprep.subr.bf16.mxu0 0
      %1697 = vmatpush1.bf16.msra.mxu0 %v1454
      %1698 = vmatprep.subr.bf16.mxu0 0
      %1699 = vmatpush1.bf16.msra.mxu0 %v1453
      %1700 = vmatprep.subr.bf16.mxu0 0
      %1701 = vmatpush1.bf16.msra.mxu0 %v1452
      %1702 = vmatprep.subr.bf16.mxu0 0
      %1703 = vmatpush1.bf16.msra.mxu0 %v1451
      %1704 = vmatprep.subr.bf16.mxu0 0
      %1705 = vmatpush1.bf16.msra.mxu0 %v1450
      %1706 = vmatprep.subr.bf16.mxu0 0
      %1707 = vmatpush1.bf16.msra.mxu0 %v1449
      %1708 = vmatprep.subr.bf16.mxu0 0
      %1709 = vmatpush2.bf16.msra.mxu0 %v1464
      %1710 = vmatprep.subr.bf16.mxu0 0
      %1711 = vmatpush2.bf16.msra.mxu0 %v1463
      %1712 = vmatprep.subr.bf16.mxu0 0
      %1713 = vmatpush2.bf16.msra.mxu0 %v1462
      %1714 = vmatprep.subr.bf16.mxu0 0
      %1715 = vmatpush2.bf16.msra.mxu0 %v1461
      %1716 = vmatprep.subr.bf16.mxu0 0
      %1717 = vmatpush2.bf16.msra.mxu0 %v1460
      %1718 = vmatprep.subr.bf16.mxu0 0
      %1719 = vmatpush2.bf16.msra.mxu0 %v1459
      %1720 = vmatprep.subr.bf16.mxu0 0
      %1721 = vmatpush2.bf16.msra.mxu0 %v1458
      %1722 = vmatprep.subr.bf16.mxu0 0
      %1723 = vmatpush2.bf16.msra.mxu0 %v1457
      %1724 = vmatprep.mubr.bf16.mxu0 %v1084
      %1725 = vmatmul.mubr.bf16.gmra.mxu0 %v1083
      %v1726 = vpop.f32.mrf.mxu0
      %v1727 = vadd.f32 %v1678, %v1726
      %v1728 = vpop.f32.mrf.mxu0
      %v1729 = vpop.f32.mrf.mxu0
      %v1730 = vadd.f32 %v1681, %v1729
      %v1731 = vpop.f32.mrf.mxu0
      %1732 = vmatprep.mubr.bf16.mxu0 %v1093
      %1733 = vmatmul.mubr.bf16.gmra.mxu0 %v1092
      %v1734 = vpop.f32.mrf.mxu0
      %v1735 = vadd.f32 %v1686, %v1734
      %v1736 = vpop.f32.mrf.mxu0
      %v1737 = vpop.f32.mrf.mxu0
      %v1738 = vadd.f32 %v1689, %v1737
      %v1739 = vpop.f32.mrf.mxu0
      %1740 = vdwg.mxu0
      %1741 = vmatprep.subr.bf16.mxu0 0
      %1742 = vmatpush1.bf16.msra.mxu0 %v1472
      %1743 = vmatprep.subr.bf16.mxu0 0
      %1744 = vmatpush1.bf16.msra.mxu0 %v1471
      %1745 = vmatprep.subr.bf16.mxu0 0
      %1746 = vmatpush1.bf16.msra.mxu0 %v1470
      %1747 = vmatprep.subr.bf16.mxu0 0
      %1748 = vmatpush1.bf16.msra.mxu0 %v1469
      %1749 = vmatprep.subr.bf16.mxu0 0
      %1750 = vmatpush1.bf16.msra.mxu0 %v1468
      %1751 = vmatprep.subr.bf16.mxu0 0
      %1752 = vmatpush1.bf16.msra.mxu0 %v1467
      %1753 = vmatprep.subr.bf16.mxu0 0
      %1754 = vmatpush1.bf16.msra.mxu0 %v1466
      %1755 = vmatprep.subr.bf16.mxu0 0
      %1756 = vmatpush1.bf16.msra.mxu0 %v1465
      %1757 = vmatprep.subr.bf16.mxu0 0
      %1758 = vmatpush2.bf16.msra.mxu0 0
      %1759 = vmatprep.subr.bf16.mxu0 0
      %1760 = vmatpush2.bf16.msra.mxu0 0
      %1761 = vmatprep.subr.bf16.mxu0 0
      %1762 = vmatpush2.bf16.msra.mxu0 0
      %1763 = vmatprep.subr.bf16.mxu0 0
      %1764 = vmatpush2.bf16.msra.mxu0 0
      %1765 = vmatprep.subr.bf16.mxu0 0
      %1766 = vmatpush2.bf16.msra.mxu0 0
      %1767 = vmatprep.subr.bf16.mxu0 0
      %1768 = vmatpush2.bf16.msra.mxu0 0
      %1769 = vmatprep.subr.bf16.mxu0 0
      %1770 = vmatpush2.bf16.msra.mxu0 0
      %1771 = vmatprep.subr.bf16.mxu0 0
      %1772 = vmatpush2.bf16.msra.mxu0 0
      %1773 = vmatprep.mubr.bf16.mxu0 0
      %1774 = vmatmul.mubr.bf16.gmra.mxu0 %v1085
      %v1775 = vpop.f32.mrf.mxu0
      %v1776 = vadd.f32 %v1727, %v1775
      %v1777 = vpop.f32.mrf.mxu0
      %v1778 = vpop.f32.mrf.mxu0
      %v1779 = vadd.f32 %v1730, %v1778
      %v1780 = vpop.f32.mrf.mxu0
      %1781 = vmatprep.mubr.bf16.mxu0 0
      %1782 = vmatmul.mubr.bf16.gmra.mxu0 %v1094
      %v1783 = vpop.f32.mrf.mxu0
      %v1784 = vadd.f32 %v1735, %v1783
      %v1785 = vpop.f32.mrf.mxu0
      %v1786 = vpop.f32.mrf.mxu0
      %v1787 = vadd.f32 %v1738, %v1786
      %v1788 = vpop.f32.mrf.mxu0
      %1789 = vdwg.mxu0
      %v1790 = vmax.f32 %v1776, 0.0
      %v1791 = vmax.f32 %v1779, 0.0
      %v1792 = vmax.f32 %v1784, 0.0
      %v1793 = vmax.f32 %v1787, 0.0
      %v1794 = vpack.c.bf16 %v1791, %v1790
      %v1795 = vpack.c.bf16 %v1793, %v1792
      %v1796 = vld [vmem:[%s6] sm:$0xf]
      %v1797 = vld [vmem:[%s6 + $0x4] sm:$0xf]
      %v1798 = vld [vmem:[%s6 + $0x8] sm:$0xf]
      %v1799 = vld [vmem:[%s6 + $0xc] sm:$0xf]
      %v1800 = vld [vmem:[%s6 + $0x10] sm:$0xf]
      %v1801 = vld [vmem:[%s6 + $0x14] sm:$0xf]
      %v1802 = vld [vmem:[%s6 + $0x18] sm:$0xf]
      %v1803 = vld [vmem:[%s6 + $0x1c] sm:$0xf]
      %v1804 = vld [vmem:[%s6 + $0x20] sm:$0xf]
      %v1805 = vld [vmem:[%s6 + $0x24] sm:$0xf]
      %v1806 = vld [vmem:[%s6 + $0x28] sm:$0xf]
      %v1807 = vld [vmem:[%s6 + $0x2c] sm:$0xf]
      %v1808 = vld [vmem:[%s6 + $0x30] sm:$0xf]
      %v1809 = vld [vmem:[%s6 + $0x34] sm:$0xf]
      %v1810 = vld [vmem:[%s6 + $0x38] sm:$0xf]
      %v1811 = vld [vmem:[%s6 + $0x3c] sm:$0xf]
      %v1812 = vld [vmem:[%s7] sm:$0x1]
      %v1814 = vlaneseq
      %v1815 = vshrl.u32 %v1814, 7
      %v1816 = vsub.s32 0, %v1815
      %v1817 = vrot.slane %v1812, %v1816
      %v1835 = vunpack.c.l.b16 %v1796
      %v1836 = vunpack.c.l.b16 %v1797
      %v1837 = vunpack.c.l.b16 %v1798
      %v1838 = vunpack.c.l.b16 %v1799
      %v1839 = vunpack.c.l.b16 %v1800
      %v1840 = vunpack.c.l.b16 %v1801
      %v1841 = vunpack.c.l.b16 %v1802
      %v1842 = vunpack.c.l.b16 %v1803
      %v1843 = vunpack.c.l.b16 %v1804
      %v1844 = vunpack.c.l.b16 %v1805
      %v1845 = vunpack.c.l.b16 %v1806
      %v1846 = vunpack.c.l.b16 %v1807
      %v1847 = vunpack.c.l.b16 %v1808
      %v1848 = vunpack.c.l.b16 %v1809
      %v1849 = vunpack.c.l.b16 %v1810
      %v1850 = vunpack.c.l.b16 %v1811
      %v1851 = vpack.c.b16 %v1836, %v1835
      %v1852 = vpack.c.b16 %v1838, %v1837
      %v1853 = vpack.c.b16 %v1840, %v1839
      %v1854 = vpack.c.b16 %v1842, %v1841
      %v1855 = vpack.c.b16 %v1844, %v1843
      %v1856 = vpack.c.b16 %v1846, %v1845
      %v1857 = vpack.c.b16 %v1848, %v1847
      %v1858 = vpack.c.b16 %v1850, %v1849
      %1867 = vmatprep.subr.bf16.mxu0 0
      %1868 = vmatpush1.bf16.msra.mxu0 %v1858
      %1869 = vmatprep.subr.bf16.mxu0 0
      %1870 = vmatpush1.bf16.msra.mxu0 %v1857
      %1871 = vmatprep.subr.bf16.mxu0 0
      %1872 = vmatpush1.bf16.msra.mxu0 %v1856
      %1873 = vmatprep.subr.bf16.mxu0 0
      %1874 = vmatpush1.bf16.msra.mxu0 %v1855
      %1875 = vmatprep.subr.bf16.mxu0 0
      %1876 = vmatpush1.bf16.msra.mxu0 %v1854
      %1877 = vmatprep.subr.bf16.mxu0 0
      %1878 = vmatpush1.bf16.msra.mxu0 %v1853
      %1879 = vmatprep.subr.bf16.mxu0 0
      %1880 = vmatpush1.bf16.msra.mxu0 %v1852
      %1881 = vmatprep.subr.bf16.mxu0 0
      %1882 = vmatpush1.bf16.msra.mxu0 %v1851
      %1883 = vmatprep.subr.bf16.mxu0 0
      %1884 = vmatpush2.bf16.msra.mxu0 0
      %1885 = vmatprep.subr.bf16.mxu0 0
      %1886 = vmatpush2.bf16.msra.mxu0 0
      %1887 = vmatprep.subr.bf16.mxu0 0
      %1888 = vmatpush2.bf16.msra.mxu0 0
      %1889 = vmatprep.subr.bf16.mxu0 0
      %1890 = vmatpush2.bf16.msra.mxu0 0
      %1891 = vmatprep.subr.bf16.mxu0 0
      %1892 = vmatpush2.bf16.msra.mxu0 0
      %1893 = vmatprep.subr.bf16.mxu0 0
      %1894 = vmatpush2.bf16.msra.mxu0 0
      %1895 = vmatprep.subr.bf16.mxu0 0
      %1896 = vmatpush2.bf16.msra.mxu0 0
      %1897 = vmatprep.subr.bf16.mxu0 0
      %1898 = vmatpush2.bf16.msra.mxu0 0
      %1899 = vmatprep.mubr.bf16.mxu0 0
      %1900 = vmatmul.mubr.bf16.gmra.mxu0 %v1794
      %v1901 = vpop.f32.mrf.mxu0
      %v1902 = vadd.f32 %v1817, %v1901
      %v1903 = vpop.f32.mrf.mxu0
      %v1904 = vpop.f32.mrf.mxu0
      %v1905 = vadd.f32 %v1817, %v1904
      %v1906 = vpop.f32.mrf.mxu0
      %1907 = vmatprep.mubr.bf16.mxu0 0
      %1908 = vmatmul.mubr.bf16.gmra.mxu0 %v1795
      %v1909 = vpop.f32.mrf.mxu0
      %v1910 = vadd.f32 %v1817, %v1909
      %v1911 = vpop.f32.mrf.mxu0
      %v1912 = vpop.f32.mrf.mxu0
      %v1913 = vadd.f32 %v1817, %v1912
      %v1914 = vpop.f32.mrf.mxu0
      %1915 = vdwg.mxu0
      %v1916 = vld [vmem:[%s419] sm:$0xf]
      %v1917 = vld [vmem:[%s419 + $0x4] sm:$0xf]
      %v1918 = vld [vmem:[%s419 + $0x8] sm:$0xf]
      %v1919 = vld [vmem:[%s419 + $0xc] sm:$0xf]
      %v1920 = vunpack.c.l.bf16 %v1916
      %v1921 = vunpack.c.l.bf16 %v1917
      %v1922 = vunpack.c.l.bf16 %v1918
      %v1923 = vunpack.c.l.bf16 %v1919
      %v1924 = vadd.f32 %v1902, %v1920
      %v1925 = vadd.f32 %v1905, %v1921
      %v1926 = vadd.f32 %v1910, %v1922
      %v1927 = vadd.f32 %v1913, %v1923
      %v1928 = vld [vmem:[%s3] sm:$0xff]
      %v1929 = vld [vmem:[%s3 + $0x8] sm:$0xff]
      %v1930 = vld [vmem:[%s3 + $0x10] sm:$0xff]
      %v1931 = vld [vmem:[%s3 + $0x18] sm:$0xff]
      %1933 = vset.pattern.permute.xlu0 0
      %1934 = vperm.xlu0 %1933, %v1928
      %v1935 = vpop.permute.xlu0 %1934
      %1938 = vset.pattern.permute.xlu0 0
      %1939 = vperm.xlu0 %1938, %v1929
      %v1940 = vpop.permute.xlu0 %1939
      %1943 = vset.pattern.permute.xlu0 0
      %1944 = vperm.xlu0 %1943, %v1930
      %v1945 = vpop.permute.xlu0 %1944
      %1948 = vset.pattern.permute.xlu0 0
      %1949 = vperm.xlu0 %1948, %v1931
      %v1950 = vpop.permute.xlu0 %1949
      %v1952 = vmul.f32 %v1924, %v1935
      %v1953 = vmul.f32 %v1925, %v1940
      %v1954 = vmul.f32 %v1926, %v1945
      %v1955 = vmul.f32 %v1927, %v1950
      %v1956 = vpack.c.bf16 %v1953, %v1952
      %v1957 = vpack.c.bf16 %v1955, %v1954
      %v1960 = vunpack.c.l.b16 %v1956
      %v1961 = vunpack.c.h.b16 %v1956
      %v1962 = vunpack.c.l.b16 %v1957
      %v1963 = vunpack.c.h.b16 %v1957
      %v1964 = vpack.c.b16 %v1960, %v1960
      %v1965 = vpack.c.b16 %v1961, %v1961
      %v1966 = vpack.c.b16 %v1962, %v1962
      %v1967 = vpack.c.b16 %v1963, %v1963
      %1972 = vst [vmem:[%s461] sm:$0xf] %v1964
      %1973 = vst [vmem:[%s461 + $0x4] sm:$0xf] %v1965
      %1974 = vst [vmem:[%s461 + $0x8] sm:$0xf] %v1966
      %1975 = vst [vmem:[%s461 + $0xc] sm:$0xf] %v1967
      %s1976 = smul.u32 4, %s24
      %p1977 = scmp.lt.s32.totalorder %s23, 1
      %s1978 = scalar_select %p1977, %s23, 1
      %p1979 = scmp.lt.s32.totalorder %s1976, 3
      %s1980 = scalar_select %p1979, %s1976, 3
      %s1981 = smul.addr %s1978, 4
      %s1982 = sadd.s32 %s1980, %s1981
      %s1983 = smul.addr %s1982, 4
      %s1984 = scalar_lea.vmem %s8, %s1983
      // Predicated region
      $region57: #{vqvae_encoder_forward.9} parent=51 // pred_check
        %p1985 = pneg %p256
      $region58: #{vqvae_encoder_forward.9} parent=51 // pred_check_branch
        %1987 = sbr.rel (%p1985) target = $region60
      $region59: #{vqvae_encoder_forward.9} parent=51 // pred_region
        %s1988 = smul.u32 4, %s24
      $region60: #{vqvae_encoder_forward.9} parent=51 // pred_fallthru
        _
    $region52: #{vqvae_encoder_forward.9} parent=5 // pred_fallthru
      _
    %p1989 = scmp.le.s32.totalorder 2, %s14
    // Predicated region
    $region61: #{vqvae_encoder_forward.9} parent=5 // pred_check
      %p1990 = pneg %p1989
    $region62: #{vqvae_encoder_forward.9} parent=5 // pred_check_branch
      %1992 = sbr.rel (%p1990) target = $region64
    $region63: #{vqvae_encoder_forward.9} parent=5 // pred_region
      %s1993 = ssub.s32 %s14, 2
      // Predicated region
      $region65: #{vqvae_encoder_forward.9} parent=63 // pred_check
        %p1994 = pneg %p262
      $region66: #{vqvae_encoder_forward.9} parent=63 // pred_check_branch
        %1996 = sbr.rel (%p1994) target = $region68
      $region67: #{vqvae_encoder_forward.9} parent=63 // pred_region
        %s1997 = smul.u32 4, %s26
        %p1998 = scmp.lt.s32.totalorder %s25, 1
        %s1999 = scalar_select %p1998, %s25, 1
        %p2000 = scmp.lt.s32.totalorder %s1997, 3
        %s2001 = scalar_select %p2000, %s1997, 3
        %s2002 = smul.addr %s1999, 4
        %s2003 = sadd.s32 %s2001, %s2002
        %s2004 = smul.addr %s2003, 4
        %s2005 = scalar_lea.vmem %s8, %s2004
      $region68: #{vqvae_encoder_forward.9} parent=63 // pred_fallthru
        _
    $region64: #{vqvae_encoder_forward.9} parent=5 // pred_fallthru
      _
  $region6: #{vqvae_encoder_forward.9} parent=0 // loop_footer
    %s18 = sadd.s32 1, %s14
  $region7: #{vqvae_encoder_forward.9} parent=0 // loop_footer_branch
    %13 = sbr.rel target = $region3
  $region8: #{vqvae_encoder_forward.9} parent=0 // loop_exit
    _

</llo_original>
